<compile_context>
chip_gen: v7x
topology: tpu7x:2x2x1
jax: 0.10.0
libtpu: 0.0.40
codegen_flags: <defaults>
</compile_context>

<pallas_src>
import functools

import jax
import jax.numpy as jnp
from jax.experimental import pallas as pl
from jax.experimental.pallas import tpu as pltpu

IN_DIM = 2048
HID = 256
OUT_DIM = 1
NEG_SLOPE = 0.01  # nn.LeakyReLU default negative_slope


def _leaky_relu(v):
    return jnp.where(v > 0, v, NEG_SLOPE * v)


def _round_up(x, m):
    return ((x + m - 1) // m) * m


def mlp_kernel(x_ref,
               w1_ref, b1_ref,
               w2_ref, b2_ref,
               w3_ref, b3_ref,
               w4_ref, b4_ref,
               o_ref):
    # One batch tile per grid step: 4 MXU matmuls + VPU LeakyReLU, f32 accum.
    x = x_ref[...]
    h = _leaky_relu(
        jnp.dot(x, w1_ref[...], preferred_element_type=jnp.float32) + b1_ref[...])
    h = _leaky_relu(
        jnp.dot(h, w2_ref[...], preferred_element_type=jnp.float32) + b2_ref[...])
    h = _leaky_relu(
        jnp.dot(h, w3_ref[...], preferred_element_type=jnp.float32) + b3_ref[...])
    # Final (256 -> 1) layer: narrow output; masked stores hide under the MXU.
    o_ref[...] = (
        jnp.dot(h, w4_ref[...], preferred_element_type=jnp.float32) + b4_ref[...])


def _default_tile_b():
    """Pick a batch tile based on this chip's VMEM (v7x=64MiB vs v5e/v6e=128MiB)."""
    try:
        vmem_cap = pltpu.get_tpu_info().vmem_capacity_bytes
    except Exception:
        vmem_cap = 64 << 20  # conservative fallback
    # tile_b=2048 -> ~51 MiB budget (fits 128 MiB parts); 1024 -> ~34 MiB (64 MiB parts).
    return 2048 if vmem_cap >= (96 << 20) else 1024


def feed_forward_net(x, params, *, tile_b=None):
    """x: (B, 2048) f32 -> (B, 1) f32."""
    B, in_dim = x.shape
    assert in_dim == IN_DIM

    if tile_b is None:
        tile_b = _default_tile_b()
    # Shrink tile for small batches, but keep it MXU / (8,128)-aligned.
    tile_b = min(tile_b, _round_up(B, 128))

    # Pad batch to a multiple of the tile (extra rows are sliced off below).
    b_pad = _round_up(B, tile_b)
    if b_pad != B:
        x = jnp.pad(x, ((0, b_pad - B), (0, 0)))
    grid = (b_pad // tile_b,)

    # Weights/biases: constant index_map -> fetched once, VMEM-resident.
    def const_spec(shape):
        return pl.BlockSpec(shape, lambda i: (0, 0))

    in_specs = [
        pl.BlockSpec((tile_b, IN_DIM), lambda i: (i, 0)),        # x tile (pipelined)
        const_spec((IN_DIM, HID)), const_spec((1, HID)),         # layer 1
        const_spec((HID, HID)), const_spec((1, HID)),            # layer 2
        const_spec((HID, HID)), const_spec((1, HID)),            # layer 3
        const_spec((HID, OUT_DIM)), const_spec((1, OUT_DIM)),    # layer 4
    ]
    out_spec = pl.BlockSpec((tile_b, OUT_DIM), lambda i: (i, 0))

    # VMEM budget: (double-buffered) weights + double-buffered x/out tiles + slack
    # for compiler scratch / intermediate (tile_b, 256) activations.
    weight_elems = (IN_DIM * HID + HID
                    + 2 * (HID * HID + HID)
                    + HID * OUT_DIM + OUT_DIM)
    weight_bytes = 4 * weight_elems
    tile_bytes = 4 * tile_b * (IN_DIM + OUT_DIM)
    vmem_limit = 2 * weight_bytes + 2 * tile_bytes + (12 << 20)

    flops = 2 * b_pad * (IN_DIM * HID + 2 * HID * HID + HID * OUT_DIM)
    bytes_accessed = 4 * b_pad * (IN_DIM + OUT_DIM) + weight_bytes

    out = pl.pallas_call(
        mlp_kernel,
        out_shape=jax.ShapeDtypeStruct((b_pad, OUT_DIM), jnp.float32),
        grid=grid,
        in_specs=in_specs,
        out_specs=out_spec,
        compiler_params=pltpu.CompilerParams(
            dimension_semantics=("parallel",),   # megacore split on v7x
            vmem_limit_bytes=vmem_limit,
        ),
        cost_estimate=pl.CostEstimate(
            flops=flops, transcendentals=0, bytes_accessed=bytes_accessed),
    )(x,
      params["w1"], params["b1"],
      params["w2"], params["b2"],
      params["w3"], params["b3"],
      params["w4"], params["b4"])

    return out[:B]


def init_params(key):
    """Deterministic synthetic parameters (PyTorch-Linear-like uniform init)."""
    def linear(key, fan_in, fan_out):
        kw, kb = jax.random.split(key)
        bound = 1.0 / jnp.sqrt(fan_in)
        w = jax.random.uniform(kw, (fan_in, fan_out), jnp.float32, -bound, bound)
        b = jax.random.uniform(kb, (1, fan_out), jnp.float32, -bound, bound)
        return w, b

    k1, k2, k3, k4 = jax.random.split(key, 4)
    w1, b1 = linear(k1, IN_DIM, HID)
    w2, b2 = linear(k2, HID, HID)
    w3, b3 = linear(k3, HID, HID)
    w4, b4 = linear(k4, HID, OUT_DIM)
    return dict(w1=w1, b1=b1, w2=w2, b2=b2, w3=w3, b3=b3, w4=w4, b4=b4)


def reference_forward(x, p):
    h = _leaky_relu(x @ p["w1"] + p["b1"])
    h = _leaky_relu(h @ p["w2"] + p["b2"])
    h = _leaky_relu(h @ p["w3"] + p["b3"])
    return h @ p["w4"] + p["b4"]


if __name__ == "__main__":
    key = jax.random.PRNGKey(0)
    kx, kx2, kx3, kp = jax.random.split(key, 4)
    params = init_params(kp)

    fwd = jax.jit(feed_forward_net, static_argnames=("tile_b",))

    # 1) Small batch (single padded tile).
    B = 8
    x = jax.random.normal(kx, (B, IN_DIM), dtype=jnp.float32)
    out = jax.block_until_ready(fwd(x, params))
    ref = reference_forward(x, params)
    assert out.shape == (B, OUT_DIM)
    assert jnp.allclose(out, ref, atol=1e-4, rtol=1e-4)

    # 2) Non-multiple-of-128 batch (padding + slicing path).
    B2 = 260
    x2 = jax.random.normal(kx2, (B2, IN_DIM), dtype=jnp.float32)
    out2 = jax.block_until_ready(fwd(x2, params))
    ref2 = reference_forward(x2, params)
    assert out2.shape == (B2, OUT_DIM)
    assert jnp.allclose(out2, ref2, atol=1e-4, rtol=1e-4)

    # 3) Multi-tile grid (exercises pipelining + weight residency across steps).
    B3 = 640
    x3 = jax.random.normal(kx3, (B3, IN_DIM), dtype=jnp.float32)
    out3 = jax.block_until_ready(fwd(x3, params, tile_b=256))
    ref3 = reference_forward(x3, params)
    assert out3.shape == (B3, OUT_DIM)
    assert jnp.allclose(out3, ref3, atol=1e-4, rtol=1e-4)

    print("KERNEL_OK")
</pallas_src>

<mosaic_0001>
module attributes {stable_mosaic.version = 11 : i64} {
  func.func @mlp_kernel(%arg0: i32, %arg1: memref<128x2048xf32, #tpu.memory_space<vmem>>, %arg2: memref<2048x256xf32, #tpu.memory_space<vmem>>, %arg3: memref<1x256xf32, #tpu.memory_space<vmem>>, %arg4: memref<256x256xf32, #tpu.memory_space<vmem>>, %arg5: memref<1x256xf32, #tpu.memory_space<vmem>>, %arg6: memref<256x256xf32, #tpu.memory_space<vmem>>, %arg7: memref<1x256xf32, #tpu.memory_space<vmem>>, %arg8: memref<256x1xf32, #tpu.memory_space<vmem>>, %arg9: memref<1x1xf32, #tpu.memory_space<vmem>>, %arg10: memref<128x1xf32, #tpu.memory_space<vmem>>) attributes {dimension_semantics = [#tpu.dimension_semantics<parallel>], iteration_bounds = array<i64: 1>, scalar_prefetch = 0 : i64, scratch_operands = 0 : i64, tpu.core_type = #tpu.core_type<tc>, window_params = [{transform_indices = @transform_0, window_bounds = array<i64: 128, 2048>}, {pipeline_mode = #tpu.pipeline_mode<synchronous>, transform_indices = @transform_1, window_bounds = array<i64: 2048, 256>}, {pipeline_mode = #tpu.pipeline_mode<synchronous>, transform_indices = @transform_2, window_bounds = array<i64: 1, 256>}, {pipeline_mode = #tpu.pipeline_mode<synchronous>, transform_indices = @transform_3, window_bounds = array<i64: 256, 256>}, {pipeline_mode = #tpu.pipeline_mode<synchronous>, transform_indices = @transform_4, window_bounds = array<i64: 1, 256>}, {pipeline_mode = #tpu.pipeline_mode<synchronous>, transform_indices = @transform_5, window_bounds = array<i64: 256, 256>}, {pipeline_mode = #tpu.pipeline_mode<synchronous>, transform_indices = @transform_6, window_bounds = array<i64: 1, 256>}, {pipeline_mode = #tpu.pipeline_mode<synchronous>, transform_indices = @transform_7, window_bounds = array<i64: 256, 1>}, {pipeline_mode = #tpu.pipeline_mode<synchronous>, transform_indices = @transform_8, window_bounds = array<i64: 1, 1>}, {transform_indices = @transform_9, window_bounds = array<i64: 128, 1>}]} {
    %c0 = arith.constant 0 : index
    %c0_0 = arith.constant 0 : index
    %0 = vector.load %arg1[%c0, %c0_0] : memref<128x2048xf32, #tpu.memory_space<vmem>>, vector<128x2048xf32>
    %c0_1 = arith.constant 0 : index
    %c0_2 = arith.constant 0 : index
    %1 = vector.load %arg2[%c0_1, %c0_2] : memref<2048x256xf32, #tpu.memory_space<vmem>>, vector<2048x256xf32>
    %cst = arith.constant dense<0.000000e+00> : vector<128x256xf32>
    %2 = tpu.matmul %0, %1, %cst {dimension_numbers = #tpu.dot_dimension_numbers<[1], [0], [0], [1], [0, 0, 1, 1], [], []>} : vector<128x2048xf32>, vector<2048x256xf32>, vector<128x256xf32> -> vector<128x256xf32>
    %c0_3 = arith.constant 0 : index
    %c0_4 = arith.constant 0 : index
    %3 = vector.load %arg3[%c0_3, %c0_4] : memref<1x256xf32, #tpu.memory_space<vmem>>, vector<1x256xf32>
    %4 = vector.broadcast %3 : vector<1x256xf32> to vector<128x256xf32>
    %5 = arith.addf %2, %4 : vector<128x256xf32>
    %cst_5 = arith.constant 0.000000e+00 : f32
    %6 = vector.broadcast %cst_5 : f32 to vector<128x256xf32>
    %7 = arith.cmpf ogt, %5, %6 : vector<128x256xf32>
    %cst_6 = arith.constant 0.00999999977 : f32
    %8 = vector.broadcast %cst_6 : f32 to vector<128x256xf32>
    %9 = arith.mulf %8, %5 : vector<128x256xf32>
    %10 = arith.select %7, %5, %9 : vector<128x256xi1>, vector<128x256xf32>
    %c0_7 = arith.constant 0 : index
    %c0_8 = arith.constant 0 : index
    %11 = vector.load %arg4[%c0_7, %c0_8] : memref<256x256xf32, #tpu.memory_space<vmem>>, vector<256x256xf32>
    %cst_9 = arith.constant dense<0.000000e+00> : vector<128x256xf32>
    %12 = tpu.matmul %10, %11, %cst_9 {dimension_numbers = #tpu.dot_dimension_numbers<[1], [0], [0], [1], [0, 0, 1, 1], [], []>} : vector<128x256xf32>, vector<256x256xf32>, vector<128x256xf32> -> vector<128x256xf32>
    %c0_10 = arith.constant 0 : index
    %c0_11 = arith.constant 0 : index
    %13 = vector.load %arg5[%c0_10, %c0_11] : memref<1x256xf32, #tpu.memory_space<vmem>>, vector<1x256xf32>
    %14 = vector.broadcast %13 : vector<1x256xf32> to vector<128x256xf32>
    %15 = arith.addf %12, %14 : vector<128x256xf32>
    %cst_12 = arith.constant 0.000000e+00 : f32
    %16 = vector.broadcast %cst_12 : f32 to vector<128x256xf32>
    %17 = arith.cmpf ogt, %15, %16 : vector<128x256xf32>
    %cst_13 = arith.constant 0.00999999977 : f32
    %18 = vector.broadcast %cst_13 : f32 to vector<128x256xf32>
    %19 = arith.mulf %18, %15 : vector<128x256xf32>
    %20 = arith.select %17, %15, %19 : vector<128x256xi1>, vector<128x256xf32>
    %c0_14 = arith.constant 0 : index
    %c0_15 = arith.constant 0 : index
    %21 = vector.load %arg6[%c0_14, %c0_15] : memref<256x256xf32, #tpu.memory_space<vmem>>, vector<256x256xf32>
    %cst_16 = arith.constant dense<0.000000e+00> : vector<128x256xf32>
    %22 = tpu.matmul %20, %21, %cst_16 {dimension_numbers = #tpu.dot_dimension_numbers<[1], [0], [0], [1], [0, 0, 1, 1], [], []>} : vector<128x256xf32>, vector<256x256xf32>, vector<128x256xf32> -> vector<128x256xf32>
    %c0_17 = arith.constant 0 : index
    %c0_18 = arith.constant 0 : index
    %23 = vector.load %arg7[%c0_17, %c0_18] : memref<1x256xf32, #tpu.memory_space<vmem>>, vector<1x256xf32>
    %24 = vector.broadcast %23 : vector<1x256xf32> to vector<128x256xf32>
    %25 = arith.addf %22, %24 : vector<128x256xf32>
    %cst_19 = arith.constant 0.000000e+00 : f32
    %26 = vector.broadcast %cst_19 : f32 to vector<128x256xf32>
    %27 = arith.cmpf ogt, %25, %26 : vector<128x256xf32>
    %cst_20 = arith.constant 0.00999999977 : f32
    %28 = vector.broadcast %cst_20 : f32 to vector<128x256xf32>
    %29 = arith.mulf %28, %25 : vector<128x256xf32>
    %30 = arith.select %27, %25, %29 : vector<128x256xi1>, vector<128x256xf32>
    %c0_21 = arith.constant 0 : index
    %c0_22 = arith.constant 0 : index
    %31 = vector.load %arg8[%c0_21, %c0_22] : memref<256x1xf32, #tpu.memory_space<vmem>>, vector<256x1xf32>
    %cst_23 = arith.constant dense<0.000000e+00> : vector<128x1xf32>
    %32 = tpu.matmul %30, %31, %cst_23 {dimension_numbers = #tpu.dot_dimension_numbers<[1], [0], [0], [1], [0, 0, 1, 1], [], []>} : vector<128x256xf32>, vector<256x1xf32>, vector<128x1xf32> -> vector<128x1xf32>
    %c0_24 = arith.constant 0 : index
    %c0_25 = arith.constant 0 : index
    %33 = vector.load %arg9[%c0_24, %c0_25] : memref<1x1xf32, #tpu.memory_space<vmem>>, vector<1x1xf32>
    %34 = vector.broadcast %33 : vector<1x1xf32> to vector<128x1xf32>
    %35 = arith.addf %32, %34 : vector<128x1xf32>
    %c0_26 = arith.constant 0 : index
    %c0_27 = arith.constant 0 : index
    %36 = vector.load %arg10[%c0_26, %c0_27] : memref<128x1xf32, #tpu.memory_space<vmem>>, vector<128x1xf32>
    tpu.vector_store %arg10[%c0_26, %c0_27], %35 {strides = array<i32>} : memref<128x1xf32, #tpu.memory_space<vmem>>, vector<128x1xf32>,
    return
  }
  func.func @transform_0(%arg0: i32) -> (i32, i32) {
    %c0_i32 = arith.constant 0 : i32
    %c0_i32_0 = arith.constant 0 : i32
    return %arg0, %c0_i32 : i32, i32
  }
  func.func @transform_1(%arg0: i32) -> (i32, i32) {
    %c0_i32 = arith.constant 0 : i32
    %c0_i32_0 = arith.constant 0 : i32
    %c0_i32_1 = arith.constant 0 : i32
    return %c0_i32, %c0_i32_0 : i32, i32
  }
  func.func @transform_2(%arg0: i32) -> (i32, i32) {
    %c0_i32 = arith.constant 0 : i32
    %c0_i32_0 = arith.constant 0 : i32
    %c0_i32_1 = arith.constant 0 : i32
    return %c0_i32, %c0_i32_0 : i32, i32
  }
  func.func @transform_3(%arg0: i32) -> (i32, i32) {
    %c0_i32 = arith.constant 0 : i32
    %c0_i32_0 = arith.constant 0 : i32
    %c0_i32_1 = arith.constant 0 : i32
    return %c0_i32, %c0_i32_0 : i32, i32
  }
  func.func @transform_4(%arg0: i32) -> (i32, i32) {
    %c0_i32 = arith.constant 0 : i32
    %c0_i32_0 = arith.constant 0 : i32
    %c0_i32_1 = arith.constant 0 : i32
    return %c0_i32, %c0_i32_0 : i32, i32
  }
  func.func @transform_5(%arg0: i32) -> (i32, i32) {
    %c0_i32 = arith.constant 0 : i32
    %c0_i32_0 = arith.constant 0 : i32
    %c0_i32_1 = arith.constant 0 : i32
    return %c0_i32, %c0_i32_0 : i32, i32
  }
  func.func @transform_6(%arg0: i32) -> (i32, i32) {
    %c0_i32 = arith.constant 0 : i32
    %c0_i32_0 = arith.constant 0 : i32
    %c0_i32_1 = arith.constant 0 : i32
    return %c0_i32, %c0_i32_0 : i32, i32
  }
  func.func @transform_7(%arg0: i32) -> (i32, i32) {
    %c0_i32 = arith.constant 0 : i32
    %c0_i32_0 = arith.constant 0 : i32
    %c0_i32_1 = arith.constant 0 : i32
    return %c0_i32, %c0_i32_0 : i32, i32
  }
  func.func @transform_8(%arg0: i32) -> (i32, i32) {
    %c0_i32 = arith.constant 0 : i32
    %c0_i32_0 = arith.constant 0 : i32
    %c0_i32_1 = arith.constant 0 : i32
    return %c0_i32, %c0_i32_0 : i32, i32
  }
  func.func @transform_9(%arg0: i32) -> (i32, i32) {
    %c0_i32 = arith.constant 0 : i32
    %c0_i32_0 = arith.constant 0 : i32
    return %arg0, %c0_i32 : i32, i32
  }
}

</mosaic_0001>

<llo_original>
// kernel: feed_forward_net.1
$region0: #{feed_forward_net.1}
  #allocation0 [shape = 'u32[]', space=smem, size = 0x4, offset = 0x4, fixed_abs, tag = 'smem constant byte address 0x4 - core index']
  #allocation1 [shape = 'u32[144,128]{1,0:T(1,128)}', space=vmem, size = 0x12000, scoped, tag = 'internal scratch']
  #allocation2 [shape = 'f32[1,1]{1,0:T(1,128)S(1)}', space=vmem, size = 0x200, scoped, tag = 'scoped memory for feed_forward_net.1']
  %s0 = inlined_call_operand.vmem [shape: f32[128,2048], index: 0, kind: input, shape index: {}]
  %s1 = inlined_call_operand.hbm [shape: f32[2048,256], index: 1, kind: input, shape index: {}]
  %s2 = inlined_call_operand.hbm [shape: f32[1,256], index: 2, kind: input, shape index: {}]
  %s3 = inlined_call_operand.hbm [shape: f32[256,256], index: 3, kind: input, shape index: {}]
  %s4 = inlined_call_operand.hbm [shape: f32[1,256], index: 4, kind: input, shape index: {}]
  %s5 = inlined_call_operand.hbm [shape: f32[256,256], index: 5, kind: input, shape index: {}]
  %s6 = inlined_call_operand.hbm [shape: f32[1,256], index: 6, kind: input, shape index: {}]
  %s7 = inlined_call_operand.vmem [shape: f32[256,1], index: 7, kind: input, shape index: {}]
  %s8 = inlined_call_operand.<no memory space> [shape: f32[1,1], index: 8, kind: input, shape index: {}]
  %s9 = inlined_call_operand.vmem [shape: f32[128,1], index: 9, kind: output, shape index: {}]
  %s10 = sld [smem:[#allocation0]]
  $region70: #{feed_forward_net.1} parent=0
    _
  %s12 = ssub.s32 1, %s10
  %s13 = scalar_select 0, %s12, %s10
  %v14 = vstv %s8
  %15 = vst [vmem:[#allocation2] sm:$0x1] %v14
  $region1: #{feed_forward_net.1} parent=0
    #allocation3 [shape = 'u8[2097152]{0}', space=vmem, size = 0x200000, scoped, tag = 'input window, operand 1, single buffered']
    #allocation4 [shape = 's32[1]{0}', space=sflag, size = 0x4, scoped, tag = 'scoped memory for feed_forward_net.1']
    #allocation5 [shape = 'u8[1024]{0}', space=vmem, size = 0x400, scoped, tag = 'input window, operand 2, single buffered']
    #allocation6 [shape = 's32[1]{0}', space=sflag, size = 0x4, scoped, tag = 'scoped memory for feed_forward_net.1']
    #allocation7 [shape = 'u8[262144]{0}', space=vmem, size = 0x40000, scoped, tag = 'input window, operand 3, single buffered']
    #allocation8 [shape = 'u8[1024]{0}', space=vmem, size = 0x400, scoped, tag = 'input window, operand 4, single buffered']
    #allocation9 [shape = 's32[1]{0}', space=sflag, size = 0x4, scoped, tag = 'scoped memory for feed_forward_net.1']
    #allocation10 [shape = 'u8[262144]{0}', space=vmem, size = 0x40000, scoped, tag = 'input window, operand 5, single buffered']
    #allocation11 [shape = 'u8[1024]{0}', space=vmem, size = 0x400, scoped, tag = 'input window, operand 6, single buffered']
    #allocation12 [shape = 's32[1]{0}', space=sflag, size = 0x4, scoped, tag = 'scoped memory for feed_forward_net.1']
    %16 = vsyncpa [#allocation4], 0
    %17 = vsyncpa [#allocation6], 0
    %18 = vsyncpa [#allocation9], 0
    %19 = vsyncpa [#allocation12], 0
    // Predicated region
    $region2: #{feed_forward_net.1} parent=1 // pred_check
      _
    $region3: #{feed_forward_net.1} parent=1 // pred_check_branch
      %21 = sbr.rel (0) target = $region5
    $region4: #{feed_forward_net.1} parent=1 // pred_region
      _
    $region5: #{feed_forward_net.1} parent=1 // pred_fallthru
      _
    // Predicated region
    $region6: #{feed_forward_net.1} parent=1 // pred_check
      _
    $region7: #{feed_forward_net.1} parent=1 // pred_check_branch
      %23 = sbr.rel (0) target = $region9
    $region8: #{feed_forward_net.1} parent=1 // pred_region
      %s25 = ssub.s32 65536, 65536
      %26 = vsyncadd [#allocation4], %s25
      %s27 = sshll.u32 [#allocation3], 4
      %s28 = int_to_ptr.vmem [resolvable:$true] %s27
      %33 = dma.hbm_to_vmem [thread:$0]  %s1, 65536, %s28, [#allocation4], 256, 256, 16
    $region9: #{feed_forward_net.1} parent=1 // pred_fallthru
      _
    // Predicated region
    $region10: #{feed_forward_net.1} parent=1 // pred_check
      _
    $region11: #{feed_forward_net.1} parent=1 // pred_check_branch
      %35 = sbr.rel (0) target = $region13
    $region12: #{feed_forward_net.1} parent=1 // pred_region
      %s37 = ssub.s32 32, 32
      %38 = vsyncadd [#allocation6], %s37
      %s40 = sshll.u32 [#allocation5], 4
      %s41 = int_to_ptr.vmem [resolvable:$true] %s40
      %43 = dma.hbm_to_vmem [thread:$0]  %s2, 32, %s41, [#allocation6]
    $region13: #{feed_forward_net.1} parent=1 // pred_fallthru
      _
    // Predicated region
    $region14: #{feed_forward_net.1} parent=1 // pred_check
      _
    $region15: #{feed_forward_net.1} parent=1 // pred_check_branch
      %45 = sbr.rel (0) target = $region17
    $region16: #{feed_forward_net.1} parent=1 // pred_region
      %s47 = ssub.s32 8192, 8192
      %48 = vsyncadd [#allocation6], %s47
      %s49 = sshll.u32 [#allocation7], 4
      %s50 = int_to_ptr.vmem [resolvable:$true] %s49
      %55 = dma.hbm_to_vmem [thread:$0]  %s3, 8192, %s50, [#allocation6], 256, 256, 16
    $region17: #{feed_forward_net.1} parent=1 // pred_fallthru
      _
    // Predicated region
    $region18: #{feed_forward_net.1} parent=1 // pred_check
      _
    $region19: #{feed_forward_net.1} parent=1 // pred_check_branch
      %57 = sbr.rel (0) target = $region21
    $region20: #{feed_forward_net.1} parent=1 // pred_region
      %s59 = ssub.s32 32, 32
      %60 = vsyncadd [#allocation9], %s59
      %s62 = sshll.u32 [#allocation8], 4
      %s63 = int_to_ptr.vmem [resolvable:$true] %s62
      %65 = dma.hbm_to_vmem [thread:$0]  %s4, 32, %s63, [#allocation9]
    $region21: #{feed_forward_net.1} parent=1 // pred_fallthru
      _
    // Predicated region
    $region22: #{feed_forward_net.1} parent=1 // pred_check
      _
    $region23: #{feed_forward_net.1} parent=1 // pred_check_branch
      %67 = sbr.rel (0) target = $region25
    $region24: #{feed_forward_net.1} parent=1 // pred_region
      %s69 = ssub.s32 8192, 8192
      %70 = vsyncadd [#allocation9], %s69
      %s71 = sshll.u32 [#allocation10], 4
      %s72 = int_to_ptr.vmem [resolvable:$true] %s71
      %77 = dma.hbm_to_vmem [thread:$0]  %s5, 8192, %s72, [#allocation9], 256, 256, 16
    $region25: #{feed_forward_net.1} parent=1 // pred_fallthru
      _
    // Predicated region
    $region26: #{feed_forward_net.1} parent=1 // pred_check
      _
    $region27: #{feed_forward_net.1} parent=1 // pred_check_branch
      %79 = sbr.rel (0) target = $region29
    $region28: #{feed_forward_net.1} parent=1 // pred_region
      %s81 = ssub.s32 32, 32
      %82 = vsyncadd [#allocation12], %s81
      %s84 = sshll.u32 [#allocation11], 4
      %s85 = int_to_ptr.vmem [resolvable:$true] %s84
      %87 = dma.hbm_to_vmem [thread:$0]  %s6, 32, %s85, [#allocation12]
    $region29: #{feed_forward_net.1} parent=1 // pred_fallthru
      _
    // Predicated region
    $region30: #{feed_forward_net.1} parent=1 // pred_check
      _
    $region31: #{feed_forward_net.1} parent=1 // pred_check_branch
      %89 = sbr.rel (0) target = $region33
    $region32: #{feed_forward_net.1} parent=1 // pred_region
      _
    $region33: #{feed_forward_net.1} parent=1 // pred_fallthru
      _
    // Predicated region
    $region34: #{feed_forward_net.1} parent=1 // pred_check
      _
    $region35: #{feed_forward_net.1} parent=1 // pred_check_branch
      %91 = sbr.rel (0) target = $region37
    $region36: #{feed_forward_net.1} parent=1 // pred_region
      _
    $region37: #{feed_forward_net.1} parent=1 // pred_fallthru
      _
    // Predicated region
    $region38: #{feed_forward_net.1} parent=1 // pred_check
      _
    $region39: #{feed_forward_net.1} parent=1 // pred_check_branch
      %93 = sbr.rel (0) target = $region41
    $region40: #{feed_forward_net.1} parent=1 // pred_region
      %94 = dma.done [#allocation4], 65536
    $region41: #{feed_forward_net.1} parent=1 // pred_fallthru
      _
    // Predicated region
    $region42: #{feed_forward_net.1} parent=1 // pred_check
      _
    $region43: #{feed_forward_net.1} parent=1 // pred_check_branch
      %96 = sbr.rel (0) target = $region45
    $region44: #{feed_forward_net.1} parent=1 // pred_region
      %97 = dma.done [#allocation6], 32
    $region45: #{feed_forward_net.1} parent=1 // pred_fallthru
      _
    // Predicated region
    $region46: #{feed_forward_net.1} parent=1 // pred_check
      _
    $region47: #{feed_forward_net.1} parent=1 // pred_check_branch
      %99 = sbr.rel (0) target = $region49
    $region48: #{feed_forward_net.1} parent=1 // pred_region
      %100 = dma.done [#allocation6], 8192
    $region49: #{feed_forward_net.1} parent=1 // pred_fallthru
      _
    // Predicated region
    $region50: #{feed_forward_net.1} parent=1 // pred_check
      _
    $region51: #{feed_forward_net.1} parent=1 // pred_check_branch
      %102 = sbr.rel (0) target = $region53
    $region52: #{feed_forward_net.1} parent=1 // pred_region
      %103 = dma.done [#allocation9], 32
    $region53: #{feed_forward_net.1} parent=1 // pred_fallthru
      _
    // Predicated region
    $region54: #{feed_forward_net.1} parent=1 // pred_check
      _
    $region55: #{feed_forward_net.1} parent=1 // pred_check_branch
      %105 = sbr.rel (0) target = $region57
    $region56: #{feed_forward_net.1} parent=1 // pred_region
      %106 = dma.done [#allocation9], 8192
    $region57: #{feed_forward_net.1} parent=1 // pred_fallthru
      _
    // Predicated region
    $region58: #{feed_forward_net.1} parent=1 // pred_check
      _
    $region59: #{feed_forward_net.1} parent=1 // pred_check_branch
      %108 = sbr.rel (0) target = $region61
    $region60: #{feed_forward_net.1} parent=1 // pred_region
      %109 = dma.done [#allocation12], 32
    $region61: #{feed_forward_net.1} parent=1 // pred_fallthru
      _
    %v110 = vld [vmem:[%s0] sm:$0xff]
    %v111 = vld [vmem:[%s0 + $0x8] sm:$0xff]
    %v112 = vld [vmem:[%s0 + $0x10] sm:$0xff]
    %v113 = vld [vmem:[%s0 + $0x18] sm:$0xff]
    %v114 = vld [vmem:[%s0 + $0x20] sm:$0xff]
    %v115 = vld [vmem:[%s0 + $0x28] sm:$0xff]
    %v116 = vld [vmem:[%s0 + $0x30] sm:$0xff]
    %v117 = vld [vmem:[%s0 + $0x38] sm:$0xff]
    %v118 = vld [vmem:[%s0 + $0x40] sm:$0xff]
    %v119 = vld [vmem:[%s0 + $0x48] sm:$0xff]
    %v120 = vld [vmem:[%s0 + $0x50] sm:$0xff]
    %v121 = vld [vmem:[%s0 + $0x58] sm:$0xff]
    %v122 = vld [vmem:[%s0 + $0x60] sm:$0xff]
    %v123 = vld [vmem:[%s0 + $0x68] sm:$0xff]
    %v124 = vld [vmem:[%s0 + $0x70] sm:$0xff]
    %v125 = vld [vmem:[%s0 + $0x78] sm:$0xff]
    %v126 = vld [vmem:[%s0 + $0x80] sm:$0xff]
    %v127 = vld [vmem:[%s0 + $0x88] sm:$0xff]
    %v128 = vld [vmem:[%s0 + $0x90] sm:$0xff]
    %v129 = vld [vmem:[%s0 + $0x98] sm:$0xff]
    %v130 = vld [vmem:[%s0 + $0xa0] sm:$0xff]
    %v131 = vld [vmem:[%s0 + $0xa8] sm:$0xff]
    %v132 = vld [vmem:[%s0 + $0xb0] sm:$0xff]
    %v133 = vld [vmem:[%s0 + $0xb8] sm:$0xff]
    %v134 = vld [vmem:[%s0 + $0xc0] sm:$0xff]
    %v135 = vld [vmem:[%s0 + $0xc8] sm:$0xff]
    %v136 = vld [vmem:[%s0 + $0xd0] sm:$0xff]
    %v137 = vld [vmem:[%s0 + $0xd8] sm:$0xff]
    %v138 = vld [vmem:[%s0 + $0xe0] sm:$0xff]
    %v139 = vld [vmem:[%s0 + $0xe8] sm:$0xff]
    %v140 = vld [vmem:[%s0 + $0xf0] sm:$0xff]
    %v141 = vld [vmem:[%s0 + $0xf8] sm:$0xff]
    %v142 = vld [vmem:[%s0 + $0x100] sm:$0xff]
    %v143 = vld [vmem:[%s0 + $0x108] sm:$0xff]
    %v144 = vld [vmem:[%s0 + $0x110] sm:$0xff]
    %v145 = vld [vmem:[%s0 + $0x118] sm:$0xff]
    %v146 = vld [vmem:[%s0 + $0x120] sm:$0xff]
    %v147 = vld [vmem:[%s0 + $0x128] sm:$0xff]
    %v148 = vld [vmem:[%s0 + $0x130] sm:$0xff]
    %v149 = vld [vmem:[%s0 + $0x138] sm:$0xff]
    %v150 = vld [vmem:[%s0 + $0x140] sm:$0xff]
    %v151 = vld [vmem:[%s0 + $0x148] sm:$0xff]
    %v152 = vld [vmem:[%s0 + $0x150] sm:$0xff]
    %v153 = vld [vmem:[%s0 + $0x158] sm:$0xff]
    %v154 = vld [vmem:[%s0 + $0x160] sm:$0xff]
    %v155 = vld [vmem:[%s0 + $0x168] sm:$0xff]
    %v156 = vld [vmem:[%s0 + $0x170] sm:$0xff]
    %v157 = vld [vmem:[%s0 + $0x178] sm:$0xff]
    %v158 = vld [vmem:[%s0 + $0x180] sm:$0xff]
    %v159 = vld [vmem:[%s0 + $0x188] sm:$0xff]
    %v160 = vld [vmem:[%s0 + $0x190] sm:$0xff]
    %v161 = vld [vmem:[%s0 + $0x198] sm:$0xff]
    %v162 = vld [vmem:[%s0 + $0x1a0] sm:$0xff]
    %v163 = vld [vmem:[%s0 + $0x1a8] sm:$0xff]
    %v164 = vld [vmem:[%s0 + $0x1b0] sm:$0xff]
    %v165 = vld [vmem:[%s0 + $0x1b8] sm:$0xff]
    %v166 = vld [vmem:[%s0 + $0x1c0] sm:$0xff]
    %v167 = vld [vmem:[%s0 + $0x1c8] sm:$0xff]
    %v168 = vld [vmem:[%s0 + $0x1d0] sm:$0xff]
    %v169 = vld [vmem:[%s0 + $0x1d8] sm:$0xff]
    %v170 = vld [vmem:[%s0 + $0x1e0] sm:$0xff]
    %v171 = vld [vmem:[%s0 + $0x1e8] sm:$0xff]
    %v172 = vld [vmem:[%s0 + $0x1f0] sm:$0xff]
    %v173 = vld [vmem:[%s0 + $0x1f8] sm:$0xff]
    %v174 = vld [vmem:[%s0 + $0x200] sm:$0xff]
    %v175 = vld [vmem:[%s0 + $0x208] sm:$0xff]
    %v176 = vld [vmem:[%s0 + $0x210] sm:$0xff]
    %v177 = vld [vmem:[%s0 + $0x218] sm:$0xff]
    %v178 = vld [vmem:[%s0 + $0x220] sm:$0xff]
    %v179 = vld [vmem:[%s0 + $0x228] sm:$0xff]
    %v180 = vld [vmem:[%s0 + $0x230] sm:$0xff]
    %v181 = vld [vmem:[%s0 + $0x238] sm:$0xff]
    %v182 = vld [vmem:[%s0 + $0x240] sm:$0xff]
    %v183 = vld [vmem:[%s0 + $0x248] sm:$0xff]
    %v184 = vld [vmem:[%s0 + $0x250] sm:$0xff]
    %v185 = vld [vmem:[%s0 + $0x258] sm:$0xff]
    %v186 = vld [vmem:[%s0 + $0x260] sm:$0xff]
    %v187 = vld [vmem:[%s0 + $0x268] sm:$0xff]
    %v188 = vld [vmem:[%s0 + $0x270] sm:$0xff]
    %v189 = vld [vmem:[%s0 + $0x278] sm:$0xff]
    %v190 = vld [vmem:[%s0 + $0x280] sm:$0xff]
    %v191 = vld [vmem:[%s0 + $0x288] sm:$0xff]
    %v192 = vld [vmem:[%s0 + $0x290] sm:$0xff]
    %v193 = vld [vmem:[%s0 + $0x298] sm:$0xff]
    %v194 = vld [vmem:[%s0 + $0x2a0] sm:$0xff]
    %v195 = vld [vmem:[%s0 + $0x2a8] sm:$0xff]
    %v196 = vld [vmem:[%s0 + $0x2b0] sm:$0xff]
    %v197 = vld [vmem:[%s0 + $0x2b8] sm:$0xff]
    %v198 = vld [vmem:[%s0 + $0x2c0] sm:$0xff]
    %v199 = vld [vmem:[%s0 + $0x2c8] sm:$0xff]
    %v200 = vld [vmem:[%s0 + $0x2d0] sm:$0xff]
    %v201 = vld [vmem:[%s0 + $0x2d8] sm:$0xff]
    %v202 = vld [vmem:[%s0 + $0x2e0] sm:$0xff]
    %v203 = vld [vmem:[%s0 + $0x2e8] sm:$0xff]
    %v204 = vld [vmem:[%s0 + $0x2f0] sm:$0xff]
    %v205 = vld [vmem:[%s0 + $0x2f8] sm:$0xff]
    %v206 = vld [vmem:[%s0 + $0x300] sm:$0xff]
    %v207 = vld [vmem:[%s0 + $0x308] sm:$0xff]
    %v208 = vld [vmem:[%s0 + $0x310] sm:$0xff]
    %v209 = vld [vmem:[%s0 + $0x318] sm:$0xff]
    %v210 = vld [vmem:[%s0 + $0x320] sm:$0xff]
    %v211 = vld [vmem:[%s0 + $0x328] sm:$0xff]
    %v212 = vld [vmem:[%s0 + $0x330] sm:$0xff]
    %v213 = vld [vmem:[%s0 + $0x338] sm:$0xff]
    %v214 = vld [vmem:[%s0 + $0x340] sm:$0xff]
    %v215 = vld [vmem:[%s0 + $0x348] sm:$0xff]
    %v216 = vld [vmem:[%s0 + $0x350] sm:$0xff]
    %v217 = vld [vmem:[%s0 + $0x358] sm:$0xff]
    %v218 = vld [vmem:[%s0 + $0x360] sm:$0xff]
    %v219 = vld [vmem:[%s0 + $0x368] sm:$0xff]
    %v220 = vld [vmem:[%s0 + $0x370] sm:$0xff]
    %v221 = vld [vmem:[%s0 + $0x378] sm:$0xff]
    %v222 = vld [vmem:[%s0 + $0x380] sm:$0xff]
    %v223 = vld [vmem:[%s0 + $0x388] sm:$0xff]
    %v224 = vld [vmem:[%s0 + $0x390] sm:$0xff]
    %v225 = vld [vmem:[%s0 + $0x398] sm:$0xff]
    %v226 = vld [vmem:[%s0 + $0x3a0] sm:$0xff]
    %v227 = vld [vmem:[%s0 + $0x3a8] sm:$0xff]
    %v228 = vld [vmem:[%s0 + $0x3b0] sm:$0xff]
    %v229 = vld [vmem:[%s0 + $0x3b8] sm:$0xff]
    %v230 = vld [vmem:[%s0 + $0x3c0] sm:$0xff]
    %v231 = vld [vmem:[%s0 + $0x3c8] sm:$0xff]
    %v232 = vld [vmem:[%s0 + $0x3d0] sm:$0xff]
    %v233 = vld [vmem:[%s0 + $0x3d8] sm:$0xff]
    %v234 = vld [vmem:[%s0 + $0x3e0] sm:$0xff]
    %v235 = vld [vmem:[%s0 + $0x3e8] sm:$0xff]
    %v236 = vld [vmem:[%s0 + $0x3f0] sm:$0xff]
    %v237 = vld [vmem:[%s0 + $0x3f8] sm:$0xff]
    %v238 = vld [vmem:[%s0 + $0x400] sm:$0xff]
    %v239 = vld [vmem:[%s0 + $0x408] sm:$0xff]
    %v240 = vld [vmem:[%s0 + $0x410] sm:$0xff]
    %v241 = vld [vmem:[%s0 + $0x418] sm:$0xff]
    %v242 = vld [vmem:[%s0 + $0x420] sm:$0xff]
    %v243 = vld [vmem:[%s0 + $0x428] sm:$0xff]
    %v244 = vld [vmem:[%s0 + $0x430] sm:$0xff]
    %v245 = vld [vmem:[%s0 + $0x438] sm:$0xff]
    %v246 = vld [vmem:[%s0 + $0x440] sm:$0xff]
    %v247 = vld [vmem:[%s0 + $0x448] sm:$0xff]
    %v248 = vld [vmem:[%s0 + $0x450] sm:$0xff]
    %v249 = vld [vmem:[%s0 + $0x458] sm:$0xff]
    %v250 = vld [vmem:[%s0 + $0x460] sm:$0xff]
    %v251 = vld [vmem:[%s0 + $0x468] sm:$0xff]
    %v252 = vld [vmem:[%s0 + $0x470] sm:$0xff]
    %v253 = vld [vmem:[%s0 + $0x478] sm:$0xff]
    %v254 = vld [vmem:[%s0 + $0x480] sm:$0xff]
    %v255 = vld [vmem:[%s0 + $0x488] sm:$0xff]
    %v256 = vld [vmem:[%s0 + $0x490] sm:$0xff]
    %v257 = vld [vmem:[%s0 + $0x498] sm:$0xff]
    %v258 = vld [vmem:[%s0 + $0x4a0] sm:$0xff]
    %v259 = vld [vmem:[%s0 + $0x4a8] sm:$0xff]
    %v260 = vld [vmem:[%s0 + $0x4b0] sm:$0xff]
    %v261 = vld [vmem:[%s0 + $0x4b8] sm:$0xff]
    %v262 = vld [vmem:[%s0 + $0x4c0] sm:$0xff]
    %v263 = vld [vmem:[%s0 + $0x4c8] sm:$0xff]
    %v264 = vld [vmem:[%s0 + $0x4d0] sm:$0xff]
    %v265 = vld [vmem:[%s0 + $0x4d8] sm:$0xff]
    %v266 = vld [vmem:[%s0 + $0x4e0] sm:$0xff]
    %v267 = vld [vmem:[%s0 + $0x4e8] sm:$0xff]
    %v268 = vld [vmem:[%s0 + $0x4f0] sm:$0xff]
    %v269 = vld [vmem:[%s0 + $0x4f8] sm:$0xff]
    %v270 = vld [vmem:[%s0 + $0x500] sm:$0xff]
    %v271 = vld [vmem:[%s0 + $0x508] sm:$0xff]
    %v272 = vld [vmem:[%s0 + $0x510] sm:$0xff]
    %v273 = vld [vmem:[%s0 + $0x518] sm:$0xff]
    %v274 = vld [vmem:[%s0 + $0x520] sm:$0xff]
    %v275 = vld [vmem:[%s0 + $0x528] sm:$0xff]
    %v276 = vld [vmem:[%s0 + $0x530] sm:$0xff]
    %v277 = vld [vmem:[%s0 + $0x538] sm:$0xff]
    %v278 = vld [vmem:[%s0 + $0x540] sm:$0xff]
    %v279 = vld [vmem:[%s0 + $0x548] sm:$0xff]
    %v280 = vld [vmem:[%s0 + $0x550] sm:$0xff]
    %v281 = vld [vmem:[%s0 + $0x558] sm:$0xff]
    %v282 = vld [vmem:[%s0 + $0x560] sm:$0xff]
    %v283 = vld [vmem:[%s0 + $0x568] sm:$0xff]
    %v284 = vld [vmem:[%s0 + $0x570] sm:$0xff]
    %v285 = vld [vmem:[%s0 + $0x578] sm:$0xff]
    %v286 = vld [vmem:[%s0 + $0x580] sm:$0xff]
    %v287 = vld [vmem:[%s0 + $0x588] sm:$0xff]
    %v288 = vld [vmem:[%s0 + $0x590] sm:$0xff]
    %v289 = vld [vmem:[%s0 + $0x598] sm:$0xff]
    %v290 = vld [vmem:[%s0 + $0x5a0] sm:$0xff]
    %v291 = vld [vmem:[%s0 + $0x5a8] sm:$0xff]
    %v292 = vld [vmem:[%s0 + $0x5b0] sm:$0xff]
    %v293 = vld [vmem:[%s0 + $0x5b8] sm:$0xff]
    %v294 = vld [vmem:[%s0 + $0x5c0] sm:$0xff]
    %v295 = vld [vmem:[%s0 + $0x5c8] sm:$0xff]
    %v296 = vld [vmem:[%s0 + $0x5d0] sm:$0xff]
    %v297 = vld [vmem:[%s0 + $0x5d8] sm:$0xff]
    %v298 = vld [vmem:[%s0 + $0x5e0] sm:$0xff]
    %v299 = vld [vmem:[%s0 + $0x5e8] sm:$0xff]
    %v300 = vld [vmem:[%s0 + $0x5f0] sm:$0xff]
    %v301 = vld [vmem:[%s0 + $0x5f8] sm:$0xff]
    %v302 = vld [vmem:[%s0 + $0x600] sm:$0xff]
    %v303 = vld [vmem:[%s0 + $0x608] sm:$0xff]
    %v304 = vld [vmem:[%s0 + $0x610] sm:$0xff]
    %v305 = vld [vmem:[%s0 + $0x618] sm:$0xff]
    %v306 = vld [vmem:[%s0 + $0x620] sm:$0xff]
    %v307 = vld [vmem:[%s0 + $0x628] sm:$0xff]
    %v308 = vld [vmem:[%s0 + $0x630] sm:$0xff]
    %v309 = vld [vmem:[%s0 + $0x638] sm:$0xff]
    %v310 = vld [vmem:[%s0 + $0x640] sm:$0xff]
    %v311 = vld [vmem:[%s0 + $0x648] sm:$0xff]
    %v312 = vld [vmem:[%s0 + $0x650] sm:$0xff]
    %v313 = vld [vmem:[%s0 + $0x658] sm:$0xff]
    %v314 = vld [vmem:[%s0 + $0x660] sm:$0xff]
    %v315 = vld [vmem:[%s0 + $0x668] sm:$0xff]
    %v316 = vld [vmem:[%s0 + $0x670] sm:$0xff]
    %v317 = vld [vmem:[%s0 + $0x678] sm:$0xff]
    %v318 = vld [vmem:[%s0 + $0x680] sm:$0xff]
    %v319 = vld [vmem:[%s0 + $0x688] sm:$0xff]
    %v320 = vld [vmem:[%s0 + $0x690] sm:$0xff]
    %v321 = vld [vmem:[%s0 + $0x698] sm:$0xff]
    %v322 = vld [vmem:[%s0 + $0x6a0] sm:$0xff]
    %v323 = vld [vmem:[%s0 + $0x6a8] sm:$0xff]
    %v324 = vld [vmem:[%s0 + $0x6b0] sm:$0xff]
    %v325 = vld [vmem:[%s0 + $0x6b8] sm:$0xff]
    %v326 = vld [vmem:[%s0 + $0x6c0] sm:$0xff]
    %v327 = vld [vmem:[%s0 + $0x6c8] sm:$0xff]
    %v328 = vld [vmem:[%s0 + $0x6d0] sm:$0xff]
    %v329 = vld [vmem:[%s0 + $0x6d8] sm:$0xff]
    %v330 = vld [vmem:[%s0 + $0x6e0] sm:$0xff]
    %v331 = vld [vmem:[%s0 + $0x6e8] sm:$0xff]
    %v332 = vld [vmem:[%s0 + $0x6f0] sm:$0xff]
    %v333 = vld [vmem:[%s0 + $0x6f8] sm:$0xff]
    %v334 = vld [vmem:[%s0 + $0x700] sm:$0xff]
    %v335 = vld [vmem:[%s0 + $0x708] sm:$0xff]
    %v336 = vld [vmem:[%s0 + $0x710] sm:$0xff]
    %v337 = vld [vmem:[%s0 + $0x718] sm:$0xff]
    %v338 = vld [vmem:[%s0 + $0x720] sm:$0xff]
    %v339 = vld [vmem:[%s0 + $0x728] sm:$0xff]
    %v340 = vld [vmem:[%s0 + $0x730] sm:$0xff]
    %v341 = vld [vmem:[%s0 + $0x738] sm:$0xff]
    %v342 = vld [vmem:[%s0 + $0x740] sm:$0xff]
    %v343 = vld [vmem:[%s0 + $0x748] sm:$0xff]
    %v344 = vld [vmem:[%s0 + $0x750] sm:$0xff]
    %v345 = vld [vmem:[%s0 + $0x758] sm:$0xff]
    %v346 = vld [vmem:[%s0 + $0x760] sm:$0xff]
    %v347 = vld [vmem:[%s0 + $0x768] sm:$0xff]
    %v348 = vld [vmem:[%s0 + $0x770] sm:$0xff]
    %v349 = vld [vmem:[%s0 + $0x778] sm:$0xff]
    %v350 = vld [vmem:[%s0 + $0x780] sm:$0xff]
    %v351 = vld [vmem:[%s0 + $0x788] sm:$0xff]
    %v352 = vld [vmem:[%s0 + $0x790] sm:$0xff]
    %v353 = vld [vmem:[%s0 + $0x798] sm:$0xff]
    %v354 = vld [vmem:[%s0 + $0x7a0] sm:$0xff]
    %v355 = vld [vmem:[%s0 + $0x7a8] sm:$0xff]
    %v356 = vld [vmem:[%s0 + $0x7b0] sm:$0xff]
    %v357 = vld [vmem:[%s0 + $0x7b8] sm:$0xff]
    %v358 = vld [vmem:[%s0 + $0x7c0] sm:$0xff]
    %v359 = vld [vmem:[%s0 + $0x7c8] sm:$0xff]
    %v360 = vld [vmem:[%s0 + $0x7d0] sm:$0xff]
    %v361 = vld [vmem:[%s0 + $0x7d8] sm:$0xff]
    %v362 = vld [vmem:[%s0 + $0x7e0] sm:$0xff]
    %v363 = vld [vmem:[%s0 + $0x7e8] sm:$0xff]
    %v364 = vld [vmem:[%s0 + $0x7f0] sm:$0xff]
    %v365 = vld [vmem:[%s0 + $0x7f8] sm:$0xff]
    %v366 = vld [vmem:[#allocation3] sm:$0xff]
    %v367 = vld [vmem:[#allocation3 + $0x8] sm:$0xff]
    %v368 = vld [vmem:[#allocation3 + $0x10] sm:$0xff]
    %v369 = vld [vmem:[#allocation3 + $0x18] sm:$0xff]
    %v370 = vld [vmem:[#allocation3 + $0x20] sm:$0xff]
    %v371 = vld [vmem:[#allocation3 + $0x28] sm:$0xff]
    %v372 = vld [vmem:[#allocation3 + $0x30] sm:$0xff]
    %v373 = vld [vmem:[#allocation3 + $0x38] sm:$0xff]
    %v374 = vld [vmem:[#allocation3 + $0x40] sm:$0xff]
    %v375 = vld [vmem:[#allocation3 + $0x48] sm:$0xff]
    %v376 = vld [vmem:[#allocation3 + $0x50] sm:$0xff]
    %v377 = vld [vmem:[#allocation3 + $0x58] sm:$0xff]
    %v378 = vld [vmem:[#allocation3 + $0x60] sm:$0xff]
    %v379 = vld [vmem:[#allocation3 + $0x68] sm:$0xff]
    %v380 = vld [vmem:[#allocation3 + $0x70] sm:$0xff]
    %v381 = vld [vmem:[#allocation3 + $0x78] sm:$0xff]
    %v382 = vld [vmem:[#allocation3 + $0x80] sm:$0xff]
    %v383 = vld [vmem:[#allocation3 + $0x88] sm:$0xff]
    %v384 = vld [vmem:[#allocation3 + $0x90] sm:$0xff]
    %v385 = vld [vmem:[#allocation3 + $0x98] sm:$0xff]
    %v386 = vld [vmem:[#allocation3 + $0xa0] sm:$0xff]
    %v387 = vld [vmem:[#allocation3 + $0xa8] sm:$0xff]
    %v388 = vld [vmem:[#allocation3 + $0xb0] sm:$0xff]
    %v389 = vld [vmem:[#allocation3 + $0xb8] sm:$0xff]
    %v390 = vld [vmem:[#allocation3 + $0xc0] sm:$0xff]
    %v391 = vld [vmem:[#allocation3 + $0xc8] sm:$0xff]
    %v392 = vld [vmem:[#allocation3 + $0xd0] sm:$0xff]
    %v393 = vld [vmem:[#allocation3 + $0xd8] sm:$0xff]
    %v394 = vld [vmem:[#allocation3 + $0xe0] sm:$0xff]
    %v395 = vld [vmem:[#allocation3 + $0xe8] sm:$0xff]
    %v396 = vld [vmem:[#allocation3 + $0xf0] sm:$0xff]
    %v397 = vld [vmem:[#allocation3 + $0xf8] sm:$0xff]
    %v398 = vld [vmem:[#allocation3 + $0x100] sm:$0xff]
    %v399 = vld [vmem:[#allocation3 + $0x108] sm:$0xff]
    %v400 = vld [vmem:[#allocation3 + $0x110] sm:$0xff]
    %v401 = vld [vmem:[#allocation3 + $0x118] sm:$0xff]
    %v402 = vld [vmem:[#allocation3 + $0x120] sm:$0xff]
    %v403 = vld [vmem:[#allocation3 + $0x128] sm:$0xff]
    %v404 = vld [vmem:[#allocation3 + $0x130] sm:$0xff]
    %v405 = vld [vmem:[#allocation3 + $0x138] sm:$0xff]
    %v406 = vld [vmem:[#allocation3 + $0x140] sm:$0xff]
    %v407 = vld [vmem:[#allocation3 + $0x148] sm:$0xff]
    %v408 = vld [vmem:[#allocation3 + $0x150] sm:$0xff]
    %v409 = vld [vmem:[#allocation3 + $0x158] sm:$0xff]
    %v410 = vld [vmem:[#allocation3 + $0x160] sm:$0xff]
    %v411 = vld [vmem:[#allocation3 + $0x168] sm:$0xff]
    %v412 = vld [vmem:[#allocation3 + $0x170] sm:$0xff]
    %v413 = vld [vmem:[#allocation3 + $0x178] sm:$0xff]
    %v414 = vld [vmem:[#allocation3 + $0x180] sm:$0xff]
    %v415 = vld [vmem:[#allocation3 + $0x188] sm:$0xff]
    %v416 = vld [vmem:[#allocation3 + $0x190] sm:$0xff]
    %v417 = vld [vmem:[#allocation3 + $0x198] sm:$0xff]
    %v418 = vld [vmem:[#allocation3 + $0x1a0] sm:$0xff]
    %v419 = vld [vmem:[#allocation3 + $0x1a8] sm:$0xff]
    %v420 = vld [vmem:[#allocation3 + $0x1b0] sm:$0xff]
    %v421 = vld [vmem:[#allocation3 + $0x1b8] sm:$0xff]
    %v422 = vld [vmem:[#allocation3 + $0x1c0] sm:$0xff]
    %v423 = vld [vmem:[#allocation3 + $0x1c8] sm:$0xff]
    %v424 = vld [vmem:[#allocation3 + $0x1d0] sm:$0xff]
    %v425 = vld [vmem:[#allocation3 + $0x1d8] sm:$0xff]
    %v426 = vld [vmem:[#allocation3 + $0x1e0] sm:$0xff]
    %v427 = vld [vmem:[#allocation3 + $0x1e8] sm:$0xff]
    %v428 = vld [vmem:[#allocation3 + $0x1f0] sm:$0xff]
    %v429 = vld [vmem:[#allocation3 + $0x1f8] sm:$0xff]
    %v430 = vld [vmem:[#allocation3 + $0x200] sm:$0xff]
    %v431 = vld [vmem:[#allocation3 + $0x208] sm:$0xff]
    %v432 = vld [vmem:[#allocation3 + $0x210] sm:$0xff]
    %v433 = vld [vmem:[#allocation3 + $0x218] sm:$0xff]
    %v434 = vld [vmem:[#allocation3 + $0x220] sm:$0xff]
    %v435 = vld [vmem:[#allocation3 + $0x228] sm:$0xff]
    %v436 = vld [vmem:[#allocation3 + $0x230] sm:$0xff]
    %v437 = vld [vmem:[#allocation3 + $0x238] sm:$0xff]
    %v438 = vld [vmem:[#allocation3 + $0x240] sm:$0xff]
    %v439 = vld [vmem:[#allocation3 + $0x248] sm:$0xff]
    %v440 = vld [vmem:[#allocation3 + $0x250] sm:$0xff]
    %v441 = vld [vmem:[#allocation3 + $0x258] sm:$0xff]
    %v442 = vld [vmem:[#allocation3 + $0x260] sm:$0xff]
    %v443 = vld [vmem:[#allocation3 + $0x268] sm:$0xff]
    %v444 = vld [vmem:[#allocation3 + $0x270] sm:$0xff]
    %v445 = vld [vmem:[#allocation3 + $0x278] sm:$0xff]
    %v446 = vld [vmem:[#allocation3 + $0x280] sm:$0xff]
    %v447 = vld [vmem:[#allocation3 + $0x288] sm:$0xff]
    %v448 = vld [vmem:[#allocation3 + $0x290] sm:$0xff]
    %v449 = vld [vmem:[#allocation3 + $0x298] sm:$0xff]
    %v450 = vld [vmem:[#allocation3 + $0x2a0] sm:$0xff]
    %v451 = vld [vmem:[#allocation3 + $0x2a8] sm:$0xff]
    %v452 = vld [vmem:[#allocation3 + $0x2b0] sm:$0xff]
    %v453 = vld [vmem:[#allocation3 + $0x2b8] sm:$0xff]
    %v454 = vld [vmem:[#allocation3 + $0x2c0] sm:$0xff]
    %v455 = vld [vmem:[#allocation3 + $0x2c8] sm:$0xff]
    %v456 = vld [vmem:[#allocation3 + $0x2d0] sm:$0xff]
    %v457 = vld [vmem:[#allocation3 + $0x2d8] sm:$0xff]
    %v458 = vld [vmem:[#allocation3 + $0x2e0] sm:$0xff]
    %v459 = vld [vmem:[#allocation3 + $0x2e8] sm:$0xff]
    %v460 = vld [vmem:[#allocation3 + $0x2f0] sm:$0xff]
    %v461 = vld [vmem:[#allocation3 + $0x2f8] sm:$0xff]
    %v462 = vld [vmem:[#allocation3 + $0x300] sm:$0xff]
    %v463 = vld [vmem:[#allocation3 + $0x308] sm:$0xff]
    %v464 = vld [vmem:[#allocation3 + $0x310] sm:$0xff]
    %v465 = vld [vmem:[#allocation3 + $0x318] sm:$0xff]
    %v466 = vld [vmem:[#allocation3 + $0x320] sm:$0xff]
    %v467 = vld [vmem:[#allocation3 + $0x328] sm:$0xff]
    %v468 = vld [vmem:[#allocation3 + $0x330] sm:$0xff]
    %v469 = vld [vmem:[#allocation3 + $0x338] sm:$0xff]
    %v470 = vld [vmem:[#allocation3 + $0x340] sm:$0xff]
    %v471 = vld [vmem:[#allocation3 + $0x348] sm:$0xff]
    %v472 = vld [vmem:[#allocation3 + $0x350] sm:$0xff]
    %v473 = vld [vmem:[#allocation3 + $0x358] sm:$0xff]
    %v474 = vld [vmem:[#allocation3 + $0x360] sm:$0xff]
    %v475 = vld [vmem:[#allocation3 + $0x368] sm:$0xff]
    %v476 = vld [vmem:[#allocation3 + $0x370] sm:$0xff]
    %v477 = vld [vmem:[#allocation3 + $0x378] sm:$0xff]
    %v478 = vld [vmem:[#allocation3 + $0x380] sm:$0xff]
    %v479 = vld [vmem:[#allocation3 + $0x388] sm:$0xff]
    %v480 = vld [vmem:[#allocation3 + $0x390] sm:$0xff]
    %v481 = vld [vmem:[#allocation3 + $0x398] sm:$0xff]
    %v482 = vld [vmem:[#allocation3 + $0x3a0] sm:$0xff]
    %v483 = vld [vmem:[#allocation3 + $0x3a8] sm:$0xff]
    %v484 = vld [vmem:[#allocation3 + $0x3b0] sm:$0xff]
    %v485 = vld [vmem:[#allocation3 + $0x3b8] sm:$0xff]
    %v486 = vld [vmem:[#allocation3 + $0x3c0] sm:$0xff]
    %v487 = vld [vmem:[#allocation3 + $0x3c8] sm:$0xff]
    %v488 = vld [vmem:[#allocation3 + $0x3d0] sm:$0xff]
    %v489 = vld [vmem:[#allocation3 + $0x3d8] sm:$0xff]
    %v490 = vld [vmem:[#allocation3 + $0x3e0] sm:$0xff]
    %v491 = vld [vmem:[#allocation3 + $0x3e8] sm:$0xff]
    %v492 = vld [vmem:[#allocation3 + $0x3f0] sm:$0xff]
    %v493 = vld [vmem:[#allocation3 + $0x3f8] sm:$0xff]
    %v494 = vld [vmem:[#allocation3 + $0x400] sm:$0xff]
    %v495 = vld [vmem:[#allocation3 + $0x408] sm:$0xff]
    %v496 = vld [vmem:[#allocation3 + $0x410] sm:$0xff]
    %v497 = vld [vmem:[#allocation3 + $0x418] sm:$0xff]
    %v498 = vld [vmem:[#allocation3 + $0x420] sm:$0xff]
    %v499 = vld [vmem:[#allocation3 + $0x428] sm:$0xff]
    %v500 = vld [vmem:[#allocation3 + $0x430] sm:$0xff]
    %v501 = vld [vmem:[#allocation3 + $0x438] sm:$0xff]
    %v502 = vld [vmem:[#allocation3 + $0x440] sm:$0xff]
    %v503 = vld [vmem:[#allocation3 + $0x448] sm:$0xff]
    %v504 = vld [vmem:[#allocation3 + $0x450] sm:$0xff]
    %v505 = vld [vmem:[#allocation3 + $0x458] sm:$0xff]
    %v506 = vld [vmem:[#allocation3 + $0x460] sm:$0xff]
    %v507 = vld [vmem:[#allocation3 + $0x468] sm:$0xff]
    %v508 = vld [vmem:[#allocation3 + $0x470] sm:$0xff]
    %v509 = vld [vmem:[#allocation3 + $0x478] sm:$0xff]
    %v510 = vld [vmem:[#allocation3 + $0x480] sm:$0xff]
    %v511 = vld [vmem:[#allocation3 + $0x488] sm:$0xff]
    %v512 = vld [vmem:[#allocation3 + $0x490] sm:$0xff]
    %v513 = vld [vmem:[#allocation3 + $0x498] sm:$0xff]
    %v514 = vld [vmem:[#allocation3 + $0x4a0] sm:$0xff]
    %v515 = vld [vmem:[#allocation3 + $0x4a8] sm:$0xff]
    %v516 = vld [vmem:[#allocation3 + $0x4b0] sm:$0xff]
    %v517 = vld [vmem:[#allocation3 + $0x4b8] sm:$0xff]
    %v518 = vld [vmem:[#allocation3 + $0x4c0] sm:$0xff]
    %v519 = vld [vmem:[#allocation3 + $0x4c8] sm:$0xff]
    %v520 = vld [vmem:[#allocation3 + $0x4d0] sm:$0xff]
    %v521 = vld [vmem:[#allocation3 + $0x4d8] sm:$0xff]
    %v522 = vld [vmem:[#allocation3 + $0x4e0] sm:$0xff]
    %v523 = vld [vmem:[#allocation3 + $0x4e8] sm:$0xff]
    %v524 = vld [vmem:[#allocation3 + $0x4f0] sm:$0xff]
    %v525 = vld [vmem:[#allocation3 + $0x4f8] sm:$0xff]
    %v526 = vld [vmem:[#allocation3 + $0x500] sm:$0xff]
    %v527 = vld [vmem:[#allocation3 + $0x508] sm:$0xff]
    %v528 = vld [vmem:[#allocation3 + $0x510] sm:$0xff]
    %v529 = vld [vmem:[#allocation3 + $0x518] sm:$0xff]
    %v530 = vld [vmem:[#allocation3 + $0x520] sm:$0xff]
    %v531 = vld [vmem:[#allocation3 + $0x528] sm:$0xff]
    %v532 = vld [vmem:[#allocation3 + $0x530] sm:$0xff]
    %v533 = vld [vmem:[#allocation3 + $0x538] sm:$0xff]
    %v534 = vld [vmem:[#allocation3 + $0x540] sm:$0xff]
    %v535 = vld [vmem:[#allocation3 + $0x548] sm:$0xff]
    %v536 = vld [vmem:[#allocation3 + $0x550] sm:$0xff]
    %v537 = vld [vmem:[#allocation3 + $0x558] sm:$0xff]
    %v538 = vld [vmem:[#allocation3 + $0x560] sm:$0xff]
    %v539 = vld [vmem:[#allocation3 + $0x568] sm:$0xff]
    %v540 = vld [vmem:[#allocation3 + $0x570] sm:$0xff]
    %v541 = vld [vmem:[#allocation3 + $0x578] sm:$0xff]
    %v542 = vld [vmem:[#allocation3 + $0x580] sm:$0xff]
    %v543 = vld [vmem:[#allocation3 + $0x588] sm:$0xff]
    %v544 = vld [vmem:[#allocation3 + $0x590] sm:$0xff]
    %v545 = vld [vmem:[#allocation3 + $0x598] sm:$0xff]
    %v546 = vld [vmem:[#allocation3 + $0x5a0] sm:$0xff]
    %v547 = vld [vmem:[#allocation3 + $0x5a8] sm:$0xff]
    %v548 = vld [vmem:[#allocation3 + $0x5b0] sm:$0xff]
    %v549 = vld [vmem:[#allocation3 + $0x5b8] sm:$0xff]
    %v550 = vld [vmem:[#allocation3 + $0x5c0] sm:$0xff]
    %v551 = vld [vmem:[#allocation3 + $0x5c8] sm:$0xff]
    %v552 = vld [vmem:[#allocation3 + $0x5d0] sm:$0xff]
    %v553 = vld [vmem:[#allocation3 + $0x5d8] sm:$0xff]
    %v554 = vld [vmem:[#allocation3 + $0x5e0] sm:$0xff]
    %v555 = vld [vmem:[#allocation3 + $0x5e8] sm:$0xff]
    %v556 = vld [vmem:[#allocation3 + $0x5f0] sm:$0xff]
    %v557 = vld [vmem:[#allocation3 + $0x5f8] sm:$0xff]
    %v558 = vld [vmem:[#allocation3 + $0x600] sm:$0xff]
    %v559 = vld [vmem:[#allocation3 + $0x608] sm:$0xff]
    %v560 = vld [vmem:[#allocation3 + $0x610] sm:$0xff]
    %v561 = vld [vmem:[#allocation3 + $0x618] sm:$0xff]
    %v562 = vld [vmem:[#allocation3 + $0x620] sm:$0xff]
    %v563 = vld [vmem:[#allocation3 + $0x628] sm:$0xff]
    %v564 = vld [vmem:[#allocation3 + $0x630] sm:$0xff]
    %v565 = vld [vmem:[#allocation3 + $0x638] sm:$0xff]
    %v566 = vld [vmem:[#allocation3 + $0x640] sm:$0xff]
    %v567 = vld [vmem:[#allocation3 + $0x648] sm:$0xff]
    %v568 = vld [vmem:[#allocation3 + $0x650] sm:$0xff]
    %v569 = vld [vmem:[#allocation3 + $0x658] sm:$0xff]
    %v570 = vld [vmem:[#allocation3 + $0x660] sm:$0xff]
    %v571 = vld [vmem:[#allocation3 + $0x668] sm:$0xff]
    %v572 = vld [vmem:[#allocation3 + $0x670] sm:$0xff]
    %v573 = vld [vmem:[#allocation3 + $0x678] sm:$0xff]
    %v574 = vld [vmem:[#allocation3 + $0x680] sm:$0xff]
    %v575 = vld [vmem:[#allocation3 + $0x688] sm:$0xff]
    %v576 = vld [vmem:[#allocation3 + $0x690] sm:$0xff]
    %v577 = vld [vmem:[#allocation3 + $0x698] sm:$0xff]
    %v578 = vld [vmem:[#allocation3 + $0x6a0] sm:$0xff]
    %v579 = vld [vmem:[#allocation3 + $0x6a8] sm:$0xff]
    %v580 = vld [vmem:[#allocation3 + $0x6b0] sm:$0xff]
    %v581 = vld [vmem:[#allocation3 + $0x6b8] sm:$0xff]
    %v582 = vld [vmem:[#allocation3 + $0x6c0] sm:$0xff]
    %v583 = vld [vmem:[#allocation3 + $0x6c8] sm:$0xff]
    %v584 = vld [vmem:[#allocation3 + $0x6d0] sm:$0xff]
    %v585 = vld [vmem:[#allocation3 + $0x6d8] sm:$0xff]
    %v586 = vld [vmem:[#allocation3 + $0x6e0] sm:$0xff]
    %v587 = vld [vmem:[#allocation3 + $0x6e8] sm:$0xff]
    %v588 = vld [vmem:[#allocation3 + $0x6f0] sm:$0xff]
    %v589 = vld [vmem:[#allocation3 + $0x6f8] sm:$0xff]
    %v590 = vld [vmem:[#allocation3 + $0x700] sm:$0xff]
    %v591 = vld [vmem:[#allocation3 + $0x708] sm:$0xff]
    %v592 = vld [vmem:[#allocation3 + $0x710] sm:$0xff]
    %v593 = vld [vmem:[#allocation3 + $0x718] sm:$0xff]
    %v594 = vld [vmem:[#allocation3 + $0x720] sm:$0xff]
    %v595 = vld [vmem:[#allocation3 + $0x728] sm:$0xff]
    %v596 = vld [vmem:[#allocation3 + $0x730] sm:$0xff]
    %v597 = vld [vmem:[#allocation3 + $0x738] sm:$0xff]
    %v598 = vld [vmem:[#allocation3 + $0x740] sm:$0xff]
    %v599 = vld [vmem:[#allocation3 + $0x748] sm:$0xff]
    %v600 = vld [vmem:[#allocation3 + $0x750] sm:$0xff]
    %v601 = vld [vmem:[#allocation3 + $0x758] sm:$0xff]
    %v602 = vld [vmem:[#allocation3 + $0x760] sm:$0xff]
    %v603 = vld [vmem:[#allocation3 + $0x768] sm:$0xff]
    %v604 = vld [vmem:[#allocation3 + $0x770] sm:$0xff]
    %v605 = vld [vmem:[#allocation3 + $0x778] sm:$0xff]
    %v606 = vld [vmem:[#allocation3 + $0x780] sm:$0xff]
    %v607 = vld [vmem:[#allocation3 + $0x788] sm:$0xff]
    %v608 = vld [vmem:[#allocation3 + $0x790] sm:$0xff]
    %v609 = vld [vmem:[#allocation3 + $0x798] sm:$0xff]
    %v610 = vld [vmem:[#allocation3 + $0x7a0] sm:$0xff]
    %v611 = vld [vmem:[#allocation3 + $0x7a8] sm:$0xff]
    %v612 = vld [vmem:[#allocation3 + $0x7b0] sm:$0xff]
    %v613 = vld [vmem:[#allocation3 + $0x7b8] sm:$0xff]
    %v614 = vld [vmem:[#allocation3 + $0x7c0] sm:$0xff]
    %v615 = vld [vmem:[#allocation3 + $0x7c8] sm:$0xff]
    %v616 = vld [vmem:[#allocation3 + $0x7d0] sm:$0xff]
    %v617 = vld [vmem:[#allocation3 + $0x7d8] sm:$0xff]
    %v618 = vld [vmem:[#allocation3 + $0x7e0] sm:$0xff]
    %v619 = vld [vmem:[#allocation3 + $0x7e8] sm:$0xff]
    %v620 = vld [vmem:[#allocation3 + $0x7f0] sm:$0xff]
    %v621 = vld [vmem:[#allocation3 + $0x7f8] sm:$0xff]
    %v622 = vld [vmem:[#allocation3 + $0x800] sm:$0xff]
    %v623 = vld [vmem:[#allocation3 + $0x808] sm:$0xff]
    %v624 = vld [vmem:[#allocation3 + $0x810] sm:$0xff]
    %v625 = vld [vmem:[#allocation3 + $0x818] sm:$0xff]
    %v626 = vld [vmem:[#allocation3 + $0x820] sm:$0xff]
    %v627 = vld [vmem:[#allocation3 + $0x828] sm:$0xff]
    %v628 = vld [vmem:[#allocation3 + $0x830] sm:$0xff]
    %v629 = vld [vmem:[#allocation3 + $0x838] sm:$0xff]
    %v630 = vld [vmem:[#allocation3 + $0x840] sm:$0xff]
    %v631 = vld [vmem:[#allocation3 + $0x848] sm:$0xff]
    %v632 = vld [vmem:[#allocation3 + $0x850] sm:$0xff]
    %v633 = vld [vmem:[#allocation3 + $0x858] sm:$0xff]
    %v634 = vld [vmem:[#allocation3 + $0x860] sm:$0xff]
    %v635 = vld [vmem:[#allocation3 + $0x868] sm:$0xff]
    %v636 = vld [vmem:[#allocation3 + $0x870] sm:$0xff]
    %v637 = vld [vmem:[#allocation3 + $0x878] sm:$0xff]
    %v638 = vld [vmem:[#allocation3 + $0x880] sm:$0xff]
    %v639 = vld [vmem:[#allocation3 + $0x888] sm:$0xff]
    %v640 = vld [vmem:[#allocation3 + $0x890] sm:$0xff]
    %v641 = vld [vmem:[#allocation3 + $0x898] sm:$0xff]
    %v642 = vld [vmem:[#allocation3 + $0x8a0] sm:$0xff]
    %v643 = vld [vmem:[#allocation3 + $0x8a8] sm:$0xff]
    %v644 = vld [vmem:[#allocation3 + $0x8b0] sm:$0xff]
    %v645 = vld [vmem:[#allocation3 + $0x8b8] sm:$0xff]
    %v646 = vld [vmem:[#allocation3 + $0x8c0] sm:$0xff]
    %v647 = vld [vmem:[#allocation3 + $0x8c8] sm:$0xff]
    %v648 = vld [vmem:[#allocation3 + $0x8d0] sm:$0xff]
    %v649 = vld [vmem:[#allocation3 + $0x8d8] sm:$0xff]
    %v650 = vld [vmem:[#allocation3 + $0x8e0] sm:$0xff]
    %v651 = vld [vmem:[#allocation3 + $0x8e8] sm:$0xff]
    %v652 = vld [vmem:[#allocation3 + $0x8f0] sm:$0xff]
    %v653 = vld [vmem:[#allocation3 + $0x8f8] sm:$0xff]
    %v654 = vld [vmem:[#allocation3 + $0x900] sm:$0xff]
    %v655 = vld [vmem:[#allocation3 + $0x908] sm:$0xff]
    %v656 = vld [vmem:[#allocation3 + $0x910] sm:$0xff]
    %v657 = vld [vmem:[#allocation3 + $0x918] sm:$0xff]
    %v658 = vld [vmem:[#allocation3 + $0x920] sm:$0xff]
    %v659 = vld [vmem:[#allocation3 + $0x928] sm:$0xff]
    %v660 = vld [vmem:[#allocation3 + $0x930] sm:$0xff]
    %v661 = vld [vmem:[#allocation3 + $0x938] sm:$0xff]
    %v662 = vld [vmem:[#allocation3 + $0x940] sm:$0xff]
    %v663 = vld [vmem:[#allocation3 + $0x948] sm:$0xff]
    %v664 = vld [vmem:[#allocation3 + $0x950] sm:$0xff]
    %v665 = vld [vmem:[#allocation3 + $0x958] sm:$0xff]
    %v666 = vld [vmem:[#allocation3 + $0x960] sm:$0xff]
    %v667 = vld [vmem:[#allocation3 + $0x968] sm:$0xff]
    %v668 = vld [vmem:[#allocation3 + $0x970] sm:$0xff]
    %v669 = vld [vmem:[#allocation3 + $0x978] sm:$0xff]
    %v670 = vld [vmem:[#allocation3 + $0x980] sm:$0xff]
    %v671 = vld [vmem:[#allocation3 + $0x988] sm:$0xff]
    %v672 = vld [vmem:[#allocation3 + $0x990] sm:$0xff]
    %v673 = vld [vmem:[#allocation3 + $0x998] sm:$0xff]
    %v674 = vld [vmem:[#allocation3 + $0x9a0] sm:$0xff]
    %v675 = vld [vmem:[#allocation3 + $0x9a8] sm:$0xff]
    %v676 = vld [vmem:[#allocation3 + $0x9b0] sm:$0xff]
    %v677 = vld [vmem:[#allocation3 + $0x9b8] sm:$0xff]
    %v678 = vld [vmem:[#allocation3 + $0x9c0] sm:$0xff]
    %v679 = vld [vmem:[#allocation3 + $0x9c8] sm:$0xff]
    %v680 = vld [vmem:[#allocation3 + $0x9d0] sm:$0xff]
    %v681 = vld [vmem:[#allocation3 + $0x9d8] sm:$0xff]
    %v682 = vld [vmem:[#allocation3 + $0x9e0] sm:$0xff]
    %v683 = vld [vmem:[#allocation3 + $0x9e8] sm:$0xff]
    %v684 = vld [vmem:[#allocation3 + $0x9f0] sm:$0xff]
    %v685 = vld [vmem:[#allocation3 + $0x9f8] sm:$0xff]
    %v686 = vld [vmem:[#allocation3 + $0xa00] sm:$0xff]
    %v687 = vld [vmem:[#allocation3 + $0xa08] sm:$0xff]
    %v688 = vld [vmem:[#allocation3 + $0xa10] sm:$0xff]
    %v689 = vld [vmem:[#allocation3 + $0xa18] sm:$0xff]
    %v690 = vld [vmem:[#allocation3 + $0xa20] sm:$0xff]
    %v691 = vld [vmem:[#allocation3 + $0xa28] sm:$0xff]
    %v692 = vld [vmem:[#allocation3 + $0xa30] sm:$0xff]
    %v693 = vld [vmem:[#allocation3 + $0xa38] sm:$0xff]
    %v694 = vld [vmem:[#allocation3 + $0xa40] sm:$0xff]
    %v695 = vld [vmem:[#allocation3 + $0xa48] sm:$0xff]
    %v696 = vld [vmem:[#allocation3 + $0xa50] sm:$0xff]
    %v697 = vld [vmem:[#allocation3 + $0xa58] sm:$0xff]
    %v698 = vld [vmem:[#allocation3 + $0xa60] sm:$0xff]
    %v699 = vld [vmem:[#allocation3 + $0xa68] sm:$0xff]
    %v700 = vld [vmem:[#allocation3 + $0xa70] sm:$0xff]
    %v701 = vld [vmem:[#allocation3 + $0xa78] sm:$0xff]
    %v702 = vld [vmem:[#allocation3 + $0xa80] sm:$0xff]
    %v703 = vld [vmem:[#allocation3 + $0xa88] sm:$0xff]
    %v704 = vld [vmem:[#allocation3 + $0xa90] sm:$0xff]
    %v705 = vld [vmem:[#allocation3 + $0xa98] sm:$0xff]
    %v706 = vld [vmem:[#allocation3 + $0xaa0] sm:$0xff]
    %v707 = vld [vmem:[#allocation3 + $0xaa8] sm:$0xff]
    %v708 = vld [vmem:[#allocation3 + $0xab0] sm:$0xff]
    %v709 = vld [vmem:[#allocation3 + $0xab8] sm:$0xff]
    %v710 = vld [vmem:[#allocation3 + $0xac0] sm:$0xff]
    %v711 = vld [vmem:[#allocation3 + $0xac8] sm:$0xff]
    %v712 = vld [vmem:[#allocation3 + $0xad0] sm:$0xff]
    %v713 = vld [vmem:[#allocation3 + $0xad8] sm:$0xff]
    %v714 = vld [vmem:[#allocation3 + $0xae0] sm:$0xff]
    %v715 = vld [vmem:[#allocation3 + $0xae8] sm:$0xff]
    %v716 = vld [vmem:[#allocation3 + $0xaf0] sm:$0xff]
    %v717 = vld [vmem:[#allocation3 + $0xaf8] sm:$0xff]
    %v718 = vld [vmem:[#allocation3 + $0xb00] sm:$0xff]
    %v719 = vld [vmem:[#allocation3 + $0xb08] sm:$0xff]
    %v720 = vld [vmem:[#allocation3 + $0xb10] sm:$0xff]
    %v721 = vld [vmem:[#allocation3 + $0xb18] sm:$0xff]
    %v722 = vld [vmem:[#allocation3 + $0xb20] sm:$0xff]
    %v723 = vld [vmem:[#allocation3 + $0xb28] sm:$0xff]
    %v724 = vld [vmem:[#allocation3 + $0xb30] sm:$0xff]
    %v725 = vld [vmem:[#allocation3 + $0xb38] sm:$0xff]
    %v726 = vld [vmem:[#allocation3 + $0xb40] sm:$0xff]
    %v727 = vld [vmem:[#allocation3 + $0xb48] sm:$0xff]
    %v728 = vld [vmem:[#allocation3 + $0xb50] sm:$0xff]
    %v729 = vld [vmem:[#allocation3 + $0xb58] sm:$0xff]
    %v730 = vld [vmem:[#allocation3 + $0xb60] sm:$0xff]
    %v731 = vld [vmem:[#allocation3 + $0xb68] sm:$0xff]
    %v732 = vld [vmem:[#allocation3 + $0xb70] sm:$0xff]
    %v733 = vld [vmem:[#allocation3 + $0xb78] sm:$0xff]
    %v734 = vld [vmem:[#allocation3 + $0xb80] sm:$0xff]
    %v735 = vld [vmem:[#allocation3 + $0xb88] sm:$0xff]
    %v736 = vld [vmem:[#allocation3 + $0xb90] sm:$0xff]
    %v737 = vld [vmem:[#allocation3 + $0xb98] sm:$0xff]
    %v738 = vld [vmem:[#allocation3 + $0xba0] sm:$0xff]
    %v739 = vld [vmem:[#allocation3 + $0xba8] sm:$0xff]
    %v740 = vld [vmem:[#allocation3 + $0xbb0] sm:$0xff]
    %v741 = vld [vmem:[#allocation3 + $0xbb8] sm:$0xff]
    %v742 = vld [vmem:[#allocation3 + $0xbc0] sm:$0xff]
    %v743 = vld [vmem:[#allocation3 + $0xbc8] sm:$0xff]
    %v744 = vld [vmem:[#allocation3 + $0xbd0] sm:$0xff]
    %v745 = vld [vmem:[#allocation3 + $0xbd8] sm:$0xff]
    %v746 = vld [vmem:[#allocation3 + $0xbe0] sm:$0xff]
    %v747 = vld [vmem:[#allocation3 + $0xbe8] sm:$0xff]
    %v748 = vld [vmem:[#allocation3 + $0xbf0] sm:$0xff]
    %v749 = vld [vmem:[#allocation3 + $0xbf8] sm:$0xff]
    %v750 = vld [vmem:[#allocation3 + $0xc00] sm:$0xff]
    %v751 = vld [vmem:[#allocation3 + $0xc08] sm:$0xff]
    %v752 = vld [vmem:[#allocation3 + $0xc10] sm:$0xff]
    %v753 = vld [vmem:[#allocation3 + $0xc18] sm:$0xff]
    %v754 = vld [vmem:[#allocation3 + $0xc20] sm:$0xff]
    %v755 = vld [vmem:[#allocation3 + $0xc28] sm:$0xff]
    %v756 = vld [vmem:[#allocation3 + $0xc30] sm:$0xff]
    %v757 = vld [vmem:[#allocation3 + $0xc38] sm:$0xff]
    %v758 = vld [vmem:[#allocation3 + $0xc40] sm:$0xff]
    %v759 = vld [vmem:[#allocation3 + $0xc48] sm:$0xff]
    %v760 = vld [vmem:[#allocation3 + $0xc50] sm:$0xff]
    %v761 = vld [vmem:[#allocation3 + $0xc58] sm:$0xff]
    %v762 = vld [vmem:[#allocation3 + $0xc60] sm:$0xff]
    %v763 = vld [vmem:[#allocation3 + $0xc68] sm:$0xff]
    %v764 = vld [vmem:[#allocation3 + $0xc70] sm:$0xff]
    %v765 = vld [vmem:[#allocation3 + $0xc78] sm:$0xff]
    %v766 = vld [vmem:[#allocation3 + $0xc80] sm:$0xff]
    %v767 = vld [vmem:[#allocation3 + $0xc88] sm:$0xff]
    %v768 = vld [vmem:[#allocation3 + $0xc90] sm:$0xff]
    %v769 = vld [vmem:[#allocation3 + $0xc98] sm:$0xff]
    %v770 = vld [vmem:[#allocation3 + $0xca0] sm:$0xff]
    %v771 = vld [vmem:[#allocation3 + $0xca8] sm:$0xff]
    %v772 = vld [vmem:[#allocation3 + $0xcb0] sm:$0xff]
    %v773 = vld [vmem:[#allocation3 + $0xcb8] sm:$0xff]
    %v774 = vld [vmem:[#allocation3 + $0xcc0] sm:$0xff]
    %v775 = vld [vmem:[#allocation3 + $0xcc8] sm:$0xff]
    %v776 = vld [vmem:[#allocation3 + $0xcd0] sm:$0xff]
    %v777 = vld [vmem:[#allocation3 + $0xcd8] sm:$0xff]
    %v778 = vld [vmem:[#allocation3 + $0xce0] sm:$0xff]
    %v779 = vld [vmem:[#allocation3 + $0xce8] sm:$0xff]
    %v780 = vld [vmem:[#allocation3 + $0xcf0] sm:$0xff]
    %v781 = vld [vmem:[#allocation3 + $0xcf8] sm:$0xff]
    %v782 = vld [vmem:[#allocation3 + $0xd00] sm:$0xff]
    %v783 = vld [vmem:[#allocation3 + $0xd08] sm:$0xff]
    %v784 = vld [vmem:[#allocation3 + $0xd10] sm:$0xff]
    %v785 = vld [vmem:[#allocation3 + $0xd18] sm:$0xff]
    %v786 = vld [vmem:[#allocation3 + $0xd20] sm:$0xff]
    %v787 = vld [vmem:[#allocation3 + $0xd28] sm:$0xff]
    %v788 = vld [vmem:[#allocation3 + $0xd30] sm:$0xff]
    %v789 = vld [vmem:[#allocation3 + $0xd38] sm:$0xff]
    %v790 = vld [vmem:[#allocation3 + $0xd40] sm:$0xff]
    %v791 = vld [vmem:[#allocation3 + $0xd48] sm:$0xff]
    %v792 = vld [vmem:[#allocation3 + $0xd50] sm:$0xff]
    %v793 = vld [vmem:[#allocation3 + $0xd58] sm:$0xff]
    %v794 = vld [vmem:[#allocation3 + $0xd60] sm:$0xff]
    %v795 = vld [vmem:[#allocation3 + $0xd68] sm:$0xff]
    %v796 = vld [vmem:[#allocation3 + $0xd70] sm:$0xff]
    %v797 = vld [vmem:[#allocation3 + $0xd78] sm:$0xff]
    %v798 = vld [vmem:[#allocation3 + $0xd80] sm:$0xff]
    %v799 = vld [vmem:[#allocation3 + $0xd88] sm:$0xff]
    %v800 = vld [vmem:[#allocation3 + $0xd90] sm:$0xff]
    %v801 = vld [vmem:[#allocation3 + $0xd98] sm:$0xff]
    %v802 = vld [vmem:[#allocation3 + $0xda0] sm:$0xff]
    %v803 = vld [vmem:[#allocation3 + $0xda8] sm:$0xff]
    %v804 = vld [vmem:[#allocation3 + $0xdb0] sm:$0xff]
    %v805 = vld [vmem:[#allocation3 + $0xdb8] sm:$0xff]
    %v806 = vld [vmem:[#allocation3 + $0xdc0] sm:$0xff]
    %v807 = vld [vmem:[#allocation3 + $0xdc8] sm:$0xff]
    %v808 = vld [vmem:[#allocation3 + $0xdd0] sm:$0xff]
    %v809 = vld [vmem:[#allocation3 + $0xdd8] sm:$0xff]
    %v810 = vld [vmem:[#allocation3 + $0xde0] sm:$0xff]
    %v811 = vld [vmem:[#allocation3 + $0xde8] sm:$0xff]
    %v812 = vld [vmem:[#allocation3 + $0xdf0] sm:$0xff]
    %v813 = vld [vmem:[#allocation3 + $0xdf8] sm:$0xff]
    %v814 = vld [vmem:[#allocation3 + $0xe00] sm:$0xff]
    %v815 = vld [vmem:[#allocation3 + $0xe08] sm:$0xff]
    %v816 = vld [vmem:[#allocation3 + $0xe10] sm:$0xff]
    %v817 = vld [vmem:[#allocation3 + $0xe18] sm:$0xff]
    %v818 = vld [vmem:[#allocation3 + $0xe20] sm:$0xff]
    %v819 = vld [vmem:[#allocation3 + $0xe28] sm:$0xff]
    %v820 = vld [vmem:[#allocation3 + $0xe30] sm:$0xff]
    %v821 = vld [vmem:[#allocation3 + $0xe38] sm:$0xff]
    %v822 = vld [vmem:[#allocation3 + $0xe40] sm:$0xff]
    %v823 = vld [vmem:[#allocation3 + $0xe48] sm:$0xff]
    %v824 = vld [vmem:[#allocation3 + $0xe50] sm:$0xff]
    %v825 = vld [vmem:[#allocation3 + $0xe58] sm:$0xff]
    %v826 = vld [vmem:[#allocation3 + $0xe60] sm:$0xff]
    %v827 = vld [vmem:[#allocation3 + $0xe68] sm:$0xff]
    %v828 = vld [vmem:[#allocation3 + $0xe70] sm:$0xff]
    %v829 = vld [vmem:[#allocation3 + $0xe78] sm:$0xff]
    %v830 = vld [vmem:[#allocation3 + $0xe80] sm:$0xff]
    %v831 = vld [vmem:[#allocation3 + $0xe88] sm:$0xff]
    %v832 = vld [vmem:[#allocation3 + $0xe90] sm:$0xff]
    %v833 = vld [vmem:[#allocation3 + $0xe98] sm:$0xff]
    %v834 = vld [vmem:[#allocation3 + $0xea0] sm:$0xff]
    %v835 = vld [vmem:[#allocation3 + $0xea8] sm:$0xff]
    %v836 = vld [vmem:[#allocation3 + $0xeb0] sm:$0xff]
    %v837 = vld [vmem:[#allocation3 + $0xeb8] sm:$0xff]
    %v838 = vld [vmem:[#allocation3 + $0xec0] sm:$0xff]
    %v839 = vld [vmem:[#allocation3 + $0xec8] sm:$0xff]
    %v840 = vld [vmem:[#allocation3 + $0xed0] sm:$0xff]
    %v841 = vld [vmem:[#allocation3 + $0xed8] sm:$0xff]
    %v842 = vld [vmem:[#allocation3 + $0xee0] sm:$0xff]
    %v843 = vld [vmem:[#allocation3 + $0xee8] sm:$0xff]
    %v844 = vld [vmem:[#allocation3 + $0xef0] sm:$0xff]
    %v845 = vld [vmem:[#allocation3 + $0xef8] sm:$0xff]
    %v846 = vld [vmem:[#allocation3 + $0xf00] sm:$0xff]
    %v847 = vld [vmem:[#allocation3 + $0xf08] sm:$0xff]
    %v848 = vld [vmem:[#allocation3 + $0xf10] sm:$0xff]
    %v849 = vld [vmem:[#allocation3 + $0xf18] sm:$0xff]
    %v850 = vld [vmem:[#allocation3 + $0xf20] sm:$0xff]
    %v851 = vld [vmem:[#allocation3 + $0xf28] sm:$0xff]
    %v852 = vld [vmem:[#allocation3 + $0xf30] sm:$0xff]
    %v853 = vld [vmem:[#allocation3 + $0xf38] sm:$0xff]
    %v854 = vld [vmem:[#allocation3 + $0xf40] sm:$0xff]
    %v855 = vld [vmem:[#allocation3 + $0xf48] sm:$0xff]
    %v856 = vld [vmem:[#allocation3 + $0xf50] sm:$0xff]
    %v857 = vld [vmem:[#allocation3 + $0xf58] sm:$0xff]
    %v858 = vld [vmem:[#allocation3 + $0xf60] sm:$0xff]
    %v859 = vld [vmem:[#allocation3 + $0xf68] sm:$0xff]
    %v860 = vld [vmem:[#allocation3 + $0xf70] sm:$0xff]
    %v861 = vld [vmem:[#allocation3 + $0xf78] sm:$0xff]
    %v862 = vld [vmem:[#allocation3 + $0xf80] sm:$0xff]
    %v863 = vld [vmem:[#allocation3 + $0xf88] sm:$0xff]
    %v864 = vld [vmem:[#allocation3 + $0xf90] sm:$0xff]
    %v865 = vld [vmem:[#allocation3 + $0xf98] sm:$0xff]
    %v866 = vld [vmem:[#allocation3 + $0xfa0] sm:$0xff]
    %v867 = vld [vmem:[#allocation3 + $0xfa8] sm:$0xff]
    %v868 = vld [vmem:[#allocation3 + $0xfb0] sm:$0xff]
    %v869 = vld [vmem:[#allocation3 + $0xfb8] sm:$0xff]
    %v870 = vld [vmem:[#allocation3 + $0xfc0] sm:$0xff]
    %v871 = vld [vmem:[#allocation3 + $0xfc8] sm:$0xff]
    %v872 = vld [vmem:[#allocation3 + $0xfd0] sm:$0xff]
    %v873 = vld [vmem:[#allocation3 + $0xfd8] sm:$0xff]
    %v874 = vld [vmem:[#allocation3 + $0xfe0] sm:$0xff]
    %v875 = vld [vmem:[#allocation3 + $0xfe8] sm:$0xff]
    %v876 = vld [vmem:[#allocation3 + $0xff0] sm:$0xff]
    %v877 = vld [vmem:[#allocation3 + $0xff8] sm:$0xff]
    %v878 = vld [vmem:[#allocation5] sm:$0x3]
    %v880 = vlaneseq
    %v881 = vshrl.u32 %v880, 7
    %v882 = vsub.s32 0, %v881
    %v883 = vrot.slane %v878, %v882
    %v884 = vlaneseq
    %v885 = vshrl.u32 %v884, 7
    %v886 = vsub.s32 1, %v885
    %v887 = vrot.slane %v878, %v886
    %890 = vmatprep.subr.mxu0 %v367
    %891 = vmatpush1.msra.mxu0 %v366
    %892 = vmatprep.subr.mxu0 %v369
    %893 = vmatpush1.msra.mxu0 %v368
    %894 = vmatprep.subr.mxu0 %v371
    %895 = vmatpush1.msra.mxu0 %v370
    %896 = vmatprep.subr.mxu0 %v373
    %897 = vmatpush1.msra.mxu0 %v372
    %898 = vmatprep.subr.mxu0 %v375
    %899 = vmatpush1.msra.mxu0 %v374
    %900 = vmatprep.subr.mxu0 %v377
    %901 = vmatpush1.msra.mxu0 %v376
    %902 = vmatprep.subr.mxu0 %v379
    %903 = vmatpush1.msra.mxu0 %v378
    %904 = vmatprep.subr.mxu0 %v381
    %905 = vmatpush1.msra.mxu0 %v380
    %906 = vmatprep.subr.mxu0 %v383
    %907 = vmatpush1.msra.mxu0 %v382
    %908 = vmatprep.subr.mxu0 %v385
    %909 = vmatpush1.msra.mxu0 %v384
    %910 = vmatprep.subr.mxu0 %v387
    %911 = vmatpush1.msra.mxu0 %v386
    %912 = vmatprep.subr.mxu0 %v389
    %913 = vmatpush1.msra.mxu0 %v388
    %914 = vmatprep.subr.mxu0 %v391
    %915 = vmatpush1.msra.mxu0 %v390
    %916 = vmatprep.subr.mxu0 %v393
    %917 = vmatpush1.msra.mxu0 %v392
    %918 = vmatprep.subr.mxu0 %v395
    %919 = vmatpush1.msra.mxu0 %v394
    %920 = vmatprep.subr.mxu0 %v397
    %921 = vmatpush1.msra.mxu0 %v396
    %922 = vmatprep.subr.mxu0 %v399
    %923 = vmatpush1.msra.mxu0 %v398
    %924 = vmatprep.subr.mxu0 %v401
    %925 = vmatpush1.msra.mxu0 %v400
    %926 = vmatprep.subr.mxu0 %v403
    %927 = vmatpush1.msra.mxu0 %v402
    %928 = vmatprep.subr.mxu0 %v405
    %929 = vmatpush1.msra.mxu0 %v404
    %930 = vmatprep.subr.mxu0 %v407
    %931 = vmatpush1.msra.mxu0 %v406
    %932 = vmatprep.subr.mxu0 %v409
    %933 = vmatpush1.msra.mxu0 %v408
    %934 = vmatprep.subr.mxu0 %v411
    %935 = vmatpush1.msra.mxu0 %v410
    %936 = vmatprep.subr.mxu0 %v413
    %937 = vmatpush1.msra.mxu0 %v412
    %938 = vmatprep.subr.mxu0 %v415
    %939 = vmatpush1.msra.mxu0 %v414
    %940 = vmatprep.subr.mxu0 %v417
    %941 = vmatpush1.msra.mxu0 %v416
    %942 = vmatprep.subr.mxu0 %v419
    %943 = vmatpush1.msra.mxu0 %v418
    %944 = vmatprep.subr.mxu0 %v421
    %945 = vmatpush1.msra.mxu0 %v420
    %946 = vmatprep.subr.mxu0 %v423
    %947 = vmatpush1.msra.mxu0 %v422
    %948 = vmatprep.subr.mxu0 %v425
    %949 = vmatpush1.msra.mxu0 %v424
    %950 = vmatprep.subr.mxu0 %v427
    %951 = vmatpush1.msra.mxu0 %v426
    %952 = vmatprep.subr.mxu0 %v429
    %953 = vmatpush1.msra.mxu0 %v428
    %954 = vmatprep.mubr.f32.mxu0 %v111
    %955 = vmatmul.mubr.f32.gmra.mrb[0].mxu0 %v110
    %v956 = vpop.f32.mrb[0].mxu0
    %v957 = vadd.f32 %v883, %v956
    %v958 = vpop.f32.mrb[0].mxu0
    %v959 = vadd.f32 %v887, %v958
    %960 = vmatprep.mubr.f32.mxu0 %v127
    %961 = vmatmul.mubr.f32.gmra.mrb[0].mxu0 %v126
    %v962 = vpop.f32.mrb[0].mxu0
    %v963 = vadd.f32 %v883, %v962
    %v964 = vpop.f32.mrb[0].mxu0
    %v965 = vadd.f32 %v887, %v964
    %966 = vmatprep.mubr.f32.mxu0 %v143
    %967 = vmatmul.mubr.f32.gmra.mrb[0].mxu0 %v142
    %v968 = vpop.f32.mrb[0].mxu0
    %v969 = vadd.f32 %v883, %v968
    %v970 = vpop.f32.mrb[0].mxu0
    %v971 = vadd.f32 %v887, %v970
    %972 = vmatprep.mubr.f32.mxu0 %v159
    %973 = vmatmul.mubr.f32.gmra.mrb[0].mxu0 %v158
    %v974 = vpop.f32.mrb[0].mxu0
    %v975 = vadd.f32 %v883, %v974
    %v976 = vpop.f32.mrb[0].mxu0
    %v977 = vadd.f32 %v887, %v976
    %978 = vmatprep.mubr.f32.mxu0 %v175
    %979 = vmatmul.mubr.f32.gmra.mrb[0].mxu0 %v174
    %v980 = vpop.f32.mrb[0].mxu0
    %v981 = vadd.f32 %v883, %v980
    %v982 = vpop.f32.mrb[0].mxu0
    %v983 = vadd.f32 %v887, %v982
    %984 = vmatprep.mubr.f32.mxu0 %v191
    %985 = vmatmul.mubr.f32.gmra.mrb[0].mxu0 %v190
    %v986 = vpop.f32.mrb[0].mxu0
    %v987 = vadd.f32 %v883, %v986
    %v988 = vpop.f32.mrb[0].mxu0
    %v989 = vadd.f32 %v887, %v988
    %990 = vmatprep.mubr.f32.mxu0 %v207
    %991 = vmatmul.mubr.f32.gmra.mrb[0].mxu0 %v206
    %v992 = vpop.f32.mrb[0].mxu0
    %v993 = vadd.f32 %v883, %v992
    %v994 = vpop.f32.mrb[0].mxu0
    %v995 = vadd.f32 %v887, %v994
    %996 = vmatprep.mubr.f32.mxu0 %v223
    %997 = vmatmul.mubr.f32.gmra.mrb[0].mxu0 %v222
    %v998 = vpop.f32.mrb[0].mxu0
    %v999 = vadd.f32 %v883, %v998
    %v1000 = vpop.f32.mrb[0].mxu0
    %v1001 = vadd.f32 %v887, %v1000
    %1002 = vmatprep.mubr.f32.mxu0 %v239
    %1003 = vmatmul.mubr.f32.gmra.mrb[0].mxu0 %v238
    %v1004 = vpop.f32.mrb[0].mxu0
    %v1005 = vadd.f32 %v883, %v1004
    %v1006 = vpop.f32.mrb[0].mxu0
    %v1007 = vadd.f32 %v887, %v1006
    %1008 = vmatprep.mubr.f32.mxu0 %v255
    %1009 = vmatmul.mubr.f32.gmra.mrb[0].mxu0 %v254
    %v1010 = vpop.f32.mrb[0].mxu0
    %v1011 = vadd.f32 %v883, %v1010
    %v1012 = vpop.f32.mrb[0].mxu0
    %v1013 = vadd.f32 %v887, %v1012
    %1014 = vmatprep.mubr.f32.mxu0 %v271
    %1015 = vmatmul.mubr.f32.gmra.mrb[0].mxu0 %v270
    %v1016 = vpop.f32.mrb[0].mxu0
    %v1017 = vadd.f32 %v883, %v1016
    %v1018 = vpop.f32.mrb[0].mxu0
    %v1019 = vadd.f32 %v887, %v1018
    %1020 = vmatprep.mubr.f32.mxu0 %v287
    %1021 = vmatmul.mubr.f32.gmra.mrb[0].mxu0 %v286
    %v1022 = vpop.f32.mrb[0].mxu0
    %v1023 = vadd.f32 %v883, %v1022
    %v1024 = vpop.f32.mrb[0].mxu0
    %v1025 = vadd.f32 %v887, %v1024
    %1026 = vmatprep.mubr.f32.mxu0 %v303
    %1027 = vmatmul.mubr.f32.gmra.mrb[0].mxu0 %v302
    %v1028 = vpop.f32.mrb[0].mxu0
    %v1029 = vadd.f32 %v883, %v1028
    %v1030 = vpop.f32.mrb[0].mxu0
    %v1031 = vadd.f32 %v887, %v1030
    %1032 = vmatprep.mubr.f32.mxu0 %v319
    %1033 = vmatmul.mubr.f32.gmra.mrb[0].mxu0 %v318
    %v1034 = vpop.f32.mrb[0].mxu0
    %v1035 = vadd.f32 %v883, %v1034
    %v1036 = vpop.f32.mrb[0].mxu0
    %v1037 = vadd.f32 %v887, %v1036
    %1038 = vmatprep.mubr.f32.mxu0 %v335
    %1039 = vmatmul.mubr.f32.gmra.mrb[0].mxu0 %v334
    %v1040 = vpop.f32.mrb[0].mxu0
    %v1041 = vadd.f32 %v883, %v1040
    %v1042 = vpop.f32.mrb[0].mxu0
    %v1043 = vadd.f32 %v887, %v1042
    %1044 = vmatprep.mubr.f32.mxu0 %v351
    %1045 = vmatmul.mubr.f32.gmra.mrb[0].mxu0 %v350
    %v1046 = vpop.f32.mrb[0].mxu0
    %v1047 = vadd.f32 %v883, %v1046
    %v1048 = vpop.f32.mrb[0].mxu0
    %v1049 = vadd.f32 %v887, %v1048
    %1050 = vdwg.mxu0
    %1051 = vmatprep.subr.mxu0 %v431
    %1052 = vmatpush1.msra.mxu0 %v430
    %1053 = vmatprep.subr.mxu0 %v433
    %1054 = vmatpush1.msra.mxu0 %v432
    %1055 = vmatprep.subr.mxu0 %v435
    %1056 = vmatpush1.msra.mxu0 %v434
    %1057 = vmatprep.subr.mxu0 %v437
    %1058 = vmatpush1.msra.mxu0 %v436
    %1059 = vmatprep.subr.mxu0 %v439
    %1060 = vmatpush1.msra.mxu0 %v438
    %1061 = vmatprep.subr.mxu0 %v441
    %1062 = vmatpush1.msra.mxu0 %v440
    %1063 = vmatprep.subr.mxu0 %v443
    %1064 = vmatpush1.msra.mxu0 %v442
    %1065 = vmatprep.subr.mxu0 %v445
    %1066 = vmatpush1.msra.mxu0 %v444
    %1067 = vmatprep.subr.mxu0 %v447
    %1068 = vmatpush1.msra.mxu0 %v446
    %1069 = vmatprep.subr.mxu0 %v449
    %1070 = vmatpush1.msra.mxu0 %v448
    %1071 = vmatprep.subr.mxu0 %v451
    %1072 = vmatpush1.msra.mxu0 %v450
    %1073 = vmatprep.subr.mxu0 %v453
    %1074 = vmatpush1.msra.mxu0 %v452
    %1075 = vmatprep.subr.mxu0 %v455
    %1076 = vmatpush1.msra.mxu0 %v454
    %1077 = vmatprep.subr.mxu0 %v457
    %1078 = vmatpush1.msra.mxu0 %v456
    %1079 = vmatprep.subr.mxu0 %v459
    %1080 = vmatpush1.msra.mxu0 %v458
    %1081 = vmatprep.subr.mxu0 %v461
    %1082 = vmatpush1.msra.mxu0 %v460
    %1083 = vmatprep.subr.mxu0 %v463
    %1084 = vmatpush1.msra.mxu0 %v462
    %1085 = vmatprep.subr.mxu0 %v465
    %1086 = vmatpush1.msra.mxu0 %v464
    %1087 = vmatprep.subr.mxu0 %v467
    %1088 = vmatpush1.msra.mxu0 %v466
    %1089 = vmatprep.subr.mxu0 %v469
    %1090 = vmatpush1.msra.mxu0 %v468
    %1091 = vmatprep.subr.mxu0 %v471
    %1092 = vmatpush1.msra.mxu0 %v470
    %1093 = vmatprep.subr.mxu0 %v473
    %1094 = vmatpush1.msra.mxu0 %v472
    %1095 = vmatprep.subr.mxu0 %v475
    %1096 = vmatpush1.msra.mxu0 %v474
    %1097 = vmatprep.subr.mxu0 %v477
    %1098 = vmatpush1.msra.mxu0 %v476
    %1099 = vmatprep.subr.mxu0 %v479
    %1100 = vmatpush1.msra.mxu0 %v478
    %1101 = vmatprep.subr.mxu0 %v481
    %1102 = vmatpush1.msra.mxu0 %v480
    %1103 = vmatprep.subr.mxu0 %v483
    %1104 = vmatpush1.msra.mxu0 %v482
    %1105 = vmatprep.subr.mxu0 %v485
    %1106 = vmatpush1.msra.mxu0 %v484
    %1107 = vmatprep.subr.mxu0 %v487
    %1108 = vmatpush1.msra.mxu0 %v486
    %1109 = vmatprep.subr.mxu0 %v489
    %1110 = vmatpush1.msra.mxu0 %v488
    %1111 = vmatprep.subr.mxu0 %v491
    %1112 = vmatpush1.msra.mxu0 %v490
    %1113 = vmatprep.subr.mxu0 %v493
    %1114 = vmatpush1.msra.mxu0 %v492
    %1115 = vmatprep.mubr.f32.mxu0 %v113
    %1116 = vmatmul.mubr.f32.gmra.mrb[0].mxu0 %v112
    %v1117 = vpop.f32.mrb[0].mxu0
    %v1118 = vadd.f32 %v957, %v1117
    %v1119 = vpop.f32.mrb[0].mxu0
    %v1120 = vadd.f32 %v959, %v1119
    %1121 = vmatprep.mubr.f32.mxu0 %v129
    %1122 = vmatmul.mubr.f32.gmra.mrb[0].mxu0 %v128
    %v1123 = vpop.f32.mrb[0].mxu0
    %v1124 = vadd.f32 %v963, %v1123
    %v1125 = vpop.f32.mrb[0].mxu0
    %v1126 = vadd.f32 %v965, %v1125
    %1127 = vmatprep.mubr.f32.mxu0 %v145
    %1128 = vmatmul.mubr.f32.gmra.mrb[0].mxu0 %v144
    %v1129 = vpop.f32.mrb[0].mxu0
    %v1130 = vadd.f32 %v969, %v1129
    %v1131 = vpop.f32.mrb[0].mxu0
    %v1132 = vadd.f32 %v971, %v1131
    %1133 = vmatprep.mubr.f32.mxu0 %v161
    %1134 = vmatmul.mubr.f32.gmra.mrb[0].mxu0 %v160
    %v1135 = vpop.f32.mrb[0].mxu0
    %v1136 = vadd.f32 %v975, %v1135
    %v1137 = vpop.f32.mrb[0].mxu0
    %v1138 = vadd.f32 %v977, %v1137
    %1139 = vmatprep.mubr.f32.mxu0 %v177
    %1140 = vmatmul.mubr.f32.gmra.mrb[0].mxu0 %v176
    %v1141 = vpop.f32.mrb[0].mxu0
    %v1142 = vadd.f32 %v981, %v1141
    %v1143 = vpop.f32.mrb[0].mxu0
    %v1144 = vadd.f32 %v983, %v1143
    %1145 = vmatprep.mubr.f32.mxu0 %v193
    %1146 = vmatmul.mubr.f32.gmra.mrb[0].mxu0 %v192
    %v1147 = vpop.f32.mrb[0].mxu0
    %v1148 = vadd.f32 %v987, %v1147
    %v1149 = vpop.f32.mrb[0].mxu0
    %v1150 = vadd.f32 %v989, %v1149
    %1151 = vmatprep.mubr.f32.mxu0 %v209
    %1152 = vmatmul.mubr.f32.gmra.mrb[0].mxu0 %v208
    %v1153 = vpop.f32.mrb[0].mxu0
    %v1154 = vadd.f32 %v993, %v1153
    %v1155 = vpop.f32.mrb[0].mxu0
    %v1156 = vadd.f32 %v995, %v1155
    %1157 = vmatprep.mubr.f32.mxu0 %v225
    %1158 = vmatmul.mubr.f32.gmra.mrb[0].mxu0 %v224
    %v1159 = vpop.f32.mrb[0].mxu0
    %v1160 = vadd.f32 %v999, %v1159
    %v1161 = vpop.f32.mrb[0].mxu0
    %v1162 = vadd.f32 %v1001, %v1161
    %1163 = vmatprep.mubr.f32.mxu0 %v241
    %1164 = vmatmul.mubr.f32.gmra.mrb[0].mxu0 %v240
    %v1165 = vpop.f32.mrb[0].mxu0
    %v1166 = vadd.f32 %v1005, %v1165
    %v1167 = vpop.f32.mrb[0].mxu0
    %v1168 = vadd.f32 %v1007, %v1167
    %1169 = vmatprep.mubr.f32.mxu0 %v257
    %1170 = vmatmul.mubr.f32.gmra.mrb[0].mxu0 %v256
    %v1171 = vpop.f32.mrb[0].mxu0
    %v1172 = vadd.f32 %v1011, %v1171
    %v1173 = vpop.f32.mrb[0].mxu0
    %v1174 = vadd.f32 %v1013, %v1173
    %1175 = vmatprep.mubr.f32.mxu0 %v273
    %1176 = vmatmul.mubr.f32.gmra.mrb[0].mxu0 %v272
    %v1177 = vpop.f32.mrb[0].mxu0
    %v1178 = vadd.f32 %v1017, %v1177
    %v1179 = vpop.f32.mrb[0].mxu0
    %v1180 = vadd.f32 %v1019, %v1179
    %1181 = vmatprep.mubr.f32.mxu0 %v289
    %1182 = vmatmul.mubr.f32.gmra.mrb[0].mxu0 %v288
    %v1183 = vpop.f32.mrb[0].mxu0
    %v1184 = vadd.f32 %v1023, %v1183
    %v1185 = vpop.f32.mrb[0].mxu0
    %v1186 = vadd.f32 %v1025, %v1185
    %1187 = vmatprep.mubr.f32.mxu0 %v305
    %1188 = vmatmul.mubr.f32.gmra.mrb[0].mxu0 %v304
    %v1189 = vpop.f32.mrb[0].mxu0
    %v1190 = vadd.f32 %v1029, %v1189
    %v1191 = vpop.f32.mrb[0].mxu0
    %v1192 = vadd.f32 %v1031, %v1191
    %1193 = vmatprep.mubr.f32.mxu0 %v321
    %1194 = vmatmul.mubr.f32.gmra.mrb[0].mxu0 %v320
    %v1195 = vpop.f32.mrb[0].mxu0
    %v1196 = vadd.f32 %v1035, %v1195
    %v1197 = vpop.f32.mrb[0].mxu0
    %v1198 = vadd.f32 %v1037, %v1197
    %1199 = vmatprep.mubr.f32.mxu0 %v337
    %1200 = vmatmul.mubr.f32.gmra.mrb[0].mxu0 %v336
    %v1201 = vpop.f32.mrb[0].mxu0
    %v1202 = vadd.f32 %v1041, %v1201
    %v1203 = vpop.f32.mrb[0].mxu0
    %v1204 = vadd.f32 %v1043, %v1203
    %1205 = vmatprep.mubr.f32.mxu0 %v353
    %1206 = vmatmul.mubr.f32.gmra.mrb[0].mxu0 %v352
    %v1207 = vpop.f32.mrb[0].mxu0
    %v1208 = vadd.f32 %v1047, %v1207
    %v1209 = vpop.f32.mrb[0].mxu0
    %v1210 = vadd.f32 %v1049, %v1209
    %1211 = vdwg.mxu0
    %1212 = vmatprep.subr.mxu0 %v495
    %1213 = vmatpush1.msra.mxu0 %v494
    %1214 = vmatprep.subr.mxu0 %v497
    %1215 = vmatpush1.msra.mxu0 %v496
    %1216 = vmatprep.subr.mxu0 %v499
    %1217 = vmatpush1.msra.mxu0 %v498
    %1218 = vmatprep.subr.mxu0 %v501
    %1219 = vmatpush1.msra.mxu0 %v500
    %1220 = vmatprep.subr.mxu0 %v503
    %1221 = vmatpush1.msra.mxu0 %v502
    %1222 = vmatprep.subr.mxu0 %v505
    %1223 = vmatpush1.msra.mxu0 %v504
    %1224 = vmatprep.subr.mxu0 %v507
    %1225 = vmatpush1.msra.mxu0 %v506
    %1226 = vmatprep.subr.mxu0 %v509
    %1227 = vmatpush1.msra.mxu0 %v508
    %1228 = vmatprep.subr.mxu0 %v511
    %1229 = vmatpush1.msra.mxu0 %v510
    %1230 = vmatprep.subr.mxu0 %v513
    %1231 = vmatpush1.msra.mxu0 %v512
    %1232 = vmatprep.subr.mxu0 %v515
    %1233 = vmatpush1.msra.mxu0 %v514
    %1234 = vmatprep.subr.mxu0 %v517
    %1235 = vmatpush1.msra.mxu0 %v516
    %1236 = vmatprep.subr.mxu0 %v519
    %1237 = vmatpush1.msra.mxu0 %v518
    %1238 = vmatprep.subr.mxu0 %v521
    %1239 = vmatpush1.msra.mxu0 %v520
    %1240 = vmatprep.subr.mxu0 %v523
    %1241 = vmatpush1.msra.mxu0 %v522
    %1242 = vmatprep.subr.mxu0 %v525
    %1243 = vmatpush1.msra.mxu0 %v524
    %1244 = vmatprep.subr.mxu0 %v527
    %1245 = vmatpush1.msra.mxu0 %v526
    %1246 = vmatprep.subr.mxu0 %v529
    %1247 = vmatpush1.msra.mxu0 %v528
    %1248 = vmatprep.subr.mxu0 %v531
    %1249 = vmatpush1.msra.mxu0 %v530
    %1250 = vmatprep.subr.mxu0 %v533
    %1251 = vmatpush1.msra.mxu0 %v532
    %1252 = vmatprep.subr.mxu0 %v535
    %1253 = vmatpush1.msra.mxu0 %v534
    %1254 = vmatprep.subr.mxu0 %v537
    %1255 = vmatpush1.msra.mxu0 %v536
    %1256 = vmatprep.subr.mxu0 %v539
    %1257 = vmatpush1.msra.mxu0 %v538
    %1258 = vmatprep.subr.mxu0 %v541
    %1259 = vmatpush1.msra.mxu0 %v540
    %1260 = vmatprep.subr.mxu0 %v543
    %1261 = vmatpush1.msra.mxu0 %v542
    %1262 = vmatprep.subr.mxu0 %v545
    %1263 = vmatpush1.msra.mxu0 %v544
    %1264 = vmatprep.subr.mxu0 %v547
    %1265 = vmatpush1.msra.mxu0 %v546
    %1266 = vmatprep.subr.mxu0 %v549
    %1267 = vmatpush1.msra.mxu0 %v548
    %1268 = vmatprep.subr.mxu0 %v551
    %1269 = vmatpush1.msra.mxu0 %v550
    %1270 = vmatprep.subr.mxu0 %v553
    %1271 = vmatpush1.msra.mxu0 %v552
    %1272 = vmatprep.subr.mxu0 %v555
    %1273 = vmatpush1.msra.mxu0 %v554
    %1274 = vmatprep.subr.mxu0 %v557
    %1275 = vmatpush1.msra.mxu0 %v556
    %1276 = vmatprep.mubr.f32.mxu0 %v115
    %1277 = vmatmul.mubr.f32.gmra.mrb[0].mxu0 %v114
    %v1278 = vpop.f32.mrb[0].mxu0
    %v1279 = vadd.f32 %v1118, %v1278
    %v1280 = vpop.f32.mrb[0].mxu0
    %v1281 = vadd.f32 %v1120, %v1280
    %1282 = vmatprep.mubr.f32.mxu0 %v131
    %1283 = vmatmul.mubr.f32.gmra.mrb[0].mxu0 %v130
    %v1284 = vpop.f32.mrb[0].mxu0
    %v1285 = vadd.f32 %v1124, %v1284
    %v1286 = vpop.f32.mrb[0].mxu0
    %v1287 = vadd.f32 %v1126, %v1286
    %1288 = vmatprep.mubr.f32.mxu0 %v147
    %1289 = vmatmul.mubr.f32.gmra.mrb[0].mxu0 %v146
    %v1290 = vpop.f32.mrb[0].mxu0
    %v1291 = vadd.f32 %v1130, %v1290
    %v1292 = vpop.f32.mrb[0].mxu0
    %v1293 = vadd.f32 %v1132, %v1292
    %1294 = vmatprep.mubr.f32.mxu0 %v163
    %1295 = vmatmul.mubr.f32.gmra.mrb[0].mxu0 %v162
    %v1296 = vpop.f32.mrb[0].mxu0
    %v1297 = vadd.f32 %v1136, %v1296
    %v1298 = vpop.f32.mrb[0].mxu0
    %v1299 = vadd.f32 %v1138, %v1298
    %1300 = vmatprep.mubr.f32.mxu0 %v179
    %1301 = vmatmul.mubr.f32.gmra.mrb[0].mxu0 %v178
    %v1302 = vpop.f32.mrb[0].mxu0
    %v1303 = vadd.f32 %v1142, %v1302
    %v1304 = vpop.f32.mrb[0].mxu0
    %v1305 = vadd.f32 %v1144, %v1304
    %1306 = vmatprep.mubr.f32.mxu0 %v195
    %1307 = vmatmul.mubr.f32.gmra.mrb[0].mxu0 %v194
    %v1308 = vpop.f32.mrb[0].mxu0
    %v1309 = vadd.f32 %v1148, %v1308
    %v1310 = vpop.f32.mrb[0].mxu0
    %v1311 = vadd.f32 %v1150, %v1310
    %1312 = vmatprep.mubr.f32.mxu0 %v211
    %1313 = vmatmul.mubr.f32.gmra.mrb[0].mxu0 %v210
    %v1314 = vpop.f32.mrb[0].mxu0
    %v1315 = vadd.f32 %v1154, %v1314
    %v1316 = vpop.f32.mrb[0].mxu0
    %v1317 = vadd.f32 %v1156, %v1316
    %1318 = vmatprep.mubr.f32.mxu0 %v227
    %1319 = vmatmul.mubr.f32.gmra.mrb[0].mxu0 %v226
    %v1320 = vpop.f32.mrb[0].mxu0
    %v1321 = vadd.f32 %v1160, %v1320
    %v1322 = vpop.f32.mrb[0].mxu0
    %v1323 = vadd.f32 %v1162, %v1322
    %1324 = vmatprep.mubr.f32.mxu0 %v243
    %1325 = vmatmul.mubr.f32.gmra.mrb[0].mxu0 %v242
    %v1326 = vpop.f32.mrb[0].mxu0
    %v1327 = vadd.f32 %v1166, %v1326
    %v1328 = vpop.f32.mrb[0].mxu0
    %v1329 = vadd.f32 %v1168, %v1328
    %1330 = vmatprep.mubr.f32.mxu0 %v259
    %1331 = vmatmul.mubr.f32.gmra.mrb[0].mxu0 %v258
    %v1332 = vpop.f32.mrb[0].mxu0
    %v1333 = vadd.f32 %v1172, %v1332
    %v1334 = vpop.f32.mrb[0].mxu0
    %v1335 = vadd.f32 %v1174, %v1334
    %1336 = vmatprep.mubr.f32.mxu0 %v275
    %1337 = vmatmul.mubr.f32.gmra.mrb[0].mxu0 %v274
    %v1338 = vpop.f32.mrb[0].mxu0
    %v1339 = vadd.f32 %v1178, %v1338
    %v1340 = vpop.f32.mrb[0].mxu0
    %v1341 = vadd.f32 %v1180, %v1340
    %1342 = vmatprep.mubr.f32.mxu0 %v291
    %1343 = vmatmul.mubr.f32.gmra.mrb[0].mxu0 %v290
    %v1344 = vpop.f32.mrb[0].mxu0
    %v1345 = vadd.f32 %v1184, %v1344
    %v1346 = vpop.f32.mrb[0].mxu0
    %v1347 = vadd.f32 %v1186, %v1346
    %1348 = vmatprep.mubr.f32.mxu0 %v307
    %1349 = vmatmul.mubr.f32.gmra.mrb[0].mxu0 %v306
    %v1350 = vpop.f32.mrb[0].mxu0
    %v1351 = vadd.f32 %v1190, %v1350
    %v1352 = vpop.f32.mrb[0].mxu0
    %v1353 = vadd.f32 %v1192, %v1352
    %1354 = vmatprep.mubr.f32.mxu0 %v323
    %1355 = vmatmul.mubr.f32.gmra.mrb[0].mxu0 %v322
    %v1356 = vpop.f32.mrb[0].mxu0
    %v1357 = vadd.f32 %v1196, %v1356
    %v1358 = vpop.f32.mrb[0].mxu0
    %v1359 = vadd.f32 %v1198, %v1358
    %1360 = vmatprep.mubr.f32.mxu0 %v339
    %1361 = vmatmul.mubr.f32.gmra.mrb[0].mxu0 %v338
    %v1362 = vpop.f32.mrb[0].mxu0
    %v1363 = vadd.f32 %v1202, %v1362
    %v1364 = vpop.f32.mrb[0].mxu0
    %v1365 = vadd.f32 %v1204, %v1364
    %1366 = vmatprep.mubr.f32.mxu0 %v355
    %1367 = vmatmul.mubr.f32.gmra.mrb[0].mxu0 %v354
    %v1368 = vpop.f32.mrb[0].mxu0
    %v1369 = vadd.f32 %v1208, %v1368
    %v1370 = vpop.f32.mrb[0].mxu0
    %v1371 = vadd.f32 %v1210, %v1370
    %1372 = vdwg.mxu0
    %1373 = vmatprep.subr.mxu0 %v559
    %1374 = vmatpush1.msra.mxu0 %v558
    %1375 = vmatprep.subr.mxu0 %v561
    %1376 = vmatpush1.msra.mxu0 %v560
    %1377 = vmatprep.subr.mxu0 %v563
    %1378 = vmatpush1.msra.mxu0 %v562
    %1379 = vmatprep.subr.mxu0 %v565
    %1380 = vmatpush1.msra.mxu0 %v564
    %1381 = vmatprep.subr.mxu0 %v567
    %1382 = vmatpush1.msra.mxu0 %v566
    %1383 = vmatprep.subr.mxu0 %v569
    %1384 = vmatpush1.msra.mxu0 %v568
    %1385 = vmatprep.subr.mxu0 %v571
    %1386 = vmatpush1.msra.mxu0 %v570
    %1387 = vmatprep.subr.mxu0 %v573
    %1388 = vmatpush1.msra.mxu0 %v572
    %1389 = vmatprep.subr.mxu0 %v575
    %1390 = vmatpush1.msra.mxu0 %v574
    %1391 = vmatprep.subr.mxu0 %v577
    %1392 = vmatpush1.msra.mxu0 %v576
    %1393 = vmatprep.subr.mxu0 %v579
    %1394 = vmatpush1.msra.mxu0 %v578
    %1395 = vmatprep.subr.mxu0 %v581
    %1396 = vmatpush1.msra.mxu0 %v580
    %1397 = vmatprep.subr.mxu0 %v583
    %1398 = vmatpush1.msra.mxu0 %v582
    %1399 = vmatprep.subr.mxu0 %v585
    %1400 = vmatpush1.msra.mxu0 %v584
    %1401 = vmatprep.subr.mxu0 %v587
    %1402 = vmatpush1.msra.mxu0 %v586
    %1403 = vmatprep.subr.mxu0 %v589
    %1404 = vmatpush1.msra.mxu0 %v588
    %1405 = vmatprep.subr.mxu0 %v591
    %1406 = vmatpush1.msra.mxu0 %v590
    %1407 = vmatprep.subr.mxu0 %v593
    %1408 = vmatpush1.msra.mxu0 %v592
    %1409 = vmatprep.subr.mxu0 %v595
    %1410 = vmatpush1.msra.mxu0 %v594
    %1411 = vmatprep.subr.mxu0 %v597
    %1412 = vmatpush1.msra.mxu0 %v596
    %1413 = vmatprep.subr.mxu0 %v599
    %1414 = vmatpush1.msra.mxu0 %v598
    %1415 = vmatprep.subr.mxu0 %v601
    %1416 = vmatpush1.msra.mxu0 %v600
    %1417 = vmatprep.subr.mxu0 %v603
    %1418 = vmatpush1.msra.mxu0 %v602
    %1419 = vmatprep.subr.mxu0 %v605
    %1420 = vmatpush1.msra.mxu0 %v604
    %1421 = vmatprep.subr.mxu0 %v607
    %1422 = vmatpush1.msra.mxu0 %v606
    %1423 = vmatprep.subr.mxu0 %v609
    %1424 = vmatpush1.msra.mxu0 %v608
    %1425 = vmatprep.subr.mxu0 %v611
    %1426 = vmatpush1.msra.mxu0 %v610
    %1427 = vmatprep.subr.mxu0 %v613
    %1428 = vmatpush1.msra.mxu0 %v612
    %1429 = vmatprep.subr.mxu0 %v615
    %1430 = vmatpush1.msra.mxu0 %v614
    %1431 = vmatprep.subr.mxu0 %v617
    %1432 = vmatpush1.msra.mxu0 %v616
    %1433 = vmatprep.subr.mxu0 %v619
    %1434 = vmatpush1.msra.mxu0 %v618
    %1435 = vmatprep.subr.mxu0 %v621
    %1436 = vmatpush1.msra.mxu0 %v620
    %1437 = vmatprep.mubr.f32.mxu0 %v117
    %1438 = vmatmul.mubr.f32.gmra.mrb[0].mxu0 %v116
    %v1439 = vpop.f32.mrb[0].mxu0
    %v1440 = vadd.f32 %v1279, %v1439
    %v1441 = vpop.f32.mrb[0].mxu0
    %v1442 = vadd.f32 %v1281, %v1441
    %1443 = vmatprep.mubr.f32.mxu0 %v133
    %1444 = vmatmul.mubr.f32.gmra.mrb[0].mxu0 %v132
    %v1445 = vpop.f32.mrb[0].mxu0
    %v1446 = vadd.f32 %v1285, %v1445
    %v1447 = vpop.f32.mrb[0].mxu0
    %v1448 = vadd.f32 %v1287, %v1447
    %1449 = vmatprep.mubr.f32.mxu0 %v149
    %1450 = vmatmul.mubr.f32.gmra.mrb[0].mxu0 %v148
    %v1451 = vpop.f32.mrb[0].mxu0
    %v1452 = vadd.f32 %v1291, %v1451
    %v1453 = vpop.f32.mrb[0].mxu0
    %v1454 = vadd.f32 %v1293, %v1453
    %1455 = vmatprep.mubr.f32.mxu0 %v165
    %1456 = vmatmul.mubr.f32.gmra.mrb[0].mxu0 %v164
    %v1457 = vpop.f32.mrb[0].mxu0
    %v1458 = vadd.f32 %v1297, %v1457
    %v1459 = vpop.f32.mrb[0].mxu0
    %v1460 = vadd.f32 %v1299, %v1459
    %1461 = vmatprep.mubr.f32.mxu0 %v181
    %1462 = vmatmul.mubr.f32.gmra.mrb[0].mxu0 %v180
    %v1463 = vpop.f32.mrb[0].mxu0
    %v1464 = vadd.f32 %v1303, %v1463
    %v1465 = vpop.f32.mrb[0].mxu0
    %v1466 = vadd.f32 %v1305, %v1465
    %1467 = vmatprep.mubr.f32.mxu0 %v197
    %1468 = vmatmul.mubr.f32.gmra.mrb[0].mxu0 %v196
    %v1469 = vpop.f32.mrb[0].mxu0
    %v1470 = vadd.f32 %v1309, %v1469
    %v1471 = vpop.f32.mrb[0].mxu0
    %v1472 = vadd.f32 %v1311, %v1471
    %1473 = vmatprep.mubr.f32.mxu0 %v213
    %1474 = vmatmul.mubr.f32.gmra.mrb[0].mxu0 %v212
    %v1475 = vpop.f32.mrb[0].mxu0
    %v1476 = vadd.f32 %v1315, %v1475
    %v1477 = vpop.f32.mrb[0].mxu0
    %v1478 = vadd.f32 %v1317, %v1477
    %1479 = vmatprep.mubr.f32.mxu0 %v229
    %1480 = vmatmul.mubr.f32.gmra.mrb[0].mxu0 %v228
    %v1481 = vpop.f32.mrb[0].mxu0
    %v1482 = vadd.f32 %v1321, %v1481
    %v1483 = vpop.f32.mrb[0].mxu0
    %v1484 = vadd.f32 %v1323, %v1483
    %1485 = vmatprep.mubr.f32.mxu0 %v245
    %1486 = vmatmul.mubr.f32.gmra.mrb[0].mxu0 %v244
    %v1487 = vpop.f32.mrb[0].mxu0
    %v1488 = vadd.f32 %v1327, %v1487
    %v1489 = vpop.f32.mrb[0].mxu0
    %v1490 = vadd.f32 %v1329, %v1489
    %1491 = vmatprep.mubr.f32.mxu0 %v261
    %1492 = vmatmul.mubr.f32.gmra.mrb[0].mxu0 %v260
    %v1493 = vpop.f32.mrb[0].mxu0
    %v1494 = vadd.f32 %v1333, %v1493
    %v1495 = vpop.f32.mrb[0].mxu0
    %v1496 = vadd.f32 %v1335, %v1495
    %1497 = vmatprep.mubr.f32.mxu0 %v277
    %1498 = vmatmul.mubr.f32.gmra.mrb[0].mxu0 %v276
    %v1499 = vpop.f32.mrb[0].mxu0
    %v1500 = vadd.f32 %v1339, %v1499
    %v1501 = vpop.f32.mrb[0].mxu0
    %v1502 = vadd.f32 %v1341, %v1501
    %1503 = vmatprep.mubr.f32.mxu0 %v293
    %1504 = vmatmul.mubr.f32.gmra.mrb[0].mxu0 %v292
    %v1505 = vpop.f32.mrb[0].mxu0
    %v1506 = vadd.f32 %v1345, %v1505
    %v1507 = vpop.f32.mrb[0].mxu0
    %v1508 = vadd.f32 %v1347, %v1507
    %1509 = vmatprep.mubr.f32.mxu0 %v309
    %1510 = vmatmul.mubr.f32.gmra.mrb[0].mxu0 %v308
    %v1511 = vpop.f32.mrb[0].mxu0
    %v1512 = vadd.f32 %v1351, %v1511
    %v1513 = vpop.f32.mrb[0].mxu0
    %v1514 = vadd.f32 %v1353, %v1513
    %1515 = vmatprep.mubr.f32.mxu0 %v325
    %1516 = vmatmul.mubr.f32.gmra.mrb[0].mxu0 %v324
    %v1517 = vpop.f32.mrb[0].mxu0
    %v1518 = vadd.f32 %v1357, %v1517
    %v1519 = vpop.f32.mrb[0].mxu0
    %v1520 = vadd.f32 %v1359, %v1519
    %1521 = vmatprep.mubr.f32.mxu0 %v341
    %1522 = vmatmul.mubr.f32.gmra.mrb[0].mxu0 %v340
    %v1523 = vpop.f32.mrb[0].mxu0
    %v1524 = vadd.f32 %v1363, %v1523
    %v1525 = vpop.f32.mrb[0].mxu0
    %v1526 = vadd.f32 %v1365, %v1525
    %1527 = vmatprep.mubr.f32.mxu0 %v357
    %1528 = vmatmul.mubr.f32.gmra.mrb[0].mxu0 %v356
    %v1529 = vpop.f32.mrb[0].mxu0
    %v1530 = vadd.f32 %v1369, %v1529
    %v1531 = vpop.f32.mrb[0].mxu0
    %v1532 = vadd.f32 %v1371, %v1531
    %1533 = vdwg.mxu0
    %1534 = vmatprep.subr.mxu0 %v623
    %1535 = vmatpush1.msra.mxu0 %v622
    %1536 = vmatprep.subr.mxu0 %v625
    %1537 = vmatpush1.msra.mxu0 %v624
    %1538 = vmatprep.subr.mxu0 %v627
    %1539 = vmatpush1.msra.mxu0 %v626
    %1540 = vmatprep.subr.mxu0 %v629
    %1541 = vmatpush1.msra.mxu0 %v628
    %1542 = vmatprep.subr.mxu0 %v631
    %1543 = vmatpush1.msra.mxu0 %v630
    %1544 = vmatprep.subr.mxu0 %v633
    %1545 = vmatpush1.msra.mxu0 %v632
    %1546 = vmatprep.subr.mxu0 %v635
    %1547 = vmatpush1.msra.mxu0 %v634
    %1548 = vmatprep.subr.mxu0 %v637
    %1549 = vmatpush1.msra.mxu0 %v636
    %1550 = vmatprep.subr.mxu0 %v639
    %1551 = vmatpush1.msra.mxu0 %v638
    %1552 = vmatprep.subr.mxu0 %v641
    %1553 = vmatpush1.msra.mxu0 %v640
    %1554 = vmatprep.subr.mxu0 %v643
    %1555 = vmatpush1.msra.mxu0 %v642
    %1556 = vmatprep.subr.mxu0 %v645
    %1557 = vmatpush1.msra.mxu0 %v644
    %1558 = vmatprep.subr.mxu0 %v647
    %1559 = vmatpush1.msra.mxu0 %v646
    %1560 = vmatprep.subr.mxu0 %v649
    %1561 = vmatpush1.msra.mxu0 %v648
    %1562 = vmatprep.subr.mxu0 %v651
    %1563 = vmatpush1.msra.mxu0 %v650
    %1564 = vmatprep.subr.mxu0 %v653
    %1565 = vmatpush1.msra.mxu0 %v652
    %1566 = vmatprep.subr.mxu0 %v655
    %1567 = vmatpush1.msra.mxu0 %v654
    %1568 = vmatprep.subr.mxu0 %v657
    %1569 = vmatpush1.msra.mxu0 %v656
    %1570 = vmatprep.subr.mxu0 %v659
    %1571 = vmatpush1.msra.mxu0 %v658
    %1572 = vmatprep.subr.mxu0 %v661
    %1573 = vmatpush1.msra.mxu0 %v660
    %1574 = vmatprep.subr.mxu0 %v663
    %1575 = vmatpush1.msra.mxu0 %v662
    %1576 = vmatprep.subr.mxu0 %v665
    %1577 = vmatpush1.msra.mxu0 %v664
    %1578 = vmatprep.subr.mxu0 %v667
    %1579 = vmatpush1.msra.mxu0 %v666
    %1580 = vmatprep.subr.mxu0 %v669
    %1581 = vmatpush1.msra.mxu0 %v668
    %1582 = vmatprep.subr.mxu0 %v671
    %1583 = vmatpush1.msra.mxu0 %v670
    %1584 = vmatprep.subr.mxu0 %v673
    %1585 = vmatpush1.msra.mxu0 %v672
    %1586 = vmatprep.subr.mxu0 %v675
    %1587 = vmatpush1.msra.mxu0 %v674
    %1588 = vmatprep.subr.mxu0 %v677
    %1589 = vmatpush1.msra.mxu0 %v676
    %1590 = vmatprep.subr.mxu0 %v679
    %1591 = vmatpush1.msra.mxu0 %v678
    %1592 = vmatprep.subr.mxu0 %v681
    %1593 = vmatpush1.msra.mxu0 %v680
    %1594 = vmatprep.subr.mxu0 %v683
    %1595 = vmatpush1.msra.mxu0 %v682
    %1596 = vmatprep.subr.mxu0 %v685
    %1597 = vmatpush1.msra.mxu0 %v684
    %1598 = vmatprep.mubr.f32.mxu0 %v119
    %1599 = vmatmul.mubr.f32.gmra.mrb[0].mxu0 %v118
    %v1600 = vpop.f32.mrb[0].mxu0
    %v1601 = vadd.f32 %v1440, %v1600
    %v1602 = vpop.f32.mrb[0].mxu0
    %v1603 = vadd.f32 %v1442, %v1602
    %1604 = vmatprep.mubr.f32.mxu0 %v135
    %1605 = vmatmul.mubr.f32.gmra.mrb[0].mxu0 %v134
    %v1606 = vpop.f32.mrb[0].mxu0
    %v1607 = vadd.f32 %v1446, %v1606
    %v1608 = vpop.f32.mrb[0].mxu0
    %v1609 = vadd.f32 %v1448, %v1608
    %1610 = vmatprep.mubr.f32.mxu0 %v151
    %1611 = vmatmul.mubr.f32.gmra.mrb[0].mxu0 %v150
    %v1612 = vpop.f32.mrb[0].mxu0
    %v1613 = vadd.f32 %v1452, %v1612
    %v1614 = vpop.f32.mrb[0].mxu0
    %v1615 = vadd.f32 %v1454, %v1614
    %1616 = vmatprep.mubr.f32.mxu0 %v167
    %1617 = vmatmul.mubr.f32.gmra.mrb[0].mxu0 %v166
    %v1618 = vpop.f32.mrb[0].mxu0
    %v1619 = vadd.f32 %v1458, %v1618
    %v1620 = vpop.f32.mrb[0].mxu0
    %v1621 = vadd.f32 %v1460, %v1620
    %1622 = vmatprep.mubr.f32.mxu0 %v183
    %1623 = vmatmul.mubr.f32.gmra.mrb[0].mxu0 %v182
    %v1624 = vpop.f32.mrb[0].mxu0
    %v1625 = vadd.f32 %v1464, %v1624
    %v1626 = vpop.f32.mrb[0].mxu0
    %v1627 = vadd.f32 %v1466, %v1626
    %1628 = vmatprep.mubr.f32.mxu0 %v199
    %1629 = vmatmul.mubr.f32.gmra.mrb[0].mxu0 %v198
    %v1630 = vpop.f32.mrb[0].mxu0
    %v1631 = vadd.f32 %v1470, %v1630
    %v1632 = vpop.f32.mrb[0].mxu0
    %v1633 = vadd.f32 %v1472, %v1632
    %1634 = vmatprep.mubr.f32.mxu0 %v215
    %1635 = vmatmul.mubr.f32.gmra.mrb[0].mxu0 %v214
    %v1636 = vpop.f32.mrb[0].mxu0
    %v1637 = vadd.f32 %v1476, %v1636
    %v1638 = vpop.f32.mrb[0].mxu0
    %v1639 = vadd.f32 %v1478, %v1638
    %1640 = vmatprep.mubr.f32.mxu0 %v231
    %1641 = vmatmul.mubr.f32.gmra.mrb[0].mxu0 %v230
    %v1642 = vpop.f32.mrb[0].mxu0
    %v1643 = vadd.f32 %v1482, %v1642
    %v1644 = vpop.f32.mrb[0].mxu0
    %v1645 = vadd.f32 %v1484, %v1644
    %1646 = vmatprep.mubr.f32.mxu0 %v247
    %1647 = vmatmul.mubr.f32.gmra.mrb[0].mxu0 %v246
    %v1648 = vpop.f32.mrb[0].mxu0
    %v1649 = vadd.f32 %v1488, %v1648
    %v1650 = vpop.f32.mrb[0].mxu0
    %v1651 = vadd.f32 %v1490, %v1650
    %1652 = vmatprep.mubr.f32.mxu0 %v263
    %1653 = vmatmul.mubr.f32.gmra.mrb[0].mxu0 %v262
    %v1654 = vpop.f32.mrb[0].mxu0
    %v1655 = vadd.f32 %v1494, %v1654
    %v1656 = vpop.f32.mrb[0].mxu0
    %v1657 = vadd.f32 %v1496, %v1656
    %1658 = vmatprep.mubr.f32.mxu0 %v279
    %1659 = vmatmul.mubr.f32.gmra.mrb[0].mxu0 %v278
    %v1660 = vpop.f32.mrb[0].mxu0
    %v1661 = vadd.f32 %v1500, %v1660
    %v1662 = vpop.f32.mrb[0].mxu0
    %v1663 = vadd.f32 %v1502, %v1662
    %1664 = vmatprep.mubr.f32.mxu0 %v295
    %1665 = vmatmul.mubr.f32.gmra.mrb[0].mxu0 %v294
    %v1666 = vpop.f32.mrb[0].mxu0
    %v1667 = vadd.f32 %v1506, %v1666
    %v1668 = vpop.f32.mrb[0].mxu0
    %v1669 = vadd.f32 %v1508, %v1668
    %1670 = vmatprep.mubr.f32.mxu0 %v311
    %1671 = vmatmul.mubr.f32.gmra.mrb[0].mxu0 %v310
    %v1672 = vpop.f32.mrb[0].mxu0
    %v1673 = vadd.f32 %v1512, %v1672
    %v1674 = vpop.f32.mrb[0].mxu0
    %v1675 = vadd.f32 %v1514, %v1674
    %1676 = vmatprep.mubr.f32.mxu0 %v327
    %1677 = vmatmul.mubr.f32.gmra.mrb[0].mxu0 %v326
    %v1678 = vpop.f32.mrb[0].mxu0
    %v1679 = vadd.f32 %v1518, %v1678
    %v1680 = vpop.f32.mrb[0].mxu0
    %v1681 = vadd.f32 %v1520, %v1680
    %1682 = vmatprep.mubr.f32.mxu0 %v343
    %1683 = vmatmul.mubr.f32.gmra.mrb[0].mxu0 %v342
    %v1684 = vpop.f32.mrb[0].mxu0
    %v1685 = vadd.f32 %v1524, %v1684
    %v1686 = vpop.f32.mrb[0].mxu0
    %v1687 = vadd.f32 %v1526, %v1686
    %1688 = vmatprep.mubr.f32.mxu0 %v359
    %1689 = vmatmul.mubr.f32.gmra.mrb[0].mxu0 %v358
    %v1690 = vpop.f32.mrb[0].mxu0
    %v1691 = vadd.f32 %v1530, %v1690
    %v1692 = vpop.f32.mrb[0].mxu0
    %v1693 = vadd.f32 %v1532, %v1692
    %1694 = vdwg.mxu0
    %1695 = vmatprep.subr.mxu0 %v687
    %1696 = vmatpush1.msra.mxu0 %v686
    %1697 = vmatprep.subr.mxu0 %v689
    %1698 = vmatpush1.msra.mxu0 %v688
    %1699 = vmatprep.subr.mxu0 %v691
    %1700 = vmatpush1.msra.mxu0 %v690
    %1701 = vmatprep.subr.mxu0 %v693
    %1702 = vmatpush1.msra.mxu0 %v692
    %1703 = vmatprep.subr.mxu0 %v695
    %1704 = vmatpush1.msra.mxu0 %v694
    %1705 = vmatprep.subr.mxu0 %v697
    %1706 = vmatpush1.msra.mxu0 %v696
    %1707 = vmatprep.subr.mxu0 %v699
    %1708 = vmatpush1.msra.mxu0 %v698
    %1709 = vmatprep.subr.mxu0 %v701
    %1710 = vmatpush1.msra.mxu0 %v700
    %1711 = vmatprep.subr.mxu0 %v703
    %1712 = vmatpush1.msra.mxu0 %v702
    %1713 = vmatprep.subr.mxu0 %v705
    %1714 = vmatpush1.msra.mxu0 %v704
    %1715 = vmatprep.subr.mxu0 %v707
    %1716 = vmatpush1.msra.mxu0 %v706
    %1717 = vmatprep.subr.mxu0 %v709
    %1718 = vmatpush1.msra.mxu0 %v708
    %1719 = vmatprep.subr.mxu0 %v711
    %1720 = vmatpush1.msra.mxu0 %v710
    %1721 = vmatprep.subr.mxu0 %v713
    %1722 = vmatpush1.msra.mxu0 %v712
    %1723 = vmatprep.subr.mxu0 %v715
    %1724 = vmatpush1.msra.mxu0 %v714
    %1725 = vmatprep.subr.mxu0 %v717
    %1726 = vmatpush1.msra.mxu0 %v716
    %1727 = vmatprep.subr.mxu0 %v719
    %1728 = vmatpush1.msra.mxu0 %v718
    %1729 = vmatprep.subr.mxu0 %v721
    %1730 = vmatpush1.msra.mxu0 %v720
    %1731 = vmatprep.subr.mxu0 %v723
    %1732 = vmatpush1.msra.mxu0 %v722
    %1733 = vmatprep.subr.mxu0 %v725
    %1734 = vmatpush1.msra.mxu0 %v724
    %1735 = vmatprep.subr.mxu0 %v727
    %1736 = vmatpush1.msra.mxu0 %v726
    %1737 = vmatprep.subr.mxu0 %v729
    %1738 = vmatpush1.msra.mxu0 %v728
    %1739 = vmatprep.subr.mxu0 %v731
    %1740 = vmatpush1.msra.mxu0 %v730
    %1741 = vmatprep.subr.mxu0 %v733
    %1742 = vmatpush1.msra.mxu0 %v732
    %1743 = vmatprep.subr.mxu0 %v735
    %1744 = vmatpush1.msra.mxu0 %v734
    %1745 = vmatprep.subr.mxu0 %v737
    %1746 = vmatpush1.msra.mxu0 %v736
    %1747 = vmatprep.subr.mxu0 %v739
    %1748 = vmatpush1.msra.mxu0 %v738
    %1749 = vmatprep.subr.mxu0 %v741
    %1750 = vmatpush1.msra.mxu0 %v740
    %1751 = vmatprep.subr.mxu0 %v743
    %1752 = vmatpush1.msra.mxu0 %v742
    %1753 = vmatprep.subr.mxu0 %v745
    %1754 = vmatpush1.msra.mxu0 %v744
    %1755 = vmatprep.subr.mxu0 %v747
    %1756 = vmatpush1.msra.mxu0 %v746
    %1757 = vmatprep.subr.mxu0 %v749
    %1758 = vmatpush1.msra.mxu0 %v748
    %1759 = vmatprep.mubr.f32.mxu0 %v121
    %1760 = vmatmul.mubr.f32.gmra.mrb[0].mxu0 %v120
    %v1761 = vpop.f32.mrb[0].mxu0
    %v1762 = vadd.f32 %v1601, %v1761
    %v1763 = vpop.f32.mrb[0].mxu0
    %v1764 = vadd.f32 %v1603, %v1763
    %1765 = vmatprep.mubr.f32.mxu0 %v137
    %1766 = vmatmul.mubr.f32.gmra.mrb[0].mxu0 %v136
    %v1767 = vpop.f32.mrb[0].mxu0
    %v1768 = vadd.f32 %v1607, %v1767
    %v1769 = vpop.f32.mrb[0].mxu0
    %v1770 = vadd.f32 %v1609, %v1769
    %1771 = vmatprep.mubr.f32.mxu0 %v153
    %1772 = vmatmul.mubr.f32.gmra.mrb[0].mxu0 %v152
    %v1773 = vpop.f32.mrb[0].mxu0
    %v1774 = vadd.f32 %v1613, %v1773
    %v1775 = vpop.f32.mrb[0].mxu0
    %v1776 = vadd.f32 %v1615, %v1775
    %1777 = vmatprep.mubr.f32.mxu0 %v169
    %1778 = vmatmul.mubr.f32.gmra.mrb[0].mxu0 %v168
    %v1779 = vpop.f32.mrb[0].mxu0
    %v1780 = vadd.f32 %v1619, %v1779
    %v1781 = vpop.f32.mrb[0].mxu0
    %v1782 = vadd.f32 %v1621, %v1781
    %1783 = vmatprep.mubr.f32.mxu0 %v185
    %1784 = vmatmul.mubr.f32.gmra.mrb[0].mxu0 %v184
    %v1785 = vpop.f32.mrb[0].mxu0
    %v1786 = vadd.f32 %v1625, %v1785
    %v1787 = vpop.f32.mrb[0].mxu0
    %v1788 = vadd.f32 %v1627, %v1787
    %1789 = vmatprep.mubr.f32.mxu0 %v201
    %1790 = vmatmul.mubr.f32.gmra.mrb[0].mxu0 %v200
    %v1791 = vpop.f32.mrb[0].mxu0
    %v1792 = vadd.f32 %v1631, %v1791
    %v1793 = vpop.f32.mrb[0].mxu0
    %v1794 = vadd.f32 %v1633, %v1793
    %1795 = vmatprep.mubr.f32.mxu0 %v217
    %1796 = vmatmul.mubr.f32.gmra.mrb[0].mxu0 %v216
    %v1797 = vpop.f32.mrb[0].mxu0
    %v1798 = vadd.f32 %v1637, %v1797
    %v1799 = vpop.f32.mrb[0].mxu0
    %v1800 = vadd.f32 %v1639, %v1799
    %1801 = vmatprep.mubr.f32.mxu0 %v233
    %1802 = vmatmul.mubr.f32.gmra.mrb[0].mxu0 %v232
    %v1803 = vpop.f32.mrb[0].mxu0
    %v1804 = vadd.f32 %v1643, %v1803
    %v1805 = vpop.f32.mrb[0].mxu0
    %v1806 = vadd.f32 %v1645, %v1805
    %1807 = vmatprep.mubr.f32.mxu0 %v249
    %1808 = vmatmul.mubr.f32.gmra.mrb[0].mxu0 %v248
    %v1809 = vpop.f32.mrb[0].mxu0
    %v1810 = vadd.f32 %v1649, %v1809
    %v1811 = vpop.f32.mrb[0].mxu0
    %v1812 = vadd.f32 %v1651, %v1811
    %1813 = vmatprep.mubr.f32.mxu0 %v265
    %1814 = vmatmul.mubr.f32.gmra.mrb[0].mxu0 %v264
    %v1815 = vpop.f32.mrb[0].mxu0
    %v1816 = vadd.f32 %v1655, %v1815
    %v1817 = vpop.f32.mrb[0].mxu0
    %v1818 = vadd.f32 %v1657, %v1817
    %1819 = vmatprep.mubr.f32.mxu0 %v281
    %1820 = vmatmul.mubr.f32.gmra.mrb[0].mxu0 %v280
    %v1821 = vpop.f32.mrb[0].mxu0
    %v1822 = vadd.f32 %v1661, %v1821
    %v1823 = vpop.f32.mrb[0].mxu0
    %v1824 = vadd.f32 %v1663, %v1823
    %1825 = vmatprep.mubr.f32.mxu0 %v297
    %1826 = vmatmul.mubr.f32.gmra.mrb[0].mxu0 %v296
    %v1827 = vpop.f32.mrb[0].mxu0
    %v1828 = vadd.f32 %v1667, %v1827
    %v1829 = vpop.f32.mrb[0].mxu0
    %v1830 = vadd.f32 %v1669, %v1829
    %1831 = vmatprep.mubr.f32.mxu0 %v313
    %1832 = vmatmul.mubr.f32.gmra.mrb[0].mxu0 %v312
    %v1833 = vpop.f32.mrb[0].mxu0
    %v1834 = vadd.f32 %v1673, %v1833
    %v1835 = vpop.f32.mrb[0].mxu0
    %v1836 = vadd.f32 %v1675, %v1835
    %1837 = vmatprep.mubr.f32.mxu0 %v329
    %1838 = vmatmul.mubr.f32.gmra.mrb[0].mxu0 %v328
    %v1839 = vpop.f32.mrb[0].mxu0
    %v1840 = vadd.f32 %v1679, %v1839
    %v1841 = vpop.f32.mrb[0].mxu0
    %v1842 = vadd.f32 %v1681, %v1841
    %1843 = vmatprep.mubr.f32.mxu0 %v345
    %1844 = vmatmul.mubr.f32.gmra.mrb[0].mxu0 %v344
    %v1845 = vpop.f32.mrb[0].mxu0
    %v1846 = vadd.f32 %v1685, %v1845
    %v1847 = vpop.f32.mrb[0].mxu0
    %v1848 = vadd.f32 %v1687, %v1847
    %1849 = vmatprep.mubr.f32.mxu0 %v361
    %1850 = vmatmul.mubr.f32.gmra.mrb[0].mxu0 %v360
    %v1851 = vpop.f32.mrb[0].mxu0
    %v1852 = vadd.f32 %v1691, %v1851
    %v1853 = vpop.f32.mrb[0].mxu0
    %v1854 = vadd.f32 %v1693, %v1853
    %1855 = vdwg.mxu0
    %1856 = vmatprep.subr.mxu0 %v751
    %1857 = vmatpush1.msra.mxu0 %v750
    %1858 = vmatprep.subr.mxu0 %v753
    %1859 = vmatpush1.msra.mxu0 %v752
    %1860 = vmatprep.subr.mxu0 %v755
    %1861 = vmatpush1.msra.mxu0 %v754
    %1862 = vmatprep.subr.mxu0 %v757
    %1863 = vmatpush1.msra.mxu0 %v756
    %1864 = vmatprep.subr.mxu0 %v759
    %1865 = vmatpush1.msra.mxu0 %v758
    %1866 = vmatprep.subr.mxu0 %v761
    %1867 = vmatpush1.msra.mxu0 %v760
    %1868 = vmatprep.subr.mxu0 %v763
    %1869 = vmatpush1.msra.mxu0 %v762
    %1870 = vmatprep.subr.mxu0 %v765
    %1871 = vmatpush1.msra.mxu0 %v764
    %1872 = vmatprep.subr.mxu0 %v767
    %1873 = vmatpush1.msra.mxu0 %v766
    %1874 = vmatprep.subr.mxu0 %v769
    %1875 = vmatpush1.msra.mxu0 %v768
    %1876 = vmatprep.subr.mxu0 %v771
    %1877 = vmatpush1.msra.mxu0 %v770
    %1878 = vmatprep.subr.mxu0 %v773
    %1879 = vmatpush1.msra.mxu0 %v772
    %1880 = vmatprep.subr.mxu0 %v775
    %1881 = vmatpush1.msra.mxu0 %v774
    %1882 = vmatprep.subr.mxu0 %v777
    %1883 = vmatpush1.msra.mxu0 %v776
    %1884 = vmatprep.subr.mxu0 %v779
    %1885 = vmatpush1.msra.mxu0 %v778
    %1886 = vmatprep.subr.mxu0 %v781
    %1887 = vmatpush1.msra.mxu0 %v780
    %1888 = vmatprep.subr.mxu0 %v783
    %1889 = vmatpush1.msra.mxu0 %v782
    %1890 = vmatprep.subr.mxu0 %v785
    %1891 = vmatpush1.msra.mxu0 %v784
    %1892 = vmatprep.subr.mxu0 %v787
    %1893 = vmatpush1.msra.mxu0 %v786
    %1894 = vmatprep.subr.mxu0 %v789
    %1895 = vmatpush1.msra.mxu0 %v788
    %1896 = vmatprep.subr.mxu0 %v791
    %1897 = vmatpush1.msra.mxu0 %v790
    %1898 = vmatprep.subr.mxu0 %v793
    %1899 = vmatpush1.msra.mxu0 %v792
    %1900 = vmatprep.subr.mxu0 %v795
    %1901 = vmatpush1.msra.mxu0 %v794
    %1902 = vmatprep.subr.mxu0 %v797
    %1903 = vmatpush1.msra.mxu0 %v796
    %1904 = vmatprep.subr.mxu0 %v799
    %1905 = vmatpush1.msra.mxu0 %v798
    %1906 = vmatprep.subr.mxu0 %v801
    %1907 = vmatpush1.msra.mxu0 %v800
    %1908 = vmatprep.subr.mxu0 %v803
    %1909 = vmatpush1.msra.mxu0 %v802
    %1910 = vmatprep.subr.mxu0 %v805
    %1911 = vmatpush1.msra.mxu0 %v804
    %1912 = vmatprep.subr.mxu0 %v807
    %1913 = vmatpush1.msra.mxu0 %v806
    %1914 = vmatprep.subr.mxu0 %v809
    %1915 = vmatpush1.msra.mxu0 %v808
    %1916 = vmatprep.subr.mxu0 %v811
    %1917 = vmatpush1.msra.mxu0 %v810
    %1918 = vmatprep.subr.mxu0 %v813
    %1919 = vmatpush1.msra.mxu0 %v812
    %1920 = vmatprep.mubr.f32.mxu0 %v123
    %1921 = vmatmul.mubr.f32.gmra.mrb[0].mxu0 %v122
    %v1922 = vpop.f32.mrb[0].mxu0
    %v1923 = vadd.f32 %v1762, %v1922
    %v1924 = vpop.f32.mrb[0].mxu0
    %v1925 = vadd.f32 %v1764, %v1924
    %1926 = vmatprep.mubr.f32.mxu0 %v139
    %1927 = vmatmul.mubr.f32.gmra.mrb[0].mxu0 %v138
    %v1928 = vpop.f32.mrb[0].mxu0
    %v1929 = vadd.f32 %v1768, %v1928
    %v1930 = vpop.f32.mrb[0].mxu0
    %v1931 = vadd.f32 %v1770, %v1930
    %1932 = vmatprep.mubr.f32.mxu0 %v155
    %1933 = vmatmul.mubr.f32.gmra.mrb[0].mxu0 %v154
    %v1934 = vpop.f32.mrb[0].mxu0
    %v1935 = vadd.f32 %v1774, %v1934
    %v1936 = vpop.f32.mrb[0].mxu0
    %v1937 = vadd.f32 %v1776, %v1936
    %1938 = vmatprep.mubr.f32.mxu0 %v171
    %1939 = vmatmul.mubr.f32.gmra.mrb[0].mxu0 %v170
    %v1940 = vpop.f32.mrb[0].mxu0
    %v1941 = vadd.f32 %v1780, %v1940
    %v1942 = vpop.f32.mrb[0].mxu0
    %v1943 = vadd.f32 %v1782, %v1942
    %1944 = vmatprep.mubr.f32.mxu0 %v187
    %1945 = vmatmul.mubr.f32.gmra.mrb[0].mxu0 %v186
    %v1946 = vpop.f32.mrb[0].mxu0
    %v1947 = vadd.f32 %v1786, %v1946
    %v1948 = vpop.f32.mrb[0].mxu0
    %v1949 = vadd.f32 %v1788, %v1948
    %1950 = vmatprep.mubr.f32.mxu0 %v203
    %1951 = vmatmul.mubr.f32.gmra.mrb[0].mxu0 %v202
    %v1952 = vpop.f32.mrb[0].mxu0
    %v1953 = vadd.f32 %v1792, %v1952
    %v1954 = vpop.f32.mrb[0].mxu0
    %v1955 = vadd.f32 %v1794, %v1954
    %1956 = vmatprep.mubr.f32.mxu0 %v219
    %1957 = vmatmul.mubr.f32.gmra.mrb[0].mxu0 %v218
    %v1958 = vpop.f32.mrb[0].mxu0
    %v1959 = vadd.f32 %v1798, %v1958
    %v1960 = vpop.f32.mrb[0].mxu0
    %v1961 = vadd.f32 %v1800, %v1960
    %1962 = vmatprep.mubr.f32.mxu0 %v235
    %1963 = vmatmul.mubr.f32.gmra.mrb[0].mxu0 %v234
    %v1964 = vpop.f32.mrb[0].mxu0
    %v1965 = vadd.f32 %v1804, %v1964
    %v1966 = vpop.f32.mrb[0].mxu0
    %v1967 = vadd.f32 %v1806, %v1966
    %1968 = vmatprep.mubr.f32.mxu0 %v251
    %1969 = vmatmul.mubr.f32.gmra.mrb[0].mxu0 %v250
    %v1970 = vpop.f32.mrb[0].mxu0
    %v1971 = vadd.f32 %v1810, %v1970
    %v1972 = vpop.f32.mrb[0].mxu0
    %v1973 = vadd.f32 %v1812, %v1972
    %1974 = vmatprep.mubr.f32.mxu0 %v267
    %1975 = vmatmul.mubr.f32.gmra.mrb[0].mxu0 %v266
    %v1976 = vpop.f32.mrb[0].mxu0
    %v1977 = vadd.f32 %v1816, %v1976
    %v1978 = vpop.f32.mrb[0].mxu0
    %v1979 = vadd.f32 %v1818, %v1978
    %1980 = vmatprep.mubr.f32.mxu0 %v283
    %1981 = vmatmul.mubr.f32.gmra.mrb[0].mxu0 %v282
    %v1982 = vpop.f32.mrb[0].mxu0
    %v1983 = vadd.f32 %v1822, %v1982
    %v1984 = vpop.f32.mrb[0].mxu0
    %v1985 = vadd.f32 %v1824, %v1984
    %1986 = vmatprep.mubr.f32.mxu0 %v299
    %1987 = vmatmul.mubr.f32.gmra.mrb[0].mxu0 %v298
    %v1988 = vpop.f32.mrb[0].mxu0
    %v1989 = vadd.f32 %v1828, %v1988
    %v1990 = vpop.f32.mrb[0].mxu0
    %v1991 = vadd.f32 %v1830, %v1990
    %1992 = vmatprep.mubr.f32.mxu0 %v315
    %1993 = vmatmul.mubr.f32.gmra.mrb[0].mxu0 %v314
    %v1994 = vpop.f32.mrb[0].mxu0
    %v1995 = vadd.f32 %v1834, %v1994
    %v1996 = vpop.f32.mrb[0].mxu0
    %v1997 = vadd.f32 %v1836, %v1996
    %1998 = vmatprep.mubr.f32.mxu0 %v331
    %1999 = vmatmul.mubr.f32.gmra.mrb[0].mxu0 %v330
    %v2000 = vpop.f32.mrb[0].mxu0
    %v2001 = vadd.f32 %v1840, %v2000
    %v2002 = vpop.f32.mrb[0].mxu0
    %v2003 = vadd.f32 %v1842, %v2002
    %2004 = vmatprep.mubr.f32.mxu0 %v347
    %2005 = vmatmul.mubr.f32.gmra.mrb[0].mxu0 %v346
    %v2006 = vpop.f32.mrb[0].mxu0
    %v2007 = vadd.f32 %v1846, %v2006
    %v2008 = vpop.f32.mrb[0].mxu0
    %v2009 = vadd.f32 %v1848, %v2008
    %2010 = vmatprep.mubr.f32.mxu0 %v363
    %2011 = vmatmul.mubr.f32.gmra.mrb[0].mxu0 %v362
    %v2012 = vpop.f32.mrb[0].mxu0
    %v2013 = vadd.f32 %v1852, %v2012
    %v2014 = vpop.f32.mrb[0].mxu0
    %v2015 = vadd.f32 %v1854, %v2014
    %2016 = vdwg.mxu0
    %2017 = vmatprep.subr.mxu0 %v815
    %2018 = vmatpush1.msra.mxu0 %v814
    %2019 = vmatprep.subr.mxu0 %v817
    %2020 = vmatpush1.msra.mxu0 %v816
    %2021 = vmatprep.subr.mxu0 %v819
    %2022 = vmatpush1.msra.mxu0 %v818
    %2023 = vmatprep.subr.mxu0 %v821
    %2024 = vmatpush1.msra.mxu0 %v820
    %2025 = vmatprep.subr.mxu0 %v823
    %2026 = vmatpush1.msra.mxu0 %v822
    %2027 = vmatprep.subr.mxu0 %v825
    %2028 = vmatpush1.msra.mxu0 %v824
    %2029 = vmatprep.subr.mxu0 %v827
    %2030 = vmatpush1.msra.mxu0 %v826
    %2031 = vmatprep.subr.mxu0 %v829
    %2032 = vmatpush1.msra.mxu0 %v828
    %2033 = vmatprep.subr.mxu0 %v831
    %2034 = vmatpush1.msra.mxu0 %v830
    %2035 = vmatprep.subr.mxu0 %v833
    %2036 = vmatpush1.msra.mxu0 %v832
    %2037 = vmatprep.subr.mxu0 %v835
    %2038 = vmatpush1.msra.mxu0 %v834
    %2039 = vmatprep.subr.mxu0 %v837
    %2040 = vmatpush1.msra.mxu0 %v836
    %2041 = vmatprep.subr.mxu0 %v839
    %2042 = vmatpush1.msra.mxu0 %v838
    %2043 = vmatprep.subr.mxu0 %v841
    %2044 = vmatpush1.msra.mxu0 %v840
    %2045 = vmatprep.subr.mxu0 %v843
    %2046 = vmatpush1.msra.mxu0 %v842
    %2047 = vmatprep.subr.mxu0 %v845
    %2048 = vmatpush1.msra.mxu0 %v844
    %2049 = vmatprep.subr.mxu0 %v847
    %2050 = vmatpush1.msra.mxu0 %v846
    %2051 = vmatprep.subr.mxu0 %v849
    %2052 = vmatpush1.msra.mxu0 %v848
    %2053 = vmatprep.subr.mxu0 %v851
    %2054 = vmatpush1.msra.mxu0 %v850
    %2055 = vmatprep.subr.mxu0 %v853
    %2056 = vmatpush1.msra.mxu0 %v852
    %2057 = vmatprep.subr.mxu0 %v855
    %2058 = vmatpush1.msra.mxu0 %v854
    %2059 = vmatprep.subr.mxu0 %v857
    %2060 = vmatpush1.msra.mxu0 %v856
    %2061 = vmatprep.subr.mxu0 %v859
    %2062 = vmatpush1.msra.mxu0 %v858
    %2063 = vmatprep.subr.mxu0 %v861
    %2064 = vmatpush1.msra.mxu0 %v860
    %2065 = vmatprep.subr.mxu0 %v863
    %2066 = vmatpush1.msra.mxu0 %v862
    %2067 = vmatprep.subr.mxu0 %v865
    %2068 = vmatpush1.msra.mxu0 %v864
    %2069 = vmatprep.subr.mxu0 %v867
    %2070 = vmatpush1.msra.mxu0 %v866
    %2071 = vmatprep.subr.mxu0 %v869
    %2072 = vmatpush1.msra.mxu0 %v868
    %2073 = vmatprep.subr.mxu0 %v871
    %2074 = vmatpush1.msra.mxu0 %v870
    %2075 = vmatprep.subr.mxu0 %v873
    %2076 = vmatpush1.msra.mxu0 %v872
    %2077 = vmatprep.subr.mxu0 %v875
    %2078 = vmatpush1.msra.mxu0 %v874
    %2079 = vmatprep.subr.mxu0 %v877
    %2080 = vmatpush1.msra.mxu0 %v876
    %2081 = vmatprep.mubr.f32.mxu0 %v125
    %2082 = vmatmul.mubr.f32.gmra.mrb[0].mxu0 %v124
    %v2083 = vpop.f32.mrb[0].mxu0
    %v2084 = vadd.f32 %v1923, %v2083
    %v2085 = vpop.f32.mrb[0].mxu0
    %v2086 = vadd.f32 %v1925, %v2085
    %2087 = vmatprep.mubr.f32.mxu0 %v141
    %2088 = vmatmul.mubr.f32.gmra.mrb[0].mxu0 %v140
    %v2089 = vpop.f32.mrb[0].mxu0
    %v2090 = vadd.f32 %v1929, %v2089
    %v2091 = vpop.f32.mrb[0].mxu0
    %v2092 = vadd.f32 %v1931, %v2091
    %2093 = vmatprep.mubr.f32.mxu0 %v157
    %2094 = vmatmul.mubr.f32.gmra.mrb[0].mxu0 %v156
    %v2095 = vpop.f32.mrb[0].mxu0
    %v2096 = vadd.f32 %v1935, %v2095
    %v2097 = vpop.f32.mrb[0].mxu0
    %v2098 = vadd.f32 %v1937, %v2097
    %2099 = vmatprep.mubr.f32.mxu0 %v173
    %2100 = vmatmul.mubr.f32.gmra.mrb[0].mxu0 %v172
    %v2101 = vpop.f32.mrb[0].mxu0
    %v2102 = vadd.f32 %v1941, %v2101
    %v2103 = vpop.f32.mrb[0].mxu0
    %v2104 = vadd.f32 %v1943, %v2103
    %2105 = vmatprep.mubr.f32.mxu0 %v189
    %2106 = vmatmul.mubr.f32.gmra.mrb[0].mxu0 %v188
    %v2107 = vpop.f32.mrb[0].mxu0
    %v2108 = vadd.f32 %v1947, %v2107
    %v2109 = vpop.f32.mrb[0].mxu0
    %v2110 = vadd.f32 %v1949, %v2109
    %2111 = vmatprep.mubr.f32.mxu0 %v205
    %2112 = vmatmul.mubr.f32.gmra.mrb[0].mxu0 %v204
    %v2113 = vpop.f32.mrb[0].mxu0
    %v2114 = vadd.f32 %v1953, %v2113
    %v2115 = vpop.f32.mrb[0].mxu0
    %v2116 = vadd.f32 %v1955, %v2115
    %2117 = vmatprep.mubr.f32.mxu0 %v221
    %2118 = vmatmul.mubr.f32.gmra.mrb[0].mxu0 %v220
    %v2119 = vpop.f32.mrb[0].mxu0
    %v2120 = vadd.f32 %v1959, %v2119
    %v2121 = vpop.f32.mrb[0].mxu0
    %v2122 = vadd.f32 %v1961, %v2121
    %2123 = vmatprep.mubr.f32.mxu0 %v237
    %2124 = vmatmul.mubr.f32.gmra.mrb[0].mxu0 %v236
    %v2125 = vpop.f32.mrb[0].mxu0
    %v2126 = vadd.f32 %v1965, %v2125
    %v2127 = vpop.f32.mrb[0].mxu0
    %v2128 = vadd.f32 %v1967, %v2127
    %2129 = vmatprep.mubr.f32.mxu0 %v253
    %2130 = vmatmul.mubr.f32.gmra.mrb[0].mxu0 %v252
    %v2131 = vpop.f32.mrb[0].mxu0
    %v2132 = vadd.f32 %v1971, %v2131
    %v2133 = vpop.f32.mrb[0].mxu0
    %v2134 = vadd.f32 %v1973, %v2133
    %2135 = vmatprep.mubr.f32.mxu0 %v269
    %2136 = vmatmul.mubr.f32.gmra.mrb[0].mxu0 %v268
    %v2137 = vpop.f32.mrb[0].mxu0
    %v2138 = vadd.f32 %v1977, %v2137
    %v2139 = vpop.f32.mrb[0].mxu0
    %v2140 = vadd.f32 %v1979, %v2139
    %2141 = vmatprep.mubr.f32.mxu0 %v285
    %2142 = vmatmul.mubr.f32.gmra.mrb[0].mxu0 %v284
    %v2143 = vpop.f32.mrb[0].mxu0
    %v2144 = vadd.f32 %v1983, %v2143
    %v2145 = vpop.f32.mrb[0].mxu0
    %v2146 = vadd.f32 %v1985, %v2145
    %2147 = vmatprep.mubr.f32.mxu0 %v301
    %2148 = vmatmul.mubr.f32.gmra.mrb[0].mxu0 %v300
    %v2149 = vpop.f32.mrb[0].mxu0
    %v2150 = vadd.f32 %v1989, %v2149
    %v2151 = vpop.f32.mrb[0].mxu0
    %v2152 = vadd.f32 %v1991, %v2151
    %2153 = vmatprep.mubr.f32.mxu0 %v317
    %2154 = vmatmul.mubr.f32.gmra.mrb[0].mxu0 %v316
    %v2155 = vpop.f32.mrb[0].mxu0
    %v2156 = vadd.f32 %v1995, %v2155
    %v2157 = vpop.f32.mrb[0].mxu0
    %v2158 = vadd.f32 %v1997, %v2157
    %2159 = vmatprep.mubr.f32.mxu0 %v333
    %2160 = vmatmul.mubr.f32.gmra.mrb[0].mxu0 %v332
    %v2161 = vpop.f32.mrb[0].mxu0
    %v2162 = vadd.f32 %v2001, %v2161
    %v2163 = vpop.f32.mrb[0].mxu0
    %v2164 = vadd.f32 %v2003, %v2163
    %2165 = vmatprep.mubr.f32.mxu0 %v349
    %2166 = vmatmul.mubr.f32.gmra.mrb[0].mxu0 %v348
    %v2167 = vpop.f32.mrb[0].mxu0
    %v2168 = vadd.f32 %v2007, %v2167
    %v2169 = vpop.f32.mrb[0].mxu0
    %v2170 = vadd.f32 %v2009, %v2169
    %2171 = vmatprep.mubr.f32.mxu0 %v365
    %2172 = vmatmul.mubr.f32.gmra.mrb[0].mxu0 %v364
    %v2173 = vpop.f32.mrb[0].mxu0
    %v2174 = vadd.f32 %v2013, %v2173
    %v2175 = vpop.f32.mrb[0].mxu0
    %v2176 = vadd.f32 %v2015, %v2175
    %2177 = vdwg.mxu0
    %vm2178 = vcmp.gt.f32.partialorder %v2084, 0.0
    %vm2179 = vcmp.gt.f32.partialorder %v2086, 0.0
    %vm2180 = vcmp.gt.f32.partialorder %v2090, 0.0
    %vm2181 = vcmp.gt.f32.partialorder %v2092, 0.0
    %vm2182 = vcmp.gt.f32.partialorder %v2096, 0.0
    %vm2183 = vcmp.gt.f32.partialorder %v2098, 0.0
    %vm2184 = vcmp.gt.f32.partialorder %v2102, 0.0
    %vm2185 = vcmp.gt.f32.partialorder %v2104, 0.0
    %vm2186 = vcmp.gt.f32.partialorder %v2108, 0.0
    %vm2187 = vcmp.gt.f32.partialorder %v2110, 0.0
    %vm2188 = vcmp.gt.f32.partialorder %v2114, 0.0
    %vm2189 = vcmp.gt.f32.partialorder %v2116, 0.0
    %vm2190 = vcmp.gt.f32.partialorder %v2120, 0.0
    %vm2191 = vcmp.gt.f32.partialorder %v2122, 0.0
    %vm2192 = vcmp.gt.f32.partialorder %v2126, 0.0
    %vm2193 = vcmp.gt.f32.partialorder %v2128, 0.0
    %vm2194 = vcmp.gt.f32.partialorder %v2132, 0.0
    %vm2195 = vcmp.gt.f32.partialorder %v2134, 0.0
    %vm2196 = vcmp.gt.f32.partialorder %v2138, 0.0
    %vm2197 = vcmp.gt.f32.partialorder %v2140, 0.0
    %vm2198 = vcmp.gt.f32.partialorder %v2144, 0.0
    %vm2199 = vcmp.gt.f32.partialorder %v2146, 0.0
    %vm2200 = vcmp.gt.f32.partialorder %v2150, 0.0
    %vm2201 = vcmp.gt.f32.partialorder %v2152, 0.0
    %vm2202 = vcmp.gt.f32.partialorder %v2156, 0.0
    %vm2203 = vcmp.gt.f32.partialorder %v2158, 0.0
    %vm2204 = vcmp.gt.f32.partialorder %v2162, 0.0
    %vm2205 = vcmp.gt.f32.partialorder %v2164, 0.0
    %vm2206 = vcmp.gt.f32.partialorder %v2168, 0.0
    %vm2207 = vcmp.gt.f32.partialorder %v2170, 0.0
    %vm2208 = vcmp.gt.f32.partialorder %v2174, 0.0
    %vm2209 = vcmp.gt.f32.partialorder %v2176, 0.0
    %v2210 = vmul.f32 %v2084, 0.01
    %v2211 = vmul.f32 %v2086, 0.01
    %v2212 = vmul.f32 %v2090, 0.01
    %v2213 = vmul.f32 %v2092, 0.01
    %v2214 = vmul.f32 %v2096, 0.01
    %v2215 = vmul.f32 %v2098, 0.01
    %v2216 = vmul.f32 %v2102, 0.01
    %v2217 = vmul.f32 %v2104, 0.01
    %v2218 = vmul.f32 %v2108, 0.01
    %v2219 = vmul.f32 %v2110, 0.01
    %v2220 = vmul.f32 %v2114, 0.01
    %v2221 = vmul.f32 %v2116, 0.01
    %v2222 = vmul.f32 %v2120, 0.01
    %v2223 = vmul.f32 %v2122, 0.01
    %v2224 = vmul.f32 %v2126, 0.01
    %v2225 = vmul.f32 %v2128, 0.01
    %v2226 = vmul.f32 %v2132, 0.01
    %v2227 = vmul.f32 %v2134, 0.01
    %v2228 = vmul.f32 %v2138, 0.01
    %v2229 = vmul.f32 %v2140, 0.01
    %v2230 = vmul.f32 %v2144, 0.01
    %v2231 = vmul.f32 %v2146, 0.01
    %v2232 = vmul.f32 %v2150, 0.01
    %v2233 = vmul.f32 %v2152, 0.01
    %v2234 = vmul.f32 %v2156, 0.01
    %v2235 = vmul.f32 %v2158, 0.01
    %v2236 = vmul.f32 %v2162, 0.01
    %v2237 = vmul.f32 %v2164, 0.01
    %v2238 = vmul.f32 %v2168, 0.01
    %v2239 = vmul.f32 %v2170, 0.01
    %v2240 = vmul.f32 %v2174, 0.01
    %v2241 = vmul.f32 %v2176, 0.01
    %v2242 = vsel %vm2178, %v2084, %v2210
    %v2243 = vsel %vm2179, %v2086, %v2211
    %v2244 = vsel %vm2180, %v2090, %v2212
    %v2245 = vsel %vm2181, %v2092, %v2213
    %v2246 = vsel %vm2182, %v2096, %v2214
    %v2247 = vsel %vm2183, %v2098, %v2215
    %v2248 = vsel %vm2184, %v2102, %v2216
    %v2249 = vsel %vm2185, %v2104, %v2217
    %v2250 = vsel %vm2186, %v2108, %v2218
    %v2251 = vsel %vm2187, %v2110, %v2219
    %v2252 = vsel %vm2188, %v2114, %v2220
    %v2253 = vsel %vm2189, %v2116, %v2221
    %v2254 = vsel %vm2190, %v2120, %v2222
    %v2255 = vsel %vm2191, %v2122, %v2223
    %v2256 = vsel %vm2192, %v2126, %v2224
    %v2257 = vsel %vm2193, %v2128, %v2225
    %v2258 = vsel %vm2194, %v2132, %v2226
    %v2259 = vsel %vm2195, %v2134, %v2227
    %v2260 = vsel %vm2196, %v2138, %v2228
    %v2261 = vsel %vm2197, %v2140, %v2229
    %v2262 = vsel %vm2198, %v2144, %v2230
    %v2263 = vsel %vm2199, %v2146, %v2231
    %v2264 = vsel %vm2200, %v2150, %v2232
    %v2265 = vsel %vm2201, %v2152, %v2233
    %v2266 = vsel %vm2202, %v2156, %v2234
    %v2267 = vsel %vm2203, %v2158, %v2235
    %v2268 = vsel %vm2204, %v2162, %v2236
    %v2269 = vsel %vm2205, %v2164, %v2237
    %v2270 = vsel %vm2206, %v2168, %v2238
    %v2271 = vsel %vm2207, %v2170, %v2239
    %v2272 = vsel %vm2208, %v2174, %v2240
    %v2273 = vsel %vm2209, %v2176, %v2241
    %v2274 = vld [vmem:[#allocation7] sm:$0xff]
    %v2275 = vld [vmem:[#allocation7 + $0x8] sm:$0xff]
    %v2276 = vld [vmem:[#allocation7 + $0x10] sm:$0xff]
    %v2277 = vld [vmem:[#allocation7 + $0x18] sm:$0xff]
    %v2278 = vld [vmem:[#allocation7 + $0x20] sm:$0xff]
    %v2279 = vld [vmem:[#allocation7 + $0x28] sm:$0xff]
    %v2280 = vld [vmem:[#allocation7 + $0x30] sm:$0xff]
    %v2281 = vld [vmem:[#allocation7 + $0x38] sm:$0xff]
    %v2282 = vld [vmem:[#allocation7 + $0x40] sm:$0xff]
    %v2283 = vld [vmem:[#allocation7 + $0x48] sm:$0xff]
    %v2284 = vld [vmem:[#allocation7 + $0x50] sm:$0xff]
    %v2285 = vld [vmem:[#allocation7 + $0x58] sm:$0xff]
    %v2286 = vld [vmem:[#allocation7 + $0x60] sm:$0xff]
    %v2287 = vld [vmem:[#allocation7 + $0x68] sm:$0xff]
    %v2288 = vld [vmem:[#allocation7 + $0x70] sm:$0xff]
    %v2289 = vld [vmem:[#allocation7 + $0x78] sm:$0xff]
    %v2290 = vld [vmem:[#allocation7 + $0x80] sm:$0xff]
    %v2291 = vld [vmem:[#allocation7 + $0x88] sm:$0xff]
    %v2292 = vld [vmem:[#allocation7 + $0x90] sm:$0xff]
    %v2293 = vld [vmem:[#allocation7 + $0x98] sm:$0xff]
    %v2294 = vld [vmem:[#allocation7 + $0xa0] sm:$0xff]
    %v2295 = vld [vmem:[#allocation7 + $0xa8] sm:$0xff]
    %v2296 = vld [vmem:[#allocation7 + $0xb0] sm:$0xff]
    %v2297 = vld [vmem:[#allocation7 + $0xb8] sm:$0xff]
    %v2298 = vld [vmem:[#allocation7 + $0xc0] sm:$0xff]
    %v2299 = vld [vmem:[#allocation7 + $0xc8] sm:$0xff]
    %v2300 = vld [vmem:[#allocation7 + $0xd0] sm:$0xff]
    %v2301 = vld [vmem:[#allocation7 + $0xd8] sm:$0xff]
    %v2302 = vld [vmem:[#allocation7 + $0xe0] sm:$0xff]
    %v2303 = vld [vmem:[#allocation7 + $0xe8] sm:$0xff]
    %v2304 = vld [vmem:[#allocation7 + $0xf0] sm:$0xff]
    %v2305 = vld [vmem:[#allocation7 + $0xf8] sm:$0xff]
    %v2306 = vld [vmem:[#allocation7 + $0x100] sm:$0xff]
    %v2307 = vld [vmem:[#allocation7 + $0x108] sm:$0xff]
    %v2308 = vld [vmem:[#allocation7 + $0x110] sm:$0xff]
    %v2309 = vld [vmem:[#allocation7 + $0x118] sm:$0xff]
    %v2310 = vld [vmem:[#allocation7 + $0x120] sm:$0xff]
    %v2311 = vld [vmem:[#allocation7 + $0x128] sm:$0xff]
    %v2312 = vld [vmem:[#allocation7 + $0x130] sm:$0xff]
    %v2313 = vld [vmem:[#allocation7 + $0x138] sm:$0xff]
    %v2314 = vld [vmem:[#allocation7 + $0x140] sm:$0xff]
    %v2315 = vld [vmem:[#allocation7 + $0x148] sm:$0xff]
    %v2316 = vld [vmem:[#allocation7 + $0x150] sm:$0xff]
    %v2317 = vld [vmem:[#allocation7 + $0x158] sm:$0xff]
    %v2318 = vld [vmem:[#allocation7 + $0x160] sm:$0xff]
    %v2319 = vld [vmem:[#allocation7 + $0x168] sm:$0xff]
    %v2320 = vld [vmem:[#allocation7 + $0x170] sm:$0xff]
    %v2321 = vld [vmem:[#allocation7 + $0x178] sm:$0xff]
    %v2322 = vld [vmem:[#allocation7 + $0x180] sm:$0xff]
    %v2323 = vld [vmem:[#allocation7 + $0x188] sm:$0xff]
    %v2324 = vld [vmem:[#allocation7 + $0x190] sm:$0xff]
    %v2325 = vld [vmem:[#allocation7 + $0x198] sm:$0xff]
    %v2326 = vld [vmem:[#allocation7 + $0x1a0] sm:$0xff]
    %v2327 = vld [vmem:[#allocation7 + $0x1a8] sm:$0xff]
    %v2328 = vld [vmem:[#allocation7 + $0x1b0] sm:$0xff]
    %v2329 = vld [vmem:[#allocation7 + $0x1b8] sm:$0xff]
    %v2330 = vld [vmem:[#allocation7 + $0x1c0] sm:$0xff]
    %v2331 = vld [vmem:[#allocation7 + $0x1c8] sm:$0xff]
    %v2332 = vld [vmem:[#allocation7 + $0x1d0] sm:$0xff]
    %v2333 = vld [vmem:[#allocation7 + $0x1d8] sm:$0xff]
    %v2334 = vld [vmem:[#allocation7 + $0x1e0] sm:$0xff]
    %v2335 = vld [vmem:[#allocation7 + $0x1e8] sm:$0xff]
    %v2336 = vld [vmem:[#allocation7 + $0x1f0] sm:$0xff]
    %v2337 = vld [vmem:[#allocation7 + $0x1f8] sm:$0xff]
    %v2338 = vld [vmem:[#allocation8] sm:$0x3]
    %v2340 = vlaneseq
    %v2341 = vshrl.u32 %v2340, 7
    %v2342 = vsub.s32 0, %v2341
    %v2343 = vrot.slane %v2338, %v2342
    %v2344 = vlaneseq
    %v2345 = vshrl.u32 %v2344, 7
    %v2346 = vsub.s32 1, %v2345
    %v2347 = vrot.slane %v2338, %v2346
    %2350 = vmatprep.subr.mxu0 %v2275
    %2351 = vmatpush1.msra.mxu0 %v2274
    %2352 = vmatprep.subr.mxu0 %v2277
    %2353 = vmatpush1.msra.mxu0 %v2276
    %2354 = vmatprep.subr.mxu0 %v2279
    %2355 = vmatpush1.msra.mxu0 %v2278
    %2356 = vmatprep.subr.mxu0 %v2281
    %2357 = vmatpush1.msra.mxu0 %v2280
    %2358 = vmatprep.subr.mxu0 %v2283
    %2359 = vmatpush1.msra.mxu0 %v2282
    %2360 = vmatprep.subr.mxu0 %v2285
    %2361 = vmatpush1.msra.mxu0 %v2284
    %2362 = vmatprep.subr.mxu0 %v2287
    %2363 = vmatpush1.msra.mxu0 %v2286
    %2364 = vmatprep.subr.mxu0 %v2289
    %2365 = vmatpush1.msra.mxu0 %v2288
    %2366 = vmatprep.subr.mxu0 %v2291
    %2367 = vmatpush1.msra.mxu0 %v2290
    %2368 = vmatprep.subr.mxu0 %v2293
    %2369 = vmatpush1.msra.mxu0 %v2292
    %2370 = vmatprep.subr.mxu0 %v2295
    %2371 = vmatpush1.msra.mxu0 %v2294
    %2372 = vmatprep.subr.mxu0 %v2297
    %2373 = vmatpush1.msra.mxu0 %v2296
    %2374 = vmatprep.subr.mxu0 %v2299
    %2375 = vmatpush1.msra.mxu0 %v2298
    %2376 = vmatprep.subr.mxu0 %v2301
    %2377 = vmatpush1.msra.mxu0 %v2300
    %2378 = vmatprep.subr.mxu0 %v2303
    %2379 = vmatpush1.msra.mxu0 %v2302
    %2380 = vmatprep.subr.mxu0 %v2305
    %2381 = vmatpush1.msra.mxu0 %v2304
    %2382 = vmatprep.subr.mxu0 %v2307
    %2383 = vmatpush1.msra.mxu0 %v2306
    %2384 = vmatprep.subr.mxu0 %v2309
    %2385 = vmatpush1.msra.mxu0 %v2308
    %2386 = vmatprep.subr.mxu0 %v2311
    %2387 = vmatpush1.msra.mxu0 %v2310
    %2388 = vmatprep.subr.mxu0 %v2313
    %2389 = vmatpush1.msra.mxu0 %v2312
    %2390 = vmatprep.subr.mxu0 %v2315
    %2391 = vmatpush1.msra.mxu0 %v2314
    %2392 = vmatprep.subr.mxu0 %v2317
    %2393 = vmatpush1.msra.mxu0 %v2316
    %2394 = vmatprep.subr.mxu0 %v2319
    %2395 = vmatpush1.msra.mxu0 %v2318
    %2396 = vmatprep.subr.mxu0 %v2321
    %2397 = vmatpush1.msra.mxu0 %v2320
    %2398 = vmatprep.subr.mxu0 %v2323
    %2399 = vmatpush1.msra.mxu0 %v2322
    %2400 = vmatprep.subr.mxu0 %v2325
    %2401 = vmatpush1.msra.mxu0 %v2324
    %2402 = vmatprep.subr.mxu0 %v2327
    %2403 = vmatpush1.msra.mxu0 %v2326
    %2404 = vmatprep.subr.mxu0 %v2329
    %2405 = vmatpush1.msra.mxu0 %v2328
    %2406 = vmatprep.subr.mxu0 %v2331
    %2407 = vmatpush1.msra.mxu0 %v2330
    %2408 = vmatprep.subr.mxu0 %v2333
    %2409 = vmatpush1.msra.mxu0 %v2332
    %2410 = vmatprep.subr.mxu0 %v2335
    %2411 = vmatpush1.msra.mxu0 %v2334
    %2412 = vmatprep.subr.mxu0 %v2337
    %2413 = vmatpush1.msra.mxu0 %v2336
    %2414 = vmatprep.mubr.f32.mxu0 %v2243
    %2415 = vmatmul.mubr.f32.gmra.mrb[0].mxu0 %v2242
    %v2416 = vpop.f32.mrb[0].mxu0
    %v2417 = vadd.f32 %v2343, %v2416
    %v2418 = vpop.f32.mrb[0].mxu0
    %v2419 = vadd.f32 %v2347, %v2418
    %2420 = vmatprep.mubr.f32.mxu0 %v2245
    %2421 = vmatmul.mubr.f32.gmra.mrb[0].mxu0 %v2244
    %v2422 = vpop.f32.mrb[0].mxu0
    %v2423 = vadd.f32 %v2343, %v2422
    %v2424 = vpop.f32.mrb[0].mxu0
    %v2425 = vadd.f32 %v2347, %v2424
    %2426 = vmatprep.mubr.f32.mxu0 %v2247
    %2427 = vmatmul.mubr.f32.gmra.mrb[0].mxu0 %v2246
    %v2428 = vpop.f32.mrb[0].mxu0
    %v2429 = vadd.f32 %v2343, %v2428
    %v2430 = vpop.f32.mrb[0].mxu0
    %v2431 = vadd.f32 %v2347, %v2430
    %2432 = vmatprep.mubr.f32.mxu0 %v2249
    %2433 = vmatmul.mubr.f32.gmra.mrb[0].mxu0 %v2248
    %v2434 = vpop.f32.mrb[0].mxu0
    %v2435 = vadd.f32 %v2343, %v2434
    %v2436 = vpop.f32.mrb[0].mxu0
    %v2437 = vadd.f32 %v2347, %v2436
    %2438 = vmatprep.mubr.f32.mxu0 %v2251
    %2439 = vmatmul.mubr.f32.gmra.mrb[0].mxu0 %v2250
    %v2440 = vpop.f32.mrb[0].mxu0
    %v2441 = vadd.f32 %v2343, %v2440
    %v2442 = vpop.f32.mrb[0].mxu0
    %v2443 = vadd.f32 %v2347, %v2442
    %2444 = vmatprep.mubr.f32.mxu0 %v2253
    %2445 = vmatmul.mubr.f32.gmra.mrb[0].mxu0 %v2252
    %v2446 = vpop.f32.mrb[0].mxu0
    %v2447 = vadd.f32 %v2343, %v2446
    %v2448 = vpop.f32.mrb[0].mxu0
    %v2449 = vadd.f32 %v2347, %v2448
    %2450 = vmatprep.mubr.f32.mxu0 %v2255
    %2451 = vmatmul.mubr.f32.gmra.mrb[0].mxu0 %v2254
    %v2452 = vpop.f32.mrb[0].mxu0
    %v2453 = vadd.f32 %v2343, %v2452
    %v2454 = vpop.f32.mrb[0].mxu0
    %v2455 = vadd.f32 %v2347, %v2454
    %2456 = vmatprep.mubr.f32.mxu0 %v2257
    %2457 = vmatmul.mubr.f32.gmra.mrb[0].mxu0 %v2256
    %v2458 = vpop.f32.mrb[0].mxu0
    %v2459 = vadd.f32 %v2343, %v2458
    %v2460 = vpop.f32.mrb[0].mxu0
    %v2461 = vadd.f32 %v2347, %v2460
    %2462 = vmatprep.mubr.f32.mxu0 %v2259
    %2463 = vmatmul.mubr.f32.gmra.mrb[0].mxu0 %v2258
    %v2464 = vpop.f32.mrb[0].mxu0
    %v2465 = vadd.f32 %v2343, %v2464
    %v2466 = vpop.f32.mrb[0].mxu0
    %v2467 = vadd.f32 %v2347, %v2466
    %2468 = vmatprep.mubr.f32.mxu0 %v2261
    %2469 = vmatmul.mubr.f32.gmra.mrb[0].mxu0 %v2260
    %v2470 = vpop.f32.mrb[0].mxu0
    %v2471 = vadd.f32 %v2343, %v2470
    %v2472 = vpop.f32.mrb[0].mxu0
    %v2473 = vadd.f32 %v2347, %v2472
    %2474 = vmatprep.mubr.f32.mxu0 %v2263
    %2475 = vmatmul.mubr.f32.gmra.mrb[0].mxu0 %v2262
    %v2476 = vpop.f32.mrb[0].mxu0
    %v2477 = vadd.f32 %v2343, %v2476
    %v2478 = vpop.f32.mrb[0].mxu0
    %v2479 = vadd.f32 %v2347, %v2478
    %2480 = vmatprep.mubr.f32.mxu0 %v2265
    %2481 = vmatmul.mubr.f32.gmra.mrb[0].mxu0 %v2264
    %v2482 = vpop.f32.mrb[0].mxu0
    %v2483 = vadd.f32 %v2343, %v2482
    %v2484 = vpop.f32.mrb[0].mxu0
    %v2485 = vadd.f32 %v2347, %v2484
    %2486 = vmatprep.mubr.f32.mxu0 %v2267
    %2487 = vmatmul.mubr.f32.gmra.mrb[0].mxu0 %v2266
    %v2488 = vpop.f32.mrb[0].mxu0
    %v2489 = vadd.f32 %v2343, %v2488
    %v2490 = vpop.f32.mrb[0].mxu0
    %v2491 = vadd.f32 %v2347, %v2490
    %2492 = vmatprep.mubr.f32.mxu0 %v2269
    %2493 = vmatmul.mubr.f32.gmra.mrb[0].mxu0 %v2268
    %v2494 = vpop.f32.mrb[0].mxu0
    %v2495 = vadd.f32 %v2343, %v2494
    %v2496 = vpop.f32.mrb[0].mxu0
    %v2497 = vadd.f32 %v2347, %v2496
    %2498 = vmatprep.mubr.f32.mxu0 %v2271
    %2499 = vmatmul.mubr.f32.gmra.mrb[0].mxu0 %v2270
    %v2500 = vpop.f32.mrb[0].mxu0
    %v2501 = vadd.f32 %v2343, %v2500
    %v2502 = vpop.f32.mrb[0].mxu0
    %v2503 = vadd.f32 %v2347, %v2502
    %2504 = vmatprep.mubr.f32.mxu0 %v2273
    %2505 = vmatmul.mubr.f32.gmra.mrb[0].mxu0 %v2272
    %v2506 = vpop.f32.mrb[0].mxu0
    %v2507 = vadd.f32 %v2343, %v2506
    %v2508 = vpop.f32.mrb[0].mxu0
    %v2509 = vadd.f32 %v2347, %v2508
    %2510 = vdwg.mxu0
    %vm2511 = vcmp.gt.f32.partialorder %v2417, 0.0
    %vm2512 = vcmp.gt.f32.partialorder %v2419, 0.0
    %vm2513 = vcmp.gt.f32.partialorder %v2423, 0.0
    %vm2514 = vcmp.gt.f32.partialorder %v2425, 0.0
    %vm2515 = vcmp.gt.f32.partialorder %v2429, 0.0
    %vm2516 = vcmp.gt.f32.partialorder %v2431, 0.0
    %vm2517 = vcmp.gt.f32.partialorder %v2435, 0.0
    %vm2518 = vcmp.gt.f32.partialorder %v2437, 0.0
    %vm2519 = vcmp.gt.f32.partialorder %v2441, 0.0
    %vm2520 = vcmp.gt.f32.partialorder %v2443, 0.0
    %vm2521 = vcmp.gt.f32.partialorder %v2447, 0.0
    %vm2522 = vcmp.gt.f32.partialorder %v2449, 0.0
    %vm2523 = vcmp.gt.f32.partialorder %v2453, 0.0
    %vm2524 = vcmp.gt.f32.partialorder %v2455, 0.0
    %vm2525 = vcmp.gt.f32.partialorder %v2459, 0.0
    %vm2526 = vcmp.gt.f32.partialorder %v2461, 0.0
    %vm2527 = vcmp.gt.f32.partialorder %v2465, 0.0
    %vm2528 = vcmp.gt.f32.partialorder %v2467, 0.0
    %vm2529 = vcmp.gt.f32.partialorder %v2471, 0.0
    %vm2530 = vcmp.gt.f32.partialorder %v2473, 0.0
    %vm2531 = vcmp.gt.f32.partialorder %v2477, 0.0
    %vm2532 = vcmp.gt.f32.partialorder %v2479, 0.0
    %vm2533 = vcmp.gt.f32.partialorder %v2483, 0.0
    %vm2534 = vcmp.gt.f32.partialorder %v2485, 0.0
    %vm2535 = vcmp.gt.f32.partialorder %v2489, 0.0
    %vm2536 = vcmp.gt.f32.partialorder %v2491, 0.0
    %vm2537 = vcmp.gt.f32.partialorder %v2495, 0.0
    %vm2538 = vcmp.gt.f32.partialorder %v2497, 0.0
    %vm2539 = vcmp.gt.f32.partialorder %v2501, 0.0
    %vm2540 = vcmp.gt.f32.partialorder %v2503, 0.0
    %vm2541 = vcmp.gt.f32.partialorder %v2507, 0.0
    %vm2542 = vcmp.gt.f32.partialorder %v2509, 0.0
    %v2543 = vmul.f32 %v2417, 0.01
    %v2544 = vmul.f32 %v2419, 0.01
    %v2545 = vmul.f32 %v2423, 0.01
    %v2546 = vmul.f32 %v2425, 0.01
    %v2547 = vmul.f32 %v2429, 0.01
    %v2548 = vmul.f32 %v2431, 0.01
    %v2549 = vmul.f32 %v2435, 0.01
    %v2550 = vmul.f32 %v2437, 0.01
    %v2551 = vmul.f32 %v2441, 0.01
    %v2552 = vmul.f32 %v2443, 0.01
    %v2553 = vmul.f32 %v2447, 0.01
    %v2554 = vmul.f32 %v2449, 0.01
    %v2555 = vmul.f32 %v2453, 0.01
    %v2556 = vmul.f32 %v2455, 0.01
    %v2557 = vmul.f32 %v2459, 0.01
    %v2558 = vmul.f32 %v2461, 0.01
    %v2559 = vmul.f32 %v2465, 0.01
    %v2560 = vmul.f32 %v2467, 0.01
    %v2561 = vmul.f32 %v2471, 0.01
    %v2562 = vmul.f32 %v2473, 0.01
    %v2563 = vmul.f32 %v2477, 0.01
    %v2564 = vmul.f32 %v2479, 0.01
    %v2565 = vmul.f32 %v2483, 0.01
    %v2566 = vmul.f32 %v2485, 0.01
    %v2567 = vmul.f32 %v2489, 0.01
    %v2568 = vmul.f32 %v2491, 0.01
    %v2569 = vmul.f32 %v2495, 0.01
    %v2570 = vmul.f32 %v2497, 0.01
    %v2571 = vmul.f32 %v2501, 0.01
    %v2572 = vmul.f32 %v2503, 0.01
    %v2573 = vmul.f32 %v2507, 0.01
    %v2574 = vmul.f32 %v2509, 0.01
    %v2575 = vsel %vm2511, %v2417, %v2543
    %v2576 = vsel %vm2512, %v2419, %v2544
    %v2577 = vsel %vm2513, %v2423, %v2545
    %v2578 = vsel %vm2514, %v2425, %v2546
    %v2579 = vsel %vm2515, %v2429, %v2547
    %v2580 = vsel %vm2516, %v2431, %v2548
    %v2581 = vsel %vm2517, %v2435, %v2549
    %v2582 = vsel %vm2518, %v2437, %v2550
    %v2583 = vsel %vm2519, %v2441, %v2551
    %v2584 = vsel %vm2520, %v2443, %v2552
    %v2585 = vsel %vm2521, %v2447, %v2553
    %v2586 = vsel %vm2522, %v2449, %v2554
    %v2587 = vsel %vm2523, %v2453, %v2555
    %v2588 = vsel %vm2524, %v2455, %v2556
    %v2589 = vsel %vm2525, %v2459, %v2557
    %v2590 = vsel %vm2526, %v2461, %v2558
    %v2591 = vsel %vm2527, %v2465, %v2559
    %v2592 = vsel %vm2528, %v2467, %v2560
    %v2593 = vsel %vm2529, %v2471, %v2561
    %v2594 = vsel %vm2530, %v2473, %v2562
    %v2595 = vsel %vm2531, %v2477, %v2563
    %v2596 = vsel %vm2532, %v2479, %v2564
    %v2597 = vsel %vm2533, %v2483, %v2565
    %v2598 = vsel %vm2534, %v2485, %v2566
    %v2599 = vsel %vm2535, %v2489, %v2567
    %v2600 = vsel %vm2536, %v2491, %v2568
    %v2601 = vsel %vm2537, %v2495, %v2569
    %v2602 = vsel %vm2538, %v2497, %v2570
    %v2603 = vsel %vm2539, %v2501, %v2571
    %v2604 = vsel %vm2540, %v2503, %v2572
    %v2605 = vsel %vm2541, %v2507, %v2573
    %v2606 = vsel %vm2542, %v2509, %v2574
    %v2607 = vld [vmem:[#allocation10] sm:$0xff]
    %v2608 = vld [vmem:[#allocation10 + $0x8] sm:$0xff]
    %v2609 = vld [vmem:[#allocation10 + $0x10] sm:$0xff]
    %v2610 = vld [vmem:[#allocation10 + $0x18] sm:$0xff]
    %v2611 = vld [vmem:[#allocation10 + $0x20] sm:$0xff]
    %v2612 = vld [vmem:[#allocation10 + $0x28] sm:$0xff]
    %v2613 = vld [vmem:[#allocation10 + $0x30] sm:$0xff]
    %v2614 = vld [vmem:[#allocation10 + $0x38] sm:$0xff]
    %v2615 = vld [vmem:[#allocation10 + $0x40] sm:$0xff]
    %v2616 = vld [vmem:[#allocation10 + $0x48] sm:$0xff]
    %v2617 = vld [vmem:[#allocation10 + $0x50] sm:$0xff]
    %v2618 = vld [vmem:[#allocation10 + $0x58] sm:$0xff]
    %v2619 = vld [vmem:[#allocation10 + $0x60] sm:$0xff]
    %v2620 = vld [vmem:[#allocation10 + $0x68] sm:$0xff]
    %v2621 = vld [vmem:[#allocation10 + $0x70] sm:$0xff]
    %v2622 = vld [vmem:[#allocation10 + $0x78] sm:$0xff]
    %v2623 = vld [vmem:[#allocation10 + $0x80] sm:$0xff]
    %v2624 = vld [vmem:[#allocation10 + $0x88] sm:$0xff]
    %v2625 = vld [vmem:[#allocation10 + $0x90] sm:$0xff]
    %v2626 = vld [vmem:[#allocation10 + $0x98] sm:$0xff]
    %v2627 = vld [vmem:[#allocation10 + $0xa0] sm:$0xff]
    %v2628 = vld [vmem:[#allocation10 + $0xa8] sm:$0xff]
    %v2629 = vld [vmem:[#allocation10 + $0xb0] sm:$0xff]
    %v2630 = vld [vmem:[#allocation10 + $0xb8] sm:$0xff]
    %v2631 = vld [vmem:[#allocation10 + $0xc0] sm:$0xff]
    %v2632 = vld [vmem:[#allocation10 + $0xc8] sm:$0xff]
    %v2633 = vld [vmem:[#allocation10 + $0xd0] sm:$0xff]
    %v2634 = vld [vmem:[#allocation10 + $0xd8] sm:$0xff]
    %v2635 = vld [vmem:[#allocation10 + $0xe0] sm:$0xff]
    %v2636 = vld [vmem:[#allocation10 + $0xe8] sm:$0xff]
    %v2637 = vld [vmem:[#allocation10 + $0xf0] sm:$0xff]
    %v2638 = vld [vmem:[#allocation10 + $0xf8] sm:$0xff]
    %v2639 = vld [vmem:[#allocation10 + $0x100] sm:$0xff]
    %v2640 = vld [vmem:[#allocation10 + $0x108] sm:$0xff]
    %v2641 = vld [vmem:[#allocation10 + $0x110] sm:$0xff]
    %v2642 = vld [vmem:[#allocation10 + $0x118] sm:$0xff]
    %v2643 = vld [vmem:[#allocation10 + $0x120] sm:$0xff]
    %v2644 = vld [vmem:[#allocation10 + $0x128] sm:$0xff]
    %v2645 = vld [vmem:[#allocation10 + $0x130] sm:$0xff]
    %v2646 = vld [vmem:[#allocation10 + $0x138] sm:$0xff]
    %v2647 = vld [vmem:[#allocation10 + $0x140] sm:$0xff]
    %v2648 = vld [vmem:[#allocation10 + $0x148] sm:$0xff]
    %v2649 = vld [vmem:[#allocation10 + $0x150] sm:$0xff]
    %v2650 = vld [vmem:[#allocation10 + $0x158] sm:$0xff]
    %v2651 = vld [vmem:[#allocation10 + $0x160] sm:$0xff]
    %v2652 = vld [vmem:[#allocation10 + $0x168] sm:$0xff]
    %v2653 = vld [vmem:[#allocation10 + $0x170] sm:$0xff]
    %v2654 = vld [vmem:[#allocation10 + $0x178] sm:$0xff]
    %v2655 = vld [vmem:[#allocation10 + $0x180] sm:$0xff]
    %v2656 = vld [vmem:[#allocation10 + $0x188] sm:$0xff]
    %v2657 = vld [vmem:[#allocation10 + $0x190] sm:$0xff]
    %v2658 = vld [vmem:[#allocation10 + $0x198] sm:$0xff]
    %v2659 = vld [vmem:[#allocation10 + $0x1a0] sm:$0xff]
    %v2660 = vld [vmem:[#allocation10 + $0x1a8] sm:$0xff]
    %v2661 = vld [vmem:[#allocation10 + $0x1b0] sm:$0xff]
    %v2662 = vld [vmem:[#allocation10 + $0x1b8] sm:$0xff]
    %v2663 = vld [vmem:[#allocation10 + $0x1c0] sm:$0xff]
    %v2664 = vld [vmem:[#allocation10 + $0x1c8] sm:$0xff]
    %v2665 = vld [vmem:[#allocation10 + $0x1d0] sm:$0xff]
    %v2666 = vld [vmem:[#allocation10 + $0x1d8] sm:$0xff]
    %v2667 = vld [vmem:[#allocation10 + $0x1e0] sm:$0xff]
    %v2668 = vld [vmem:[#allocation10 + $0x1e8] sm:$0xff]
    %v2669 = vld [vmem:[#allocation10 + $0x1f0] sm:$0xff]
    %v2670 = vld [vmem:[#allocation10 + $0x1f8] sm:$0xff]
    %v2671 = vld [vmem:[#allocation11] sm:$0x3]
    %v2673 = vlaneseq
    %v2674 = vshrl.u32 %v2673, 7
    %v2675 = vsub.s32 0, %v2674
    %v2676 = vrot.slane %v2671, %v2675
    %v2677 = vlaneseq
    %v2678 = vshrl.u32 %v2677, 7
    %v2679 = vsub.s32 1, %v2678
    %v2680 = vrot.slane %v2671, %v2679
    %2683 = vmatprep.subr.mxu0 %v2608
    %2684 = vmatpush1.msra.mxu0 %v2607
    %2685 = vmatprep.subr.mxu0 %v2610
    %2686 = vmatpush1.msra.mxu0 %v2609
    %2687 = vmatprep.subr.mxu0 %v2612
    %2688 = vmatpush1.msra.mxu0 %v2611
    %2689 = vmatprep.subr.mxu0 %v2614
    %2690 = vmatpush1.msra.mxu0 %v2613
    %2691 = vmatprep.subr.mxu0 %v2616
    %2692 = vmatpush1.msra.mxu0 %v2615
    %2693 = vmatprep.subr.mxu0 %v2618
    %2694 = vmatpush1.msra.mxu0 %v2617
    %2695 = vmatprep.subr.mxu0 %v2620
    %2696 = vmatpush1.msra.mxu0 %v2619
    %2697 = vmatprep.subr.mxu0 %v2622
    %2698 = vmatpush1.msra.mxu0 %v2621
    %2699 = vmatprep.subr.mxu0 %v2624
    %2700 = vmatpush1.msra.mxu0 %v2623
    %2701 = vmatprep.subr.mxu0 %v2626
    %2702 = vmatpush1.msra.mxu0 %v2625
    %2703 = vmatprep.subr.mxu0 %v2628
    %2704 = vmatpush1.msra.mxu0 %v2627
    %2705 = vmatprep.subr.mxu0 %v2630
    %2706 = vmatpush1.msra.mxu0 %v2629
    %2707 = vmatprep.subr.mxu0 %v2632
    %2708 = vmatpush1.msra.mxu0 %v2631
    %2709 = vmatprep.subr.mxu0 %v2634
    %2710 = vmatpush1.msra.mxu0 %v2633
    %2711 = vmatprep.subr.mxu0 %v2636
    %2712 = vmatpush1.msra.mxu0 %v2635
    %2713 = vmatprep.subr.mxu0 %v2638
    %2714 = vmatpush1.msra.mxu0 %v2637
    %2715 = vmatprep.subr.mxu0 %v2640
    %2716 = vmatpush1.msra.mxu0 %v2639
    %2717 = vmatprep.subr.mxu0 %v2642
    %2718 = vmatpush1.msra.mxu0 %v2641
    %2719 = vmatprep.subr.mxu0 %v2644
    %2720 = vmatpush1.msra.mxu0 %v2643
    %2721 = vmatprep.subr.mxu0 %v2646
    %2722 = vmatpush1.msra.mxu0 %v2645
    %2723 = vmatprep.subr.mxu0 %v2648
    %2724 = vmatpush1.msra.mxu0 %v2647
    %2725 = vmatprep.subr.mxu0 %v2650
    %2726 = vmatpush1.msra.mxu0 %v2649
    %2727 = vmatprep.subr.mxu0 %v2652
    %2728 = vmatpush1.msra.mxu0 %v2651
    %2729 = vmatprep.subr.mxu0 %v2654
    %2730 = vmatpush1.msra.mxu0 %v2653
    %2731 = vmatprep.subr.mxu0 %v2656
    %2732 = vmatpush1.msra.mxu0 %v2655
    %2733 = vmatprep.subr.mxu0 %v2658
    %2734 = vmatpush1.msra.mxu0 %v2657
    %2735 = vmatprep.subr.mxu0 %v2660
    %2736 = vmatpush1.msra.mxu0 %v2659
    %2737 = vmatprep.subr.mxu0 %v2662
    %2738 = vmatpush1.msra.mxu0 %v2661
    %2739 = vmatprep.subr.mxu0 %v2664
    %2740 = vmatpush1.msra.mxu0 %v2663
    %2741 = vmatprep.subr.mxu0 %v2666
    %2742 = vmatpush1.msra.mxu0 %v2665
    %2743 = vmatprep.subr.mxu0 %v2668
    %2744 = vmatpush1.msra.mxu0 %v2667
    %2745 = vmatprep.subr.mxu0 %v2670
    %2746 = vmatpush1.msra.mxu0 %v2669
    %2747 = vmatprep.mubr.f32.mxu0 %v2576
    %2748 = vmatmul.mubr.f32.gmra.mrb[0].mxu0 %v2575
    %v2749 = vpop.f32.mrb[0].mxu0
    %v2750 = vadd.f32 %v2676, %v2749
    %v2751 = vpop.f32.mrb[0].mxu0
    %v2752 = vadd.f32 %v2680, %v2751
    %2753 = vmatprep.mubr.f32.mxu0 %v2578
    %2754 = vmatmul.mubr.f32.gmra.mrb[0].mxu0 %v2577
    %v2755 = vpop.f32.mrb[0].mxu0
    %v2756 = vadd.f32 %v2676, %v2755
    %v2757 = vpop.f32.mrb[0].mxu0
    %v2758 = vadd.f32 %v2680, %v2757
    %2759 = vmatprep.mubr.f32.mxu0 %v2580
    %2760 = vmatmul.mubr.f32.gmra.mrb[0].mxu0 %v2579
    %v2761 = vpop.f32.mrb[0].mxu0
    %v2762 = vadd.f32 %v2676, %v2761
    %v2763 = vpop.f32.mrb[0].mxu0
    %v2764 = vadd.f32 %v2680, %v2763
    %2765 = vmatprep.mubr.f32.mxu0 %v2582
    %2766 = vmatmul.mubr.f32.gmra.mrb[0].mxu0 %v2581
    %v2767 = vpop.f32.mrb[0].mxu0
    %v2768 = vadd.f32 %v2676, %v2767
    %v2769 = vpop.f32.mrb[0].mxu0
    %v2770 = vadd.f32 %v2680, %v2769
    %2771 = vmatprep.mubr.f32.mxu0 %v2584
    %2772 = vmatmul.mubr.f32.gmra.mrb[0].mxu0 %v2583
    %v2773 = vpop.f32.mrb[0].mxu0
    %v2774 = vadd.f32 %v2676, %v2773
    %v2775 = vpop.f32.mrb[0].mxu0
    %v2776 = vadd.f32 %v2680, %v2775
    %2777 = vmatprep.mubr.f32.mxu0 %v2586
    %2778 = vmatmul.mubr.f32.gmra.mrb[0].mxu0 %v2585
    %v2779 = vpop.f32.mrb[0].mxu0
    %v2780 = vadd.f32 %v2676, %v2779
    %v2781 = vpop.f32.mrb[0].mxu0
    %v2782 = vadd.f32 %v2680, %v2781
    %2783 = vmatprep.mubr.f32.mxu0 %v2588
    %2784 = vmatmul.mubr.f32.gmra.mrb[0].mxu0 %v2587
    %v2785 = vpop.f32.mrb[0].mxu0
    %v2786 = vadd.f32 %v2676, %v2785
    %v2787 = vpop.f32.mrb[0].mxu0
    %v2788 = vadd.f32 %v2680, %v2787
    %2789 = vmatprep.mubr.f32.mxu0 %v2590
    %2790 = vmatmul.mubr.f32.gmra.mrb[0].mxu0 %v2589
    %v2791 = vpop.f32.mrb[0].mxu0
    %v2792 = vadd.f32 %v2676, %v2791
    %v2793 = vpop.f32.mrb[0].mxu0
    %v2794 = vadd.f32 %v2680, %v2793
    %2795 = vmatprep.mubr.f32.mxu0 %v2592
    %2796 = vmatmul.mubr.f32.gmra.mrb[0].mxu0 %v2591
    %v2797 = vpop.f32.mrb[0].mxu0
    %v2798 = vadd.f32 %v2676, %v2797
    %v2799 = vpop.f32.mrb[0].mxu0
    %v2800 = vadd.f32 %v2680, %v2799
    %2801 = vmatprep.mubr.f32.mxu0 %v2594
    %2802 = vmatmul.mubr.f32.gmra.mrb[0].mxu0 %v2593
    %v2803 = vpop.f32.mrb[0].mxu0
    %v2804 = vadd.f32 %v2676, %v2803
    %v2805 = vpop.f32.mrb[0].mxu0
    %v2806 = vadd.f32 %v2680, %v2805
    %2807 = vmatprep.mubr.f32.mxu0 %v2596
    %2808 = vmatmul.mubr.f32.gmra.mrb[0].mxu0 %v2595
    %v2809 = vpop.f32.mrb[0].mxu0
    %v2810 = vadd.f32 %v2676, %v2809
    %v2811 = vpop.f32.mrb[0].mxu0
    %v2812 = vadd.f32 %v2680, %v2811
    %2813 = vmatprep.mubr.f32.mxu0 %v2598
    %2814 = vmatmul.mubr.f32.gmra.mrb[0].mxu0 %v2597
    %v2815 = vpop.f32.mrb[0].mxu0
    %v2816 = vadd.f32 %v2676, %v2815
    %v2817 = vpop.f32.mrb[0].mxu0
    %v2818 = vadd.f32 %v2680, %v2817
    %2819 = vmatprep.mubr.f32.mxu0 %v2600
    %2820 = vmatmul.mubr.f32.gmra.mrb[0].mxu0 %v2599
    %v2821 = vpop.f32.mrb[0].mxu0
    %v2822 = vadd.f32 %v2676, %v2821
    %v2823 = vpop.f32.mrb[0].mxu0
    %v2824 = vadd.f32 %v2680, %v2823
    %2825 = vmatprep.mubr.f32.mxu0 %v2602
    %2826 = vmatmul.mubr.f32.gmra.mrb[0].mxu0 %v2601
    %v2827 = vpop.f32.mrb[0].mxu0
    %v2828 = vadd.f32 %v2676, %v2827
    %v2829 = vpop.f32.mrb[0].mxu0
    %v2830 = vadd.f32 %v2680, %v2829
    %2831 = vmatprep.mubr.f32.mxu0 %v2604
    %2832 = vmatmul.mubr.f32.gmra.mrb[0].mxu0 %v2603
    %v2833 = vpop.f32.mrb[0].mxu0
    %v2834 = vadd.f32 %v2676, %v2833
    %v2835 = vpop.f32.mrb[0].mxu0
    %v2836 = vadd.f32 %v2680, %v2835
    %2837 = vmatprep.mubr.f32.mxu0 %v2606
    %2838 = vmatmul.mubr.f32.gmra.mrb[0].mxu0 %v2605
    %v2839 = vpop.f32.mrb[0].mxu0
    %v2840 = vadd.f32 %v2676, %v2839
    %v2841 = vpop.f32.mrb[0].mxu0
    %v2842 = vadd.f32 %v2680, %v2841
    %2843 = vdwg.mxu0
    %vm2844 = vcmp.gt.f32.partialorder %v2750, 0.0
    %vm2845 = vcmp.gt.f32.partialorder %v2752, 0.0
    %vm2846 = vcmp.gt.f32.partialorder %v2756, 0.0
    %vm2847 = vcmp.gt.f32.partialorder %v2758, 0.0
    %vm2848 = vcmp.gt.f32.partialorder %v2762, 0.0
    %vm2849 = vcmp.gt.f32.partialorder %v2764, 0.0
    %vm2850 = vcmp.gt.f32.partialorder %v2768, 0.0
    %vm2851 = vcmp.gt.f32.partialorder %v2770, 0.0
    %vm2852 = vcmp.gt.f32.partialorder %v2774, 0.0
    %vm2853 = vcmp.gt.f32.partialorder %v2776, 0.0
    %vm2854 = vcmp.gt.f32.partialorder %v2780, 0.0
    %vm2855 = vcmp.gt.f32.partialorder %v2782, 0.0
    %vm2856 = vcmp.gt.f32.partialorder %v2786, 0.0
    %vm2857 = vcmp.gt.f32.partialorder %v2788, 0.0
    %vm2858 = vcmp.gt.f32.partialorder %v2792, 0.0
    %vm2859 = vcmp.gt.f32.partialorder %v2794, 0.0
    %vm2860 = vcmp.gt.f32.partialorder %v2798, 0.0
    %vm2861 = vcmp.gt.f32.partialorder %v2800, 0.0
    %vm2862 = vcmp.gt.f32.partialorder %v2804, 0.0
    %vm2863 = vcmp.gt.f32.partialorder %v2806, 0.0
    %vm2864 = vcmp.gt.f32.partialorder %v2810, 0.0
    %vm2865 = vcmp.gt.f32.partialorder %v2812, 0.0
    %vm2866 = vcmp.gt.f32.partialorder %v2816, 0.0
    %vm2867 = vcmp.gt.f32.partialorder %v2818, 0.0
    %vm2868 = vcmp.gt.f32.partialorder %v2822, 0.0
    %vm2869 = vcmp.gt.f32.partialorder %v2824, 0.0
    %vm2870 = vcmp.gt.f32.partialorder %v2828, 0.0
    %vm2871 = vcmp.gt.f32.partialorder %v2830, 0.0
    %vm2872 = vcmp.gt.f32.partialorder %v2834, 0.0
    %vm2873 = vcmp.gt.f32.partialorder %v2836, 0.0
    %vm2874 = vcmp.gt.f32.partialorder %v2840, 0.0
    %vm2875 = vcmp.gt.f32.partialorder %v2842, 0.0
    %v2876 = vmul.f32 %v2750, 0.01
    %v2877 = vmul.f32 %v2752, 0.01
    %v2878 = vmul.f32 %v2756, 0.01
    %v2879 = vmul.f32 %v2758, 0.01
    %v2880 = vmul.f32 %v2762, 0.01
    %v2881 = vmul.f32 %v2764, 0.01
    %v2882 = vmul.f32 %v2768, 0.01
    %v2883 = vmul.f32 %v2770, 0.01
    %v2884 = vmul.f32 %v2774, 0.01
    %v2885 = vmul.f32 %v2776, 0.01
    %v2886 = vmul.f32 %v2780, 0.01
    %v2887 = vmul.f32 %v2782, 0.01
    %v2888 = vmul.f32 %v2786, 0.01
    %v2889 = vmul.f32 %v2788, 0.01
    %v2890 = vmul.f32 %v2792, 0.01
    %v2891 = vmul.f32 %v2794, 0.01
    %v2892 = vmul.f32 %v2798, 0.01
    %v2893 = vmul.f32 %v2800, 0.01
    %v2894 = vmul.f32 %v2804, 0.01
    %v2895 = vmul.f32 %v2806, 0.01
    %v2896 = vmul.f32 %v2810, 0.01
    %v2897 = vmul.f32 %v2812, 0.01
    %v2898 = vmul.f32 %v2816, 0.01
    %v2899 = vmul.f32 %v2818, 0.01
    %v2900 = vmul.f32 %v2822, 0.01
    %v2901 = vmul.f32 %v2824, 0.01
    %v2902 = vmul.f32 %v2828, 0.01
    %v2903 = vmul.f32 %v2830, 0.01
    %v2904 = vmul.f32 %v2834, 0.01
    %v2905 = vmul.f32 %v2836, 0.01
    %v2906 = vmul.f32 %v2840, 0.01
    %v2907 = vmul.f32 %v2842, 0.01
    %v2908 = vsel %vm2844, %v2750, %v2876
    %v2909 = vsel %vm2845, %v2752, %v2877
    %v2910 = vsel %vm2846, %v2756, %v2878
    %v2911 = vsel %vm2847, %v2758, %v2879
    %v2912 = vsel %vm2848, %v2762, %v2880
    %v2913 = vsel %vm2849, %v2764, %v2881
    %v2914 = vsel %vm2850, %v2768, %v2882
    %v2915 = vsel %vm2851, %v2770, %v2883
    %v2916 = vsel %vm2852, %v2774, %v2884
    %v2917 = vsel %vm2853, %v2776, %v2885
    %v2918 = vsel %vm2854, %v2780, %v2886
    %v2919 = vsel %vm2855, %v2782, %v2887
    %v2920 = vsel %vm2856, %v2786, %v2888
    %v2921 = vsel %vm2857, %v2788, %v2889
    %v2922 = vsel %vm2858, %v2792, %v2890
    %v2923 = vsel %vm2859, %v2794, %v2891
    %v2924 = vsel %vm2860, %v2798, %v2892
    %v2925 = vsel %vm2861, %v2800, %v2893
    %v2926 = vsel %vm2862, %v2804, %v2894
    %v2927 = vsel %vm2863, %v2806, %v2895
    %v2928 = vsel %vm2864, %v2810, %v2896
    %v2929 = vsel %vm2865, %v2812, %v2897
    %v2930 = vsel %vm2866, %v2816, %v2898
    %v2931 = vsel %vm2867, %v2818, %v2899
    %v2932 = vsel %vm2868, %v2822, %v2900
    %v2933 = vsel %vm2869, %v2824, %v2901
    %v2934 = vsel %vm2870, %v2828, %v2902
    %v2935 = vsel %vm2871, %v2830, %v2903
    %v2936 = vsel %vm2872, %v2834, %v2904
    %v2937 = vsel %vm2873, %v2836, %v2905
    %v2938 = vsel %vm2874, %v2840, %v2906
    %v2939 = vsel %vm2875, %v2842, %v2907
    %v2940 = vld [vmem:[%s7] sm:$0xff]
    %v2941 = vld [vmem:[%s7 + $0x8] sm:$0xff]
    %v2942 = vld [vmem:[%s7 + $0x10] sm:$0xff]
    %v2943 = vld [vmem:[%s7 + $0x18] sm:$0xff]
    %v2944 = vld [vmem:[%s7 + $0x20] sm:$0xff]
    %v2945 = vld [vmem:[%s7 + $0x28] sm:$0xff]
    %v2946 = vld [vmem:[%s7 + $0x30] sm:$0xff]
    %v2947 = vld [vmem:[%s7 + $0x38] sm:$0xff]
    %v2948 = vld [vmem:[%s7 + $0x40] sm:$0xff]
    %v2949 = vld [vmem:[%s7 + $0x48] sm:$0xff]
    %v2950 = vld [vmem:[%s7 + $0x50] sm:$0xff]
    %v2951 = vld [vmem:[%s7 + $0x58] sm:$0xff]
    %v2952 = vld [vmem:[%s7 + $0x60] sm:$0xff]
    %v2953 = vld [vmem:[%s7 + $0x68] sm:$0xff]
    %v2954 = vld [vmem:[%s7 + $0x70] sm:$0xff]
    %v2955 = vld [vmem:[%s7 + $0x78] sm:$0xff]
    %v2956 = vld [vmem:[%s7 + $0x80] sm:$0xff]
    %v2957 = vld [vmem:[%s7 + $0x88] sm:$0xff]
    %v2958 = vld [vmem:[%s7 + $0x90] sm:$0xff]
    %v2959 = vld [vmem:[%s7 + $0x98] sm:$0xff]
    %v2960 = vld [vmem:[%s7 + $0xa0] sm:$0xff]
    %v2961 = vld [vmem:[%s7 + $0xa8] sm:$0xff]
    %v2962 = vld [vmem:[%s7 + $0xb0] sm:$0xff]
    %v2963 = vld [vmem:[%s7 + $0xb8] sm:$0xff]
    %v2964 = vld [vmem:[%s7 + $0xc0] sm:$0xff]
    %v2965 = vld [vmem:[%s7 + $0xc8] sm:$0xff]
    %v2966 = vld [vmem:[%s7 + $0xd0] sm:$0xff]
    %v2967 = vld [vmem:[%s7 + $0xd8] sm:$0xff]
    %v2968 = vld [vmem:[%s7 + $0xe0] sm:$0xff]
    %v2969 = vld [vmem:[%s7 + $0xe8] sm:$0xff]
    %v2970 = vld [vmem:[%s7 + $0xf0] sm:$0xff]
    %v2971 = vld [vmem:[%s7 + $0xf8] sm:$0xff]
    %v2972 = vld [vmem:[#allocation2] sm:$0x1]
    %v2974 = vlaneseq
    %v2975 = vshrl.u32 %v2974, 7
    %v2976 = vsub.s32 0, %v2975
    %v2977 = vrot.slane %v2972, %v2976
    %2979 = vmatprep.subr.mxu0 0.0
    %2980 = vmatpush1.msra.mxu0 %v2940
    %2981 = vmatprep.subr.mxu0 0.0
    %2982 = vmatpush1.msra.mxu0 %v2941
    %2983 = vmatprep.subr.mxu0 0.0
    %2984 = vmatpush1.msra.mxu0 %v2942
    %2985 = vmatprep.subr.mxu0 0.0
    %2986 = vmatpush1.msra.mxu0 %v2943
    %2987 = vmatprep.subr.mxu0 0.0
    %2988 = vmatpush1.msra.mxu0 %v2944
    %2989 = vmatprep.subr.mxu0 0.0
    %2990 = vmatpush1.msra.mxu0 %v2945
    %2991 = vmatprep.subr.mxu0 0.0
    %2992 = vmatpush1.msra.mxu0 %v2946
    %2993 = vmatprep.subr.mxu0 0.0
    %2994 = vmatpush1.msra.mxu0 %v2947
    %2995 = vmatprep.subr.mxu0 0.0
    %2996 = vmatpush1.msra.mxu0 %v2948
    %2997 = vmatprep.subr.mxu0 0.0
    %2998 = vmatpush1.msra.mxu0 %v2949
    %2999 = vmatprep.subr.mxu0 0.0
    %3000 = vmatpush1.msra.mxu0 %v2950
    %3001 = vmatprep.subr.mxu0 0.0
    %3002 = vmatpush1.msra.mxu0 %v2951
    %3003 = vmatprep.subr.mxu0 0.0
    %3004 = vmatpush1.msra.mxu0 %v2952
    %3005 = vmatprep.subr.mxu0 0.0
    %3006 = vmatpush1.msra.mxu0 %v2953
    %3007 = vmatprep.subr.mxu0 0.0
    %3008 = vmatpush1.msra.mxu0 %v2954
    %3009 = vmatprep.subr.mxu0 0.0
    %3010 = vmatpush1.msra.mxu0 %v2955
    %3011 = vmatprep.subr.mxu0 0.0
    %3012 = vmatpush1.msra.mxu0 %v2956
    %3013 = vmatprep.subr.mxu0 0.0
    %3014 = vmatpush1.msra.mxu0 %v2957
    %3015 = vmatprep.subr.mxu0 0.0
    %3016 = vmatpush1.msra.mxu0 %v2958
    %3017 = vmatprep.subr.mxu0 0.0
    %3018 = vmatpush1.msra.mxu0 %v2959
    %3019 = vmatprep.subr.mxu0 0.0
    %3020 = vmatpush1.msra.mxu0 %v2960
    %3021 = vmatprep.subr.mxu0 0.0
    %3022 = vmatpush1.msra.mxu0 %v2961
    %3023 = vmatprep.subr.mxu0 0.0
    %3024 = vmatpush1.msra.mxu0 %v2962
    %3025 = vmatprep.subr.mxu0 0.0
    %3026 = vmatpush1.msra.mxu0 %v2963
    %3027 = vmatprep.subr.mxu0 0.0
    %3028 = vmatpush1.msra.mxu0 %v2964
    %3029 = vmatprep.subr.mxu0 0.0
    %3030 = vmatpush1.msra.mxu0 %v2965
    %3031 = vmatprep.subr.mxu0 0.0
    %3032 = vmatpush1.msra.mxu0 %v2966
    %3033 = vmatprep.subr.mxu0 0.0
    %3034 = vmatpush1.msra.mxu0 %v2967
    %3035 = vmatprep.subr.mxu0 0.0
    %3036 = vmatpush1.msra.mxu0 %v2968
    %3037 = vmatprep.subr.mxu0 0.0
    %3038 = vmatpush1.msra.mxu0 %v2969
    %3039 = vmatprep.subr.mxu0 0.0
    %3040 = vmatpush1.msra.mxu0 %v2970
    %3041 = vmatprep.subr.mxu0 0.0
    %3042 = vmatpush1.msra.mxu0 %v2971
    %3043 = vmatprep.mubr.f32.mxu0 %v2909
    %3044 = vmatmul.mubr.f32.gmra.mrb[0].mxu0 %v2908
    %v3045 = vpop.f32.mrb[0].mxu0
    %v3046 = vadd.f32 %v2977, %v3045
    %v3047 = vpop.f32.mrb[0].mxu0
    %3048 = vmatprep.mubr.f32.mxu0 %v2911
    %3049 = vmatmul.mubr.f32.gmra.mrb[0].mxu0 %v2910
    %v3050 = vpop.f32.mrb[0].mxu0
    %v3051 = vadd.f32 %v2977, %v3050
    %v3052 = vpop.f32.mrb[0].mxu0
    %3053 = vmatprep.mubr.f32.mxu0 %v2913
    %3054 = vmatmul.mubr.f32.gmra.mrb[0].mxu0 %v2912
    %v3055 = vpop.f32.mrb[0].mxu0
    %v3056 = vadd.f32 %v2977, %v3055
    %v3057 = vpop.f32.mrb[0].mxu0
    %3058 = vmatprep.mubr.f32.mxu0 %v2915
    %3059 = vmatmul.mubr.f32.gmra.mrb[0].mxu0 %v2914
    %v3060 = vpop.f32.mrb[0].mxu0
    %v3061 = vadd.f32 %v2977, %v3060
    %v3062 = vpop.f32.mrb[0].mxu0
    %3063 = vmatprep.mubr.f32.mxu0 %v2917
    %3064 = vmatmul.mubr.f32.gmra.mrb[0].mxu0 %v2916
    %v3065 = vpop.f32.mrb[0].mxu0
    %v3066 = vadd.f32 %v2977, %v3065
    %v3067 = vpop.f32.mrb[0].mxu0
    %3068 = vmatprep.mubr.f32.mxu0 %v2919
    %3069 = vmatmul.mubr.f32.gmra.mrb[0].mxu0 %v2918
    %v3070 = vpop.f32.mrb[0].mxu0
    %v3071 = vadd.f32 %v2977, %v3070
    %v3072 = vpop.f32.mrb[0].mxu0
    %3073 = vmatprep.mubr.f32.mxu0 %v2921
    %3074 = vmatmul.mubr.f32.gmra.mrb[0].mxu0 %v2920
    %v3075 = vpop.f32.mrb[0].mxu0
    %v3076 = vadd.f32 %v2977, %v3075
    %v3077 = vpop.f32.mrb[0].mxu0
    %3078 = vmatprep.mubr.f32.mxu0 %v2923
    %3079 = vmatmul.mubr.f32.gmra.mrb[0].mxu0 %v2922
    %v3080 = vpop.f32.mrb[0].mxu0
    %v3081 = vadd.f32 %v2977, %v3080
    %v3082 = vpop.f32.mrb[0].mxu0
    %3083 = vmatprep.mubr.f32.mxu0 %v2925
    %3084 = vmatmul.mubr.f32.gmra.mrb[0].mxu0 %v2924
    %v3085 = vpop.f32.mrb[0].mxu0
    %v3086 = vadd.f32 %v2977, %v3085
    %v3087 = vpop.f32.mrb[0].mxu0
    %3088 = vmatprep.mubr.f32.mxu0 %v2927
    %3089 = vmatmul.mubr.f32.gmra.mrb[0].mxu0 %v2926
    %v3090 = vpop.f32.mrb[0].mxu0
    %v3091 = vadd.f32 %v2977, %v3090
    %v3092 = vpop.f32.mrb[0].mxu0
    %3093 = vmatprep.mubr.f32.mxu0 %v2929
    %3094 = vmatmul.mubr.f32.gmra.mrb[0].mxu0 %v2928
    %v3095 = vpop.f32.mrb[0].mxu0
    %v3096 = vadd.f32 %v2977, %v3095
    %v3097 = vpop.f32.mrb[0].mxu0
    %3098 = vmatprep.mubr.f32.mxu0 %v2931
    %3099 = vmatmul.mubr.f32.gmra.mrb[0].mxu0 %v2930
    %v3100 = vpop.f32.mrb[0].mxu0
    %v3101 = vadd.f32 %v2977, %v3100
    %v3102 = vpop.f32.mrb[0].mxu0
    %3103 = vmatprep.mubr.f32.mxu0 %v2933
    %3104 = vmatmul.mubr.f32.gmra.mrb[0].mxu0 %v2932
    %v3105 = vpop.f32.mrb[0].mxu0
    %v3106 = vadd.f32 %v2977, %v3105
    %v3107 = vpop.f32.mrb[0].mxu0
    %3108 = vmatprep.mubr.f32.mxu0 %v2935
    %3109 = vmatmul.mubr.f32.gmra.mrb[0].mxu0 %v2934
    %v3110 = vpop.f32.mrb[0].mxu0
    %v3111 = vadd.f32 %v2977, %v3110
    %v3112 = vpop.f32.mrb[0].mxu0
    %3113 = vmatprep.mubr.f32.mxu0 %v2937
    %3114 = vmatmul.mubr.f32.gmra.mrb[0].mxu0 %v2936
    %v3115 = vpop.f32.mrb[0].mxu0
    %v3116 = vadd.f32 %v2977, %v3115
    %v3117 = vpop.f32.mrb[0].mxu0
    %3118 = vmatprep.mubr.f32.mxu0 %v2939
    %3119 = vmatmul.mubr.f32.gmra.mrb[0].mxu0 %v2938
    %v3120 = vpop.f32.mrb[0].mxu0
    %v3121 = vadd.f32 %v2977, %v3120
    %v3122 = vpop.f32.mrb[0].mxu0
    %3123 = vdwg.mxu0
    %vm3124 = vcmask 7168
    %3125 = vst.msk [vmem:[%s9] sm:$0xff] %vm3124, %v3046
    %3126 = vst.msk [vmem:[%s9 + $0x8] sm:$0xff] %vm3124, %v3051
    %3127 = vst.msk [vmem:[%s9 + $0x10] sm:$0xff] %vm3124, %v3056
    %3128 = vst.msk [vmem:[%s9 + $0x18] sm:$0xff] %vm3124, %v3061
    %3129 = vst.msk [vmem:[%s9 + $0x20] sm:$0xff] %vm3124, %v3066
    %3130 = vst.msk [vmem:[%s9 + $0x28] sm:$0xff] %vm3124, %v3071
    %3131 = vst.msk [vmem:[%s9 + $0x30] sm:$0xff] %vm3124, %v3076
    %3132 = vst.msk [vmem:[%s9 + $0x38] sm:$0xff] %vm3124, %v3081
    %3133 = vst.msk [vmem:[%s9 + $0x40] sm:$0xff] %vm3124, %v3086
    %3134 = vst.msk [vmem:[%s9 + $0x48] sm:$0xff] %vm3124, %v3091
    %3135 = vst.msk [vmem:[%s9 + $0x50] sm:$0xff] %vm3124, %v3096
    %3136 = vst.msk [vmem:[%s9 + $0x58] sm:$0xff] %vm3124, %v3101
    %3137 = vst.msk [vmem:[%s9 + $0x60] sm:$0xff] %vm3124, %v3106
    %3138 = vst.msk [vmem:[%s9 + $0x68] sm:$0xff] %vm3124, %v3111
    %3139 = vst.msk [vmem:[%s9 + $0x70] sm:$0xff] %vm3124, %v3116
    %3140 = vst.msk [vmem:[%s9 + $0x78] sm:$0xff] %vm3124, %v3121
    // Predicated region
    $region62: #{feed_forward_net.1} parent=1 // pred_check
      _
    $region63: #{feed_forward_net.1} parent=1 // pred_check_branch
      %3142 = sbr.rel (0) target = $region65
    $region64: #{feed_forward_net.1} parent=1 // pred_region
      _
    $region65: #{feed_forward_net.1} parent=1 // pred_fallthru
      _
    // Predicated region
    $region66: #{feed_forward_net.1} parent=1 // pred_check
      _
    $region67: #{feed_forward_net.1} parent=1 // pred_check_branch
      %3144 = sbr.rel (0) target = $region69
    $region68: #{feed_forward_net.1} parent=1 // pred_region
      _
    $region69: #{feed_forward_net.1} parent=1 // pred_fallthru
      _
    %3145 = vsyncpa [#allocation4], 1
    %3146 = vsyncpa [#allocation6], 1
    %3147 = vsyncpa [#allocation9], 1
    %3148 = vsyncpa [#allocation12], 1

</llo_original>
